<compile_context>
chip_gen: v7x
topology: tpu7x:2x2x1
jax: 0.10.0
libtpu: 0.0.40
codegen_flags: <defaults>
</compile_context>

<pallas_src>
import jax
import jax.numpy as jnp
from jax.experimental import pallas as pl
from jax.experimental.pallas import tpu as pltpu

# ---------------- model configuration (small, consistent with the module) ----
BATCH = 2
SEQ = 8
INPUT_SIZE = 4
HIDDEN = 32
NUM_LAYERS = 3
OUTPUT = 3
B_PAD = 8          # pad batch to one f32 sublane tile (8 rows)


# ------------------------------- Pallas kernel -------------------------------
def make_lstm_kernel(T, B, H, L):
    def lstm_kernel(x_ref,                       # (T*B, I)  time-major, batch-padded
                    wih0, whh0, b0,              # layer 0: (I, 4H), (H, 4H), (1, 4H) f32
                    wih1, whh1, b1,              # layer 1: (H, 4H), (H, 4H), (1, 4H)
                    wih2, whh2, b2,              # layer 2
                    fcw, fcb,                    # (H, OUT), (1, OUT)
                    out_ref):                    # (B, OUT) f32
        wihs = (wih0, wih1, wih2)
        whhs = (whh0, whh1, whh2)
        bs = (b0, b1, b2)

        # ---- Hoisted layer-0 input projection: one matmul for all T steps. ----
        pre0 = jnp.dot(x_ref[...], wihs[0][...],
                       preferred_element_type=jnp.float32) + bs[0][...]   # (T*B, 4H)

        whh = [whhs[l][...] for l in range(L)]
        wih = [None] + [wihs[l][...] for l in range(1, L)]
        bias = [None] + [bs[l][...] for l in range(1, L)]

        def cell(gates, c_prev):
            # Gate packing (from wrapper): [i | f | o | g]
            sig = jax.nn.sigmoid(gates[:, :3 * H])   # i, f, o in one EUP pass
            g = jnp.tanh(gates[:, 3 * H:])           # g in one EUP pass
            c_new = sig[:, H:2 * H] * c_prev + sig[:, :H] * g
            h_new = sig[:, 2 * H:] * jnp.tanh(c_new)
            return h_new, c_new

        h = [jnp.zeros((B, H), jnp.float32) for _ in range(L)]
        c = [jnp.zeros((B, H), jnp.float32) for _ in range(L)]
        # feed[l] (l>=1): output of layer l-1 at the timestep layer l runs next.
        feed = [None] * L
        last_h = None

        # ---- Wavefront over diagonals d = t + layer (fully unrolled). ----
        for d in range(T + L - 1):
            new_feed = list(feed)
            for l in range(L):
                t = d - l
                if t < 0 or t >= T:
                    continue
                if l == 0:
                    # (8,128)-aligned row-block slice of the precomputed term.
                    gates = pre0[t * B:(t + 1) * B, :] + jnp.dot(
                        h[0], whh[0], preferred_element_type=jnp.float32)
                else:
                    gates = (jnp.dot(feed[l], wih[l],
                                     preferred_element_type=jnp.float32)
                             + jnp.dot(h[l], whh[l],
                                       preferred_element_type=jnp.float32)
                             + bias[l])
                h[l], c[l] = cell(gates, c[l])
                if l + 1 < L:
                    new_feed[l + 1] = h[l]           # consumed at diagonal d+1
                elif t == T - 1:
                    last_h = h[l]                    # final-timestep top-layer hidden
            feed = new_feed

        # Dropout is identity in eval mode; final Linear head.
        out_ref[...] = (jnp.dot(last_h, fcw[...],
                                preferred_element_type=jnp.float32) + fcb[...])

    return lstm_kernel


# --------------------------------- wrapper -----------------------------------
def _repack_gates(w):
    """PyTorch gate order [i, f, g, o] (along dim 0) -> [i, f, o, g]."""
    i, f, g, o = jnp.split(w, 4, axis=0)
    return jnp.concatenate([i, f, o, g], axis=0)


def pack_params(params):
    """One-time weight packing (gate reorder + transpose); keep f32."""
    packed = []
    for l in range(NUM_LAYERS):
        wih, whh, bih, bhh = params[f"l{l}"]
        packed += [_repack_gates(wih).T,                 # (in_dim, 4H) f32
                   _repack_gates(whh).T,                 # (H, 4H)      f32
                   _repack_gates(bih + bhh)[None, :]]    # (1, 4H)      f32
    packed += [params["fc_w"].T, params["fc_b"][None, :]]
    return tuple(packed)


def stock_lstm_forward(x, packed):
    B, T, I = x.shape
    # batch_first (B, T, I) -> time-major, pad batch to a full sublane tile,
    # flatten to (T*B_PAD, I).
    xt = jnp.transpose(x, (1, 0, 2))                       # (T, B, I)
    xt = jnp.pad(xt, ((0, 0), (0, B_PAD - B), (0, 0)))     # (T, B_PAD, I)
    x_flat = xt.reshape(T * B_PAD, I)

    kernel = make_lstm_kernel(T, B_PAD, HIDDEN, NUM_LAYERS)
    out = pl.pallas_call(
        kernel,
        out_shape=jax.ShapeDtypeStruct((B_PAD, OUTPUT), jnp.float32),
        in_specs=[pl.BlockSpec(memory_space=pltpu.MemorySpace.VMEM)]
                 * (1 + len(packed)),
        out_specs=pl.BlockSpec(memory_space=pltpu.MemorySpace.VMEM),
    )(x_flat, *packed)
    return out[:B]


stock_lstm_forward_jit = jax.jit(stock_lstm_forward)


# ----------------------- deterministic parameter init ------------------------
def init_params(key):
    params = {}
    bound = 1.0 / jnp.sqrt(HIDDEN)
    for l in range(NUM_LAYERS):
        in_dim = INPUT_SIZE if l == 0 else HIDDEN
        key, k1, k2, k3, k4 = jax.random.split(key, 5)
        wih = jax.random.uniform(k1, (4 * HIDDEN, in_dim), jnp.float32, -bound, bound)
        whh = jax.random.uniform(k2, (4 * HIDDEN, HIDDEN), jnp.float32, -bound, bound)
        bih = jax.random.uniform(k3, (4 * HIDDEN,), jnp.float32, -bound, bound)
        bhh = jax.random.uniform(k4, (4 * HIDDEN,), jnp.float32, -bound, bound)
        params[f"l{l}"] = (wih, whh, bih, bhh)
    key, k5, k6 = jax.random.split(key, 3)
    fc_bound = 1.0 / jnp.sqrt(HIDDEN)
    params["fc_w"] = jax.random.uniform(k5, (OUTPUT, HIDDEN), jnp.float32,
                                        -fc_bound, fc_bound)
    params["fc_b"] = jax.random.uniform(k6, (OUTPUT,), jnp.float32,
                                        -fc_bound, fc_bound)
    return params


# ------------------------------ pure-JAX reference ---------------------------
def lstm_ref(x, params):
    """PyTorch-semantics (fp32, eval-mode) reference."""
    B = x.shape[0]
    h_in = x
    for l in range(NUM_LAYERS):
        wih, whh, bih, bhh = params[f"l{l}"]
        w_ih, w_hh = wih.T, whh.T
        h = jnp.zeros((B, HIDDEN), jnp.float32)
        c = jnp.zeros((B, HIDDEN), jnp.float32)
        outs = []
        for t in range(h_in.shape[1]):
            xt = h_in[:, t, :]
            gates = (jnp.dot(xt, w_ih, preferred_element_type=jnp.float32)
                     + jnp.dot(h, w_hh, preferred_element_type=jnp.float32)
                     + bih + bhh)
            ig, fg, gg, og = jnp.split(gates, 4, axis=-1)
            ig, fg, og = jax.nn.sigmoid(ig), jax.nn.sigmoid(fg), jax.nn.sigmoid(og)
            gg = jnp.tanh(gg)
            c = fg * c + ig * gg
            h = og * jnp.tanh(c)
            outs.append(h)
        h_in = jnp.stack(outs, axis=1)
    last = h_in[:, -1, :]
    return last @ params["fc_w"].T + params["fc_b"]


if __name__ == "__main__":
    key = jax.random.PRNGKey(0)
    key, xkey = jax.random.split(key)
    x = jax.random.normal(xkey, (BATCH, SEQ, INPUT_SIZE), jnp.float32)
    params = init_params(key)
    packed = pack_params(params)          # one-time weight packing (not per call)

    out = stock_lstm_forward_jit(x, packed)
    out = jax.block_until_ready(out)
    assert out.shape == (BATCH, OUTPUT)

    # Kernel is all-f32 now -> tight check against the fp32 PyTorch-semantics ref.
    ref = lstm_ref(x, params)
    assert jnp.allclose(out, ref, rtol=1e-3, atol=1e-3), (out, ref)

    print("KERNEL_OK")
</pallas_src>

<mosaic_0001>
module attributes {stable_mosaic.version = 11 : i64} {
  func.func @lstm_kernel(%arg0: memref<64x4xf32, #tpu.memory_space<vmem>>, %arg1: memref<4x128xf32, #tpu.memory_space<vmem>>, %arg2: memref<32x128xf32, #tpu.memory_space<vmem>>, %arg3: memref<1x128xf32, #tpu.memory_space<vmem>>, %arg4: memref<32x128xf32, #tpu.memory_space<vmem>>, %arg5: memref<32x128xf32, #tpu.memory_space<vmem>>, %arg6: memref<1x128xf32, #tpu.memory_space<vmem>>, %arg7: memref<32x128xf32, #tpu.memory_space<vmem>>, %arg8: memref<32x128xf32, #tpu.memory_space<vmem>>, %arg9: memref<1x128xf32, #tpu.memory_space<vmem>>, %arg10: memref<32x3xf32, #tpu.memory_space<vmem>>, %arg11: memref<1x3xf32, #tpu.memory_space<vmem>>, %arg12: memref<8x3xf32, #tpu.memory_space<vmem>>) attributes {dimension_semantics = [], scalar_prefetch = 0 : i64, scratch_operands = 0 : i64, tpu.core_type = #tpu.core_type<tc>} {
    %c0 = arith.constant 0 : index
    %c0_0 = arith.constant 0 : index
    %0 = vector.load %arg0[%c0, %c0_0] : memref<64x4xf32, #tpu.memory_space<vmem>>, vector<64x4xf32>
    %c0_1 = arith.constant 0 : index
    %c0_2 = arith.constant 0 : index
    %1 = vector.load %arg1[%c0_1, %c0_2] : memref<4x128xf32, #tpu.memory_space<vmem>>, vector<4x128xf32>
    %cst = arith.constant dense<0.000000e+00> : vector<64x128xf32>
    %2 = tpu.matmul %0, %1, %cst {dimension_numbers = #tpu.dot_dimension_numbers<[1], [0], [0], [1], [0, 0, 1, 1], [], []>} : vector<64x4xf32>, vector<4x128xf32>, vector<64x128xf32> -> vector<64x128xf32>
    %c0_3 = arith.constant 0 : index
    %c0_4 = arith.constant 0 : index
    %3 = vector.load %arg3[%c0_3, %c0_4] : memref<1x128xf32, #tpu.memory_space<vmem>>, vector<1x128xf32>
    %4 = vector.broadcast %3 : vector<1x128xf32> to vector<64x128xf32>
    %5 = arith.addf %2, %4 : vector<64x128xf32>
    %c0_5 = arith.constant 0 : index
    %c0_6 = arith.constant 0 : index
    %6 = vector.load %arg2[%c0_5, %c0_6] : memref<32x128xf32, #tpu.memory_space<vmem>>, vector<32x128xf32>
    %c0_7 = arith.constant 0 : index
    %c0_8 = arith.constant 0 : index
    %7 = vector.load %arg5[%c0_7, %c0_8] : memref<32x128xf32, #tpu.memory_space<vmem>>, vector<32x128xf32>
    %c0_9 = arith.constant 0 : index
    %c0_10 = arith.constant 0 : index
    %8 = vector.load %arg8[%c0_9, %c0_10] : memref<32x128xf32, #tpu.memory_space<vmem>>, vector<32x128xf32>
    %c0_11 = arith.constant 0 : index
    %c0_12 = arith.constant 0 : index
    %9 = vector.load %arg4[%c0_11, %c0_12] : memref<32x128xf32, #tpu.memory_space<vmem>>, vector<32x128xf32>
    %c0_13 = arith.constant 0 : index
    %c0_14 = arith.constant 0 : index
    %10 = vector.load %arg7[%c0_13, %c0_14] : memref<32x128xf32, #tpu.memory_space<vmem>>, vector<32x128xf32>
    %c0_15 = arith.constant 0 : index
    %c0_16 = arith.constant 0 : index
    %11 = vector.load %arg6[%c0_15, %c0_16] : memref<1x128xf32, #tpu.memory_space<vmem>>, vector<1x128xf32>
    %c0_17 = arith.constant 0 : index
    %c0_18 = arith.constant 0 : index
    %12 = vector.load %arg9[%c0_17, %c0_18] : memref<1x128xf32, #tpu.memory_space<vmem>>, vector<1x128xf32>
    %cst_19 = arith.constant 0.000000e+00 : f32
    %13 = vector.broadcast %cst_19 : f32 to vector<8x32xf32>
    %cst_20 = arith.constant 0.000000e+00 : f32
    %14 = vector.broadcast %cst_20 : f32 to vector<8x32xf32>
    %cst_21 = arith.constant 0.000000e+00 : f32
    %15 = vector.broadcast %cst_21 : f32 to vector<8x32xf32>
    %cst_22 = arith.constant 0.000000e+00 : f32
    %16 = vector.broadcast %cst_22 : f32 to vector<8x32xf32>
    %cst_23 = arith.constant 0.000000e+00 : f32
    %17 = vector.broadcast %cst_23 : f32 to vector<8x32xf32>
    %cst_24 = arith.constant 0.000000e+00 : f32
    %18 = vector.broadcast %cst_24 : f32 to vector<8x32xf32>
    %19 = vector.extract_strided_slice %5 {offsets = [0, 0], sizes = [8, 128], strides = [1, 1]} : vector<64x128xf32> to vector<8x128xf32>
    %cst_25 = arith.constant dense<0.000000e+00> : vector<8x128xf32>
    %20 = tpu.matmul %13, %6, %cst_25 {dimension_numbers = #tpu.dot_dimension_numbers<[1], [0], [0], [1], [0, 0, 1, 1], [], []>} : vector<8x32xf32>, vector<32x128xf32>, vector<8x128xf32> -> vector<8x128xf32>
    %21 = arith.addf %19, %20 : vector<8x128xf32>
    %22 = vector.extract_strided_slice %21 {offsets = [0, 0], sizes = [8, 96], strides = [1, 1]} : vector<8x128xf32> to vector<8x96xf32>
    %23 = arith.negf %22 : vector<8x96xf32>
    %24 = math.exp %23 : vector<8x96xf32>
    %cst_26 = arith.constant 1.000000e+00 : f32
    %25 = vector.broadcast %cst_26 : f32 to vector<8x96xf32>
    %26 = arith.addf %25, %24 : vector<8x96xf32>
    %27 = arith.divf %25, %26 : vector<8x96xf32>
    %28 = vector.extract_strided_slice %21 {offsets = [0, 96], sizes = [8, 32], strides = [1, 1]} : vector<8x128xf32> to vector<8x32xf32>
    %29 = math.tanh %28 : vector<8x32xf32>
    %30 = vector.extract_strided_slice %27 {offsets = [0, 32], sizes = [8, 32], strides = [1, 1]} : vector<8x96xf32> to vector<8x32xf32>
    %31 = arith.mulf %30, %16 : vector<8x32xf32>
    %32 = vector.extract_strided_slice %27 {offsets = [0, 0], sizes = [8, 32], strides = [1, 1]} : vector<8x96xf32> to vector<8x32xf32>
    %33 = arith.mulf %32, %29 : vector<8x32xf32>
    %34 = arith.addf %31, %33 : vector<8x32xf32>
    %35 = vector.extract_strided_slice %27 {offsets = [0, 64], sizes = [8, 32], strides = [1, 1]} : vector<8x96xf32> to vector<8x32xf32>
    %36 = math.tanh %34 : vector<8x32xf32>
    %37 = arith.mulf %35, %36 : vector<8x32xf32>
    %38 = vector.extract_strided_slice %5 {offsets = [8, 0], sizes = [8, 128], strides = [1, 1]} : vector<64x128xf32> to vector<8x128xf32>
    %cst_27 = arith.constant dense<0.000000e+00> : vector<8x128xf32>
    %39 = tpu.matmul %37, %6, %cst_27 {dimension_numbers = #tpu.dot_dimension_numbers<[1], [0], [0], [1], [0, 0, 1, 1], [], []>} : vector<8x32xf32>, vector<32x128xf32>, vector<8x128xf32> -> vector<8x128xf32>
    %40 = arith.addf %38, %39 : vector<8x128xf32>
    %41 = vector.extract_strided_slice %40 {offsets = [0, 0], sizes = [8, 96], strides = [1, 1]} : vector<8x128xf32> to vector<8x96xf32>
    %42 = arith.negf %41 : vector<8x96xf32>
    %43 = math.exp %42 : vector<8x96xf32>
    %cst_28 = arith.constant 1.000000e+00 : f32
    %44 = vector.broadcast %cst_28 : f32 to vector<8x96xf32>
    %45 = arith.addf %44, %43 : vector<8x96xf32>
    %46 = arith.divf %44, %45 : vector<8x96xf32>
    %47 = vector.extract_strided_slice %40 {offsets = [0, 96], sizes = [8, 32], strides = [1, 1]} : vector<8x128xf32> to vector<8x32xf32>
    %48 = math.tanh %47 : vector<8x32xf32>
    %49 = vector.extract_strided_slice %46 {offsets = [0, 32], sizes = [8, 32], strides = [1, 1]} : vector<8x96xf32> to vector<8x32xf32>
    %50 = arith.mulf %49, %34 : vector<8x32xf32>
    %51 = vector.extract_strided_slice %46 {offsets = [0, 0], sizes = [8, 32], strides = [1, 1]} : vector<8x96xf32> to vector<8x32xf32>
    %52 = arith.mulf %51, %48 : vector<8x32xf32>
    %53 = arith.addf %50, %52 : vector<8x32xf32>
    %54 = vector.extract_strided_slice %46 {offsets = [0, 64], sizes = [8, 32], strides = [1, 1]} : vector<8x96xf32> to vector<8x32xf32>
    %55 = math.tanh %53 : vector<8x32xf32>
    %56 = arith.mulf %54, %55 : vector<8x32xf32>
    %cst_29 = arith.constant dense<0.000000e+00> : vector<8x128xf32>
    %57 = tpu.matmul %37, %9, %cst_29 {dimension_numbers = #tpu.dot_dimension_numbers<[1], [0], [0], [1], [0, 0, 1, 1], [], []>} : vector<8x32xf32>, vector<32x128xf32>, vector<8x128xf32> -> vector<8x128xf32>
    %cst_30 = arith.constant dense<0.000000e+00> : vector<8x128xf32>
    %58 = tpu.matmul %14, %7, %cst_30 {dimension_numbers = #tpu.dot_dimension_numbers<[1], [0], [0], [1], [0, 0, 1, 1], [], []>} : vector<8x32xf32>, vector<32x128xf32>, vector<8x128xf32> -> vector<8x128xf32>
    %59 = arith.addf %57, %58 : vector<8x128xf32>
    %60 = vector.broadcast %11 : vector<1x128xf32> to vector<8x128xf32>
    %61 = arith.addf %59, %60 : vector<8x128xf32>
    %62 = vector.extract_strided_slice %61 {offsets = [0, 0], sizes = [8, 96], strides = [1, 1]} : vector<8x128xf32> to vector<8x96xf32>
    %63 = arith.negf %62 : vector<8x96xf32>
    %64 = math.exp %63 : vector<8x96xf32>
    %cst_31 = arith.constant 1.000000e+00 : f32
    %65 = vector.broadcast %cst_31 : f32 to vector<8x96xf32>
    %66 = arith.addf %65, %64 : vector<8x96xf32>
    %67 = arith.divf %65, %66 : vector<8x96xf32>
    %68 = vector.extract_strided_slice %61 {offsets = [0, 96], sizes = [8, 32], strides = [1, 1]} : vector<8x128xf32> to vector<8x32xf32>
    %69 = math.tanh %68 : vector<8x32xf32>
    %70 = vector.extract_strided_slice %67 {offsets = [0, 32], sizes = [8, 32], strides = [1, 1]} : vector<8x96xf32> to vector<8x32xf32>
    %71 = arith.mulf %70, %17 : vector<8x32xf32>
    %72 = vector.extract_strided_slice %67 {offsets = [0, 0], sizes = [8, 32], strides = [1, 1]} : vector<8x96xf32> to vector<8x32xf32>
    %73 = arith.mulf %72, %69 : vector<8x32xf32>
    %74 = arith.addf %71, %73 : vector<8x32xf32>
    %75 = vector.extract_strided_slice %67 {offsets = [0, 64], sizes = [8, 32], strides = [1, 1]} : vector<8x96xf32> to vector<8x32xf32>
    %76 = math.tanh %74 : vector<8x32xf32>
    %77 = arith.mulf %75, %76 : vector<8x32xf32>
    %78 = vector.extract_strided_slice %5 {offsets = [16, 0], sizes = [8, 128], strides = [1, 1]} : vector<64x128xf32> to vector<8x128xf32>
    %cst_32 = arith.constant dense<0.000000e+00> : vector<8x128xf32>
    %79 = tpu.matmul %56, %6, %cst_32 {dimension_numbers = #tpu.dot_dimension_numbers<[1], [0], [0], [1], [0, 0, 1, 1], [], []>} : vector<8x32xf32>, vector<32x128xf32>, vector<8x128xf32> -> vector<8x128xf32>
    %80 = arith.addf %78, %79 : vector<8x128xf32>
    %81 = vector.extract_strided_slice %80 {offsets = [0, 0], sizes = [8, 96], strides = [1, 1]} : vector<8x128xf32> to vector<8x96xf32>
    %82 = arith.negf %81 : vector<8x96xf32>
    %83 = math.exp %82 : vector<8x96xf32>
    %cst_33 = arith.constant 1.000000e+00 : f32
    %84 = vector.broadcast %cst_33 : f32 to vector<8x96xf32>
    %85 = arith.addf %84, %83 : vector<8x96xf32>
    %86 = arith.divf %84, %85 : vector<8x96xf32>
    %87 = vector.extract_strided_slice %80 {offsets = [0, 96], sizes = [8, 32], strides = [1, 1]} : vector<8x128xf32> to vector<8x32xf32>
    %88 = math.tanh %87 : vector<8x32xf32>
    %89 = vector.extract_strided_slice %86 {offsets = [0, 32], sizes = [8, 32], strides = [1, 1]} : vector<8x96xf32> to vector<8x32xf32>
    %90 = arith.mulf %89, %53 : vector<8x32xf32>
    %91 = vector.extract_strided_slice %86 {offsets = [0, 0], sizes = [8, 32], strides = [1, 1]} : vector<8x96xf32> to vector<8x32xf32>
    %92 = arith.mulf %91, %88 : vector<8x32xf32>
    %93 = arith.addf %90, %92 : vector<8x32xf32>
    %94 = vector.extract_strided_slice %86 {offsets = [0, 64], sizes = [8, 32], strides = [1, 1]} : vector<8x96xf32> to vector<8x32xf32>
    %95 = math.tanh %93 : vector<8x32xf32>
    %96 = arith.mulf %94, %95 : vector<8x32xf32>
    %cst_34 = arith.constant dense<0.000000e+00> : vector<8x128xf32>
    %97 = tpu.matmul %56, %9, %cst_34 {dimension_numbers = #tpu.dot_dimension_numbers<[1], [0], [0], [1], [0, 0, 1, 1], [], []>} : vector<8x32xf32>, vector<32x128xf32>, vector<8x128xf32> -> vector<8x128xf32>
    %cst_35 = arith.constant dense<0.000000e+00> : vector<8x128xf32>
    %98 = tpu.matmul %77, %7, %cst_35 {dimension_numbers = #tpu.dot_dimension_numbers<[1], [0], [0], [1], [0, 0, 1, 1], [], []>} : vector<8x32xf32>, vector<32x128xf32>, vector<8x128xf32> -> vector<8x128xf32>
    %99 = arith.addf %97, %98 : vector<8x128xf32>
    %100 = vector.broadcast %11 : vector<1x128xf32> to vector<8x128xf32>
    %101 = arith.addf %99, %100 : vector<8x128xf32>
    %102 = vector.extract_strided_slice %101 {offsets = [0, 0], sizes = [8, 96], strides = [1, 1]} : vector<8x128xf32> to vector<8x96xf32>
    %103 = arith.negf %102 : vector<8x96xf32>
    %104 = math.exp %103 : vector<8x96xf32>
    %cst_36 = arith.constant 1.000000e+00 : f32
    %105 = vector.broadcast %cst_36 : f32 to vector<8x96xf32>
    %106 = arith.addf %105, %104 : vector<8x96xf32>
    %107 = arith.divf %105, %106 : vector<8x96xf32>
    %108 = vector.extract_strided_slice %101 {offsets = [0, 96], sizes = [8, 32], strides = [1, 1]} : vector<8x128xf32> to vector<8x32xf32>
    %109 = math.tanh %108 : vector<8x32xf32>
    %110 = vector.extract_strided_slice %107 {offsets = [0, 32], sizes = [8, 32], strides = [1, 1]} : vector<8x96xf32> to vector<8x32xf32>
    %111 = arith.mulf %110, %74 : vector<8x32xf32>
    %112 = vector.extract_strided_slice %107 {offsets = [0, 0], sizes = [8, 32], strides = [1, 1]} : vector<8x96xf32> to vector<8x32xf32>
    %113 = arith.mulf %112, %109 : vector<8x32xf32>
    %114 = arith.addf %111, %113 : vector<8x32xf32>
    %115 = vector.extract_strided_slice %107 {offsets = [0, 64], sizes = [8, 32], strides = [1, 1]} : vector<8x96xf32> to vector<8x32xf32>
    %116 = math.tanh %114 : vector<8x32xf32>
    %117 = arith.mulf %115, %116 : vector<8x32xf32>
    %cst_37 = arith.constant dense<0.000000e+00> : vector<8x128xf32>
    %118 = tpu.matmul %77, %10, %cst_37 {dimension_numbers = #tpu.dot_dimension_numbers<[1], [0], [0], [1], [0, 0, 1, 1], [], []>} : vector<8x32xf32>, vector<32x128xf32>, vector<8x128xf32> -> vector<8x128xf32>
    %cst_38 = arith.constant dense<0.000000e+00> : vector<8x128xf32>
    %119 = tpu.matmul %15, %8, %cst_38 {dimension_numbers = #tpu.dot_dimension_numbers<[1], [0], [0], [1], [0, 0, 1, 1], [], []>} : vector<8x32xf32>, vector<32x128xf32>, vector<8x128xf32> -> vector<8x128xf32>
    %120 = arith.addf %118, %119 : vector<8x128xf32>
    %121 = vector.broadcast %12 : vector<1x128xf32> to vector<8x128xf32>
    %122 = arith.addf %120, %121 : vector<8x128xf32>
    %123 = vector.extract_strided_slice %122 {offsets = [0, 0], sizes = [8, 96], strides = [1, 1]} : vector<8x128xf32> to vector<8x96xf32>
    %124 = arith.negf %123 : vector<8x96xf32>
    %125 = math.exp %124 : vector<8x96xf32>
    %cst_39 = arith.constant 1.000000e+00 : f32
    %126 = vector.broadcast %cst_39 : f32 to vector<8x96xf32>
    %127 = arith.addf %126, %125 : vector<8x96xf32>
    %128 = arith.divf %126, %127 : vector<8x96xf32>
    %129 = vector.extract_strided_slice %122 {offsets = [0, 96], sizes = [8, 32], strides = [1, 1]} : vector<8x128xf32> to vector<8x32xf32>
    %130 = math.tanh %129 : vector<8x32xf32>
    %131 = vector.extract_strided_slice %128 {offsets = [0, 32], sizes = [8, 32], strides = [1, 1]} : vector<8x96xf32> to vector<8x32xf32>
    %132 = arith.mulf %131, %18 : vector<8x32xf32>
    %133 = vector.extract_strided_slice %128 {offsets = [0, 0], sizes = [8, 32], strides = [1, 1]} : vector<8x96xf32> to vector<8x32xf32>
    %134 = arith.mulf %133, %130 : vector<8x32xf32>
    %135 = arith.addf %132, %134 : vector<8x32xf32>
    %136 = vector.extract_strided_slice %128 {offsets = [0, 64], sizes = [8, 32], strides = [1, 1]} : vector<8x96xf32> to vector<8x32xf32>
    %137 = math.tanh %135 : vector<8x32xf32>
    %138 = arith.mulf %136, %137 : vector<8x32xf32>
    %139 = vector.extract_strided_slice %5 {offsets = [24, 0], sizes = [8, 128], strides = [1, 1]} : vector<64x128xf32> to vector<8x128xf32>
    %cst_40 = arith.constant dense<0.000000e+00> : vector<8x128xf32>
    %140 = tpu.matmul %96, %6, %cst_40 {dimension_numbers = #tpu.dot_dimension_numbers<[1], [0], [0], [1], [0, 0, 1, 1], [], []>} : vector<8x32xf32>, vector<32x128xf32>, vector<8x128xf32> -> vector<8x128xf32>
    %141 = arith.addf %139, %140 : vector<8x128xf32>
    %142 = vector.extract_strided_slice %141 {offsets = [0, 0], sizes = [8, 96], strides = [1, 1]} : vector<8x128xf32> to vector<8x96xf32>
    %143 = arith.negf %142 : vector<8x96xf32>
    %144 = math.exp %143 : vector<8x96xf32>
    %cst_41 = arith.constant 1.000000e+00 : f32
    %145 = vector.broadcast %cst_41 : f32 to vector<8x96xf32>
    %146 = arith.addf %145, %144 : vector<8x96xf32>
    %147 = arith.divf %145, %146 : vector<8x96xf32>
    %148 = vector.extract_strided_slice %141 {offsets = [0, 96], sizes = [8, 32], strides = [1, 1]} : vector<8x128xf32> to vector<8x32xf32>
    %149 = math.tanh %148 : vector<8x32xf32>
    %150 = vector.extract_strided_slice %147 {offsets = [0, 32], sizes = [8, 32], strides = [1, 1]} : vector<8x96xf32> to vector<8x32xf32>
    %151 = arith.mulf %150, %93 : vector<8x32xf32>
    %152 = vector.extract_strided_slice %147 {offsets = [0, 0], sizes = [8, 32], strides = [1, 1]} : vector<8x96xf32> to vector<8x32xf32>
    %153 = arith.mulf %152, %149 : vector<8x32xf32>
    %154 = arith.addf %151, %153 : vector<8x32xf32>
    %155 = vector.extract_strided_slice %147 {offsets = [0, 64], sizes = [8, 32], strides = [1, 1]} : vector<8x96xf32> to vector<8x32xf32>
    %156 = math.tanh %154 : vector<8x32xf32>
    %157 = arith.mulf %155, %156 : vector<8x32xf32>
    %cst_42 = arith.constant dense<0.000000e+00> : vector<8x128xf32>
    %158 = tpu.matmul %96, %9, %cst_42 {dimension_numbers = #tpu.dot_dimension_numbers<[1], [0], [0], [1], [0, 0, 1, 1], [], []>} : vector<8x32xf32>, vector<32x128xf32>, vector<8x128xf32> -> vector<8x128xf32>
    %cst_43 = arith.constant dense<0.000000e+00> : vector<8x128xf32>
    %159 = tpu.matmul %117, %7, %cst_43 {dimension_numbers = #tpu.dot_dimension_numbers<[1], [0], [0], [1], [0, 0, 1, 1], [], []>} : vector<8x32xf32>, vector<32x128xf32>, vector<8x128xf32> -> vector<8x128xf32>
    %160 = arith.addf %158, %159 : vector<8x128xf32>
    %161 = vector.broadcast %11 : vector<1x128xf32> to vector<8x128xf32>
    %162 = arith.addf %160, %161 : vector<8x128xf32>
    %163 = vector.extract_strided_slice %162 {offsets = [0, 0], sizes = [8, 96], strides = [1, 1]} : vector<8x128xf32> to vector<8x96xf32>
    %164 = arith.negf %163 : vector<8x96xf32>
    %165 = math.exp %164 : vector<8x96xf32>
    %cst_44 = arith.constant 1.000000e+00 : f32
    %166 = vector.broadcast %cst_44 : f32 to vector<8x96xf32>
    %167 = arith.addf %166, %165 : vector<8x96xf32>
    %168 = arith.divf %166, %167 : vector<8x96xf32>
    %169 = vector.extract_strided_slice %162 {offsets = [0, 96], sizes = [8, 32], strides = [1, 1]} : vector<8x128xf32> to vector<8x32xf32>
    %170 = math.tanh %169 : vector<8x32xf32>
    %171 = vector.extract_strided_slice %168 {offsets = [0, 32], sizes = [8, 32], strides = [1, 1]} : vector<8x96xf32> to vector<8x32xf32>
    %172 = arith.mulf %171, %114 : vector<8x32xf32>
    %173 = vector.extract_strided_slice %168 {offsets = [0, 0], sizes = [8, 32], strides = [1, 1]} : vector<8x96xf32> to vector<8x32xf32>
    %174 = arith.mulf %173, %170 : vector<8x32xf32>
    %175 = arith.addf %172, %174 : vector<8x32xf32>
    %176 = vector.extract_strided_slice %168 {offsets = [0, 64], sizes = [8, 32], strides = [1, 1]} : vector<8x96xf32> to vector<8x32xf32>
    %177 = math.tanh %175 : vector<8x32xf32>
    %178 = arith.mulf %176, %177 : vector<8x32xf32>
    %cst_45 = arith.constant dense<0.000000e+00> : vector<8x128xf32>
    %179 = tpu.matmul %117, %10, %cst_45 {dimension_numbers = #tpu.dot_dimension_numbers<[1], [0], [0], [1], [0, 0, 1, 1], [], []>} : vector<8x32xf32>, vector<32x128xf32>, vector<8x128xf32> -> vector<8x128xf32>
    %cst_46 = arith.constant dense<0.000000e+00> : vector<8x128xf32>
    %180 = tpu.matmul %138, %8, %cst_46 {dimension_numbers = #tpu.dot_dimension_numbers<[1], [0], [0], [1], [0, 0, 1, 1], [], []>} : vector<8x32xf32>, vector<32x128xf32>, vector<8x128xf32> -> vector<8x128xf32>
    %181 = arith.addf %179, %180 : vector<8x128xf32>
    %182 = vector.broadcast %12 : vector<1x128xf32> to vector<8x128xf32>
    %183 = arith.addf %181, %182 : vector<8x128xf32>
    %184 = vector.extract_strided_slice %183 {offsets = [0, 0], sizes = [8, 96], strides = [1, 1]} : vector<8x128xf32> to vector<8x96xf32>
    %185 = arith.negf %184 : vector<8x96xf32>
    %186 = math.exp %185 : vector<8x96xf32>
    %cst_47 = arith.constant 1.000000e+00 : f32
    %187 = vector.broadcast %cst_47 : f32 to vector<8x96xf32>
    %188 = arith.addf %187, %186 : vector<8x96xf32>
    %189 = arith.divf %187, %188 : vector<8x96xf32>
    %190 = vector.extract_strided_slice %183 {offsets = [0, 96], sizes = [8, 32], strides = [1, 1]} : vector<8x128xf32> to vector<8x32xf32>
    %191 = math.tanh %190 : vector<8x32xf32>
    %192 = vector.extract_strided_slice %189 {offsets = [0, 32], sizes = [8, 32], strides = [1, 1]} : vector<8x96xf32> to vector<8x32xf32>
    %193 = arith.mulf %192, %135 : vector<8x32xf32>
    %194 = vector.extract_strided_slice %189 {offsets = [0, 0], sizes = [8, 32], strides = [1, 1]} : vector<8x96xf32> to vector<8x32xf32>
    %195 = arith.mulf %194, %191 : vector<8x32xf32>
    %196 = arith.addf %193, %195 : vector<8x32xf32>
    %197 = vector.extract_strided_slice %189 {offsets = [0, 64], sizes = [8, 32], strides = [1, 1]} : vector<8x96xf32> to vector<8x32xf32>
    %198 = math.tanh %196 : vector<8x32xf32>
    %199 = arith.mulf %197, %198 : vector<8x32xf32>
    %200 = vector.extract_strided_slice %5 {offsets = [32, 0], sizes = [8, 128], strides = [1, 1]} : vector<64x128xf32> to vector<8x128xf32>
    %cst_48 = arith.constant dense<0.000000e+00> : vector<8x128xf32>
    %201 = tpu.matmul %157, %6, %cst_48 {dimension_numbers = #tpu.dot_dimension_numbers<[1], [0], [0], [1], [0, 0, 1, 1], [], []>} : vector<8x32xf32>, vector<32x128xf32>, vector<8x128xf32> -> vector<8x128xf32>
    %202 = arith.addf %200, %201 : vector<8x128xf32>
    %203 = vector.extract_strided_slice %202 {offsets = [0, 0], sizes = [8, 96], strides = [1, 1]} : vector<8x128xf32> to vector<8x96xf32>
    %204 = arith.negf %203 : vector<8x96xf32>
    %205 = math.exp %204 : vector<8x96xf32>
    %cst_49 = arith.constant 1.000000e+00 : f32
    %206 = vector.broadcast %cst_49 : f32 to vector<8x96xf32>
    %207 = arith.addf %206, %205 : vector<8x96xf32>
    %208 = arith.divf %206, %207 : vector<8x96xf32>
    %209 = vector.extract_strided_slice %202 {offsets = [0, 96], sizes = [8, 32], strides = [1, 1]} : vector<8x128xf32> to vector<8x32xf32>
    %210 = math.tanh %209 : vector<8x32xf32>
    %211 = vector.extract_strided_slice %208 {offsets = [0, 32], sizes = [8, 32], strides = [1, 1]} : vector<8x96xf32> to vector<8x32xf32>
    %212 = arith.mulf %211, %154 : vector<8x32xf32>
    %213 = vector.extract_strided_slice %208 {offsets = [0, 0], sizes = [8, 32], strides = [1, 1]} : vector<8x96xf32> to vector<8x32xf32>
    %214 = arith.mulf %213, %210 : vector<8x32xf32>
    %215 = arith.addf %212, %214 : vector<8x32xf32>
    %216 = vector.extract_strided_slice %208 {offsets = [0, 64], sizes = [8, 32], strides = [1, 1]} : vector<8x96xf32> to vector<8x32xf32>
    %217 = math.tanh %215 : vector<8x32xf32>
    %218 = arith.mulf %216, %217 : vector<8x32xf32>
    %cst_50 = arith.constant dense<0.000000e+00> : vector<8x128xf32>
    %219 = tpu.matmul %157, %9, %cst_50 {dimension_numbers = #tpu.dot_dimension_numbers<[1], [0], [0], [1], [0, 0, 1, 1], [], []>} : vector<8x32xf32>, vector<32x128xf32>, vector<8x128xf32> -> vector<8x128xf32>
    %cst_51 = arith.constant dense<0.000000e+00> : vector<8x128xf32>
    %220 = tpu.matmul %178, %7, %cst_51 {dimension_numbers = #tpu.dot_dimension_numbers<[1], [0], [0], [1], [0, 0, 1, 1], [], []>} : vector<8x32xf32>, vector<32x128xf32>, vector<8x128xf32> -> vector<8x128xf32>
    %221 = arith.addf %219, %220 : vector<8x128xf32>
    %222 = vector.broadcast %11 : vector<1x128xf32> to vector<8x128xf32>
    %223 = arith.addf %221, %222 : vector<8x128xf32>
    %224 = vector.extract_strided_slice %223 {offsets = [0, 0], sizes = [8, 96], strides = [1, 1]} : vector<8x128xf32> to vector<8x96xf32>
    %225 = arith.negf %224 : vector<8x96xf32>
    %226 = math.exp %225 : vector<8x96xf32>
    %cst_52 = arith.constant 1.000000e+00 : f32
    %227 = vector.broadcast %cst_52 : f32 to vector<8x96xf32>
    %228 = arith.addf %227, %226 : vector<8x96xf32>
    %229 = arith.divf %227, %228 : vector<8x96xf32>
    %230 = vector.extract_strided_slice %223 {offsets = [0, 96], sizes = [8, 32], strides = [1, 1]} : vector<8x128xf32> to vector<8x32xf32>
    %231 = math.tanh %230 : vector<8x32xf32>
    %232 = vector.extract_strided_slice %229 {offsets = [0, 32], sizes = [8, 32], strides = [1, 1]} : vector<8x96xf32> to vector<8x32xf32>
    %233 = arith.mulf %232, %175 : vector<8x32xf32>
    %234 = vector.extract_strided_slice %229 {offsets = [0, 0], sizes = [8, 32], strides = [1, 1]} : vector<8x96xf32> to vector<8x32xf32>
    %235 = arith.mulf %234, %231 : vector<8x32xf32>
    %236 = arith.addf %233, %235 : vector<8x32xf32>
    %237 = vector.extract_strided_slice %229 {offsets = [0, 64], sizes = [8, 32], strides = [1, 1]} : vector<8x96xf32> to vector<8x32xf32>
    %238 = math.tanh %236 : vector<8x32xf32>
    %239 = arith.mulf %237, %238 : vector<8x32xf32>
    %cst_53 = arith.constant dense<0.000000e+00> : vector<8x128xf32>
    %240 = tpu.matmul %178, %10, %cst_53 {dimension_numbers = #tpu.dot_dimension_numbers<[1], [0], [0], [1], [0, 0, 1, 1], [], []>} : vector<8x32xf32>, vector<32x128xf32>, vector<8x128xf32> -> vector<8x128xf32>
    %cst_54 = arith.constant dense<0.000000e+00> : vector<8x128xf32>
    %241 = tpu.matmul %199, %8, %cst_54 {dimension_numbers = #tpu.dot_dimension_numbers<[1], [0], [0], [1], [0, 0, 1, 1], [], []>} : vector<8x32xf32>, vector<32x128xf32>, vector<8x128xf32> -> vector<8x128xf32>
    %242 = arith.addf %240, %241 : vector<8x128xf32>
    %243 = vector.broadcast %12 : vector<1x128xf32> to vector<8x128xf32>
    %244 = arith.addf %242, %243 : vector<8x128xf32>
    %245 = vector.extract_strided_slice %244 {offsets = [0, 0], sizes = [8, 96], strides = [1, 1]} : vector<8x128xf32> to vector<8x96xf32>
    %246 = arith.negf %245 : vector<8x96xf32>
    %247 = math.exp %246 : vector<8x96xf32>
    %cst_55 = arith.constant 1.000000e+00 : f32
    %248 = vector.broadcast %cst_55 : f32 to vector<8x96xf32>
    %249 = arith.addf %248, %247 : vector<8x96xf32>
    %250 = arith.divf %248, %249 : vector<8x96xf32>
    %251 = vector.extract_strided_slice %244 {offsets = [0, 96], sizes = [8, 32], strides = [1, 1]} : vector<8x128xf32> to vector<8x32xf32>
    %252 = math.tanh %251 : vector<8x32xf32>
    %253 = vector.extract_strided_slice %250 {offsets = [0, 32], sizes = [8, 32], strides = [1, 1]} : vector<8x96xf32> to vector<8x32xf32>
    %254 = arith.mulf %253, %196 : vector<8x32xf32>
    %255 = vector.extract_strided_slice %250 {offsets = [0, 0], sizes = [8, 32], strides = [1, 1]} : vector<8x96xf32> to vector<8x32xf32>
    %256 = arith.mulf %255, %252 : vector<8x32xf32>
    %257 = arith.addf %254, %256 : vector<8x32xf32>
    %258 = vector.extract_strided_slice %250 {offsets = [0, 64], sizes = [8, 32], strides = [1, 1]} : vector<8x96xf32> to vector<8x32xf32>
    %259 = math.tanh %257 : vector<8x32xf32>
    %260 = arith.mulf %258, %259 : vector<8x32xf32>
    %261 = vector.extract_strided_slice %5 {offsets = [40, 0], sizes = [8, 128], strides = [1, 1]} : vector<64x128xf32> to vector<8x128xf32>
    %cst_56 = arith.constant dense<0.000000e+00> : vector<8x128xf32>
    %262 = tpu.matmul %218, %6, %cst_56 {dimension_numbers = #tpu.dot_dimension_numbers<[1], [0], [0], [1], [0, 0, 1, 1], [], []>} : vector<8x32xf32>, vector<32x128xf32>, vector<8x128xf32> -> vector<8x128xf32>
    %263 = arith.addf %261, %262 : vector<8x128xf32>
    %264 = vector.extract_strided_slice %263 {offsets = [0, 0], sizes = [8, 96], strides = [1, 1]} : vector<8x128xf32> to vector<8x96xf32>
    %265 = arith.negf %264 : vector<8x96xf32>
    %266 = math.exp %265 : vector<8x96xf32>
    %cst_57 = arith.constant 1.000000e+00 : f32
    %267 = vector.broadcast %cst_57 : f32 to vector<8x96xf32>
    %268 = arith.addf %267, %266 : vector<8x96xf32>
    %269 = arith.divf %267, %268 : vector<8x96xf32>
    %270 = vector.extract_strided_slice %263 {offsets = [0, 96], sizes = [8, 32], strides = [1, 1]} : vector<8x128xf32> to vector<8x32xf32>
    %271 = math.tanh %270 : vector<8x32xf32>
    %272 = vector.extract_strided_slice %269 {offsets = [0, 32], sizes = [8, 32], strides = [1, 1]} : vector<8x96xf32> to vector<8x32xf32>
    %273 = arith.mulf %272, %215 : vector<8x32xf32>
    %274 = vector.extract_strided_slice %269 {offsets = [0, 0], sizes = [8, 32], strides = [1, 1]} : vector<8x96xf32> to vector<8x32xf32>
    %275 = arith.mulf %274, %271 : vector<8x32xf32>
    %276 = arith.addf %273, %275 : vector<8x32xf32>
    %277 = vector.extract_strided_slice %269 {offsets = [0, 64], sizes = [8, 32], strides = [1, 1]} : vector<8x96xf32> to vector<8x32xf32>
    %278 = math.tanh %276 : vector<8x32xf32>
    %279 = arith.mulf %277, %278 : vector<8x32xf32>
    %cst_58 = arith.constant dense<0.000000e+00> : vector<8x128xf32>
    %280 = tpu.matmul %218, %9, %cst_58 {dimension_numbers = #tpu.dot_dimension_numbers<[1], [0], [0], [1], [0, 0, 1, 1], [], []>} : vector<8x32xf32>, vector<32x128xf32>, vector<8x128xf32> -> vector<8x128xf32>
    %cst_59 = arith.constant dense<0.000000e+00> : vector<8x128xf32>
    %281 = tpu.matmul %239, %7, %cst_59 {dimension_numbers = #tpu.dot_dimension_numbers<[1], [0], [0], [1], [0, 0, 1, 1], [], []>} : vector<8x32xf32>, vector<32x128xf32>, vector<8x128xf32> -> vector<8x128xf32>
    %282 = arith.addf %280, %281 : vector<8x128xf32>
    %283 = vector.broadcast %11 : vector<1x128xf32> to vector<8x128xf32>
    %284 = arith.addf %282, %283 : vector<8x128xf32>
    %285 = vector.extract_strided_slice %284 {offsets = [0, 0], sizes = [8, 96], strides = [1, 1]} : vector<8x128xf32> to vector<8x96xf32>
    %286 = arith.negf %285 : vector<8x96xf32>
    %287 = math.exp %286 : vector<8x96xf32>
    %cst_60 = arith.constant 1.000000e+00 : f32
    %288 = vector.broadcast %cst_60 : f32 to vector<8x96xf32>
    %289 = arith.addf %288, %287 : vector<8x96xf32>
    %290 = arith.divf %288, %289 : vector<8x96xf32>
    %291 = vector.extract_strided_slice %284 {offsets = [0, 96], sizes = [8, 32], strides = [1, 1]} : vector<8x128xf32> to vector<8x32xf32>
    %292 = math.tanh %291 : vector<8x32xf32>
    %293 = vector.extract_strided_slice %290 {offsets = [0, 32], sizes = [8, 32], strides = [1, 1]} : vector<8x96xf32> to vector<8x32xf32>
    %294 = arith.mulf %293, %236 : vector<8x32xf32>
    %295 = vector.extract_strided_slice %290 {offsets = [0, 0], sizes = [8, 32], strides = [1, 1]} : vector<8x96xf32> to vector<8x32xf32>
    %296 = arith.mulf %295, %292 : vector<8x32xf32>
    %297 = arith.addf %294, %296 : vector<8x32xf32>
    %298 = vector.extract_strided_slice %290 {offsets = [0, 64], sizes = [8, 32], strides = [1, 1]} : vector<8x96xf32> to vector<8x32xf32>
    %299 = math.tanh %297 : vector<8x32xf32>
    %300 = arith.mulf %298, %299 : vector<8x32xf32>
    %cst_61 = arith.constant dense<0.000000e+00> : vector<8x128xf32>
    %301 = tpu.matmul %239, %10, %cst_61 {dimension_numbers = #tpu.dot_dimension_numbers<[1], [0], [0], [1], [0, 0, 1, 1], [], []>} : vector<8x32xf32>, vector<32x128xf32>, vector<8x128xf32> -> vector<8x128xf32>
    %cst_62 = arith.constant dense<0.000000e+00> : vector<8x128xf32>
    %302 = tpu.matmul %260, %8, %cst_62 {dimension_numbers = #tpu.dot_dimension_numbers<[1], [0], [0], [1], [0, 0, 1, 1], [], []>} : vector<8x32xf32>, vector<32x128xf32>, vector<8x128xf32> -> vector<8x128xf32>
    %303 = arith.addf %301, %302 : vector<8x128xf32>
    %304 = vector.broadcast %12 : vector<1x128xf32> to vector<8x128xf32>
    %305 = arith.addf %303, %304 : vector<8x128xf32>
    %306 = vector.extract_strided_slice %305 {offsets = [0, 0], sizes = [8, 96], strides = [1, 1]} : vector<8x128xf32> to vector<8x96xf32>
    %307 = arith.negf %306 : vector<8x96xf32>
    %308 = math.exp %307 : vector<8x96xf32>
    %cst_63 = arith.constant 1.000000e+00 : f32
    %309 = vector.broadcast %cst_63 : f32 to vector<8x96xf32>
    %310 = arith.addf %309, %308 : vector<8x96xf32>
    %311 = arith.divf %309, %310 : vector<8x96xf32>
    %312 = vector.extract_strided_slice %305 {offsets = [0, 96], sizes = [8, 32], strides = [1, 1]} : vector<8x128xf32> to vector<8x32xf32>
    %313 = math.tanh %312 : vector<8x32xf32>
    %314 = vector.extract_strided_slice %311 {offsets = [0, 32], sizes = [8, 32], strides = [1, 1]} : vector<8x96xf32> to vector<8x32xf32>
    %315 = arith.mulf %314, %257 : vector<8x32xf32>
    %316 = vector.extract_strided_slice %311 {offsets = [0, 0], sizes = [8, 32], strides = [1, 1]} : vector<8x96xf32> to vector<8x32xf32>
    %317 = arith.mulf %316, %313 : vector<8x32xf32>
    %318 = arith.addf %315, %317 : vector<8x32xf32>
    %319 = vector.extract_strided_slice %311 {offsets = [0, 64], sizes = [8, 32], strides = [1, 1]} : vector<8x96xf32> to vector<8x32xf32>
    %320 = math.tanh %318 : vector<8x32xf32>
    %321 = arith.mulf %319, %320 : vector<8x32xf32>
    %322 = vector.extract_strided_slice %5 {offsets = [48, 0], sizes = [8, 128], strides = [1, 1]} : vector<64x128xf32> to vector<8x128xf32>
    %cst_64 = arith.constant dense<0.000000e+00> : vector<8x128xf32>
    %323 = tpu.matmul %279, %6, %cst_64 {dimension_numbers = #tpu.dot_dimension_numbers<[1], [0], [0], [1], [0, 0, 1, 1], [], []>} : vector<8x32xf32>, vector<32x128xf32>, vector<8x128xf32> -> vector<8x128xf32>
    %324 = arith.addf %322, %323 : vector<8x128xf32>
    %325 = vector.extract_strided_slice %324 {offsets = [0, 0], sizes = [8, 96], strides = [1, 1]} : vector<8x128xf32> to vector<8x96xf32>
    %326 = arith.negf %325 : vector<8x96xf32>
    %327 = math.exp %326 : vector<8x96xf32>
    %cst_65 = arith.constant 1.000000e+00 : f32
    %328 = vector.broadcast %cst_65 : f32 to vector<8x96xf32>
    %329 = arith.addf %328, %327 : vector<8x96xf32>
    %330 = arith.divf %328, %329 : vector<8x96xf32>
    %331 = vector.extract_strided_slice %324 {offsets = [0, 96], sizes = [8, 32], strides = [1, 1]} : vector<8x128xf32> to vector<8x32xf32>
    %332 = math.tanh %331 : vector<8x32xf32>
    %333 = vector.extract_strided_slice %330 {offsets = [0, 32], sizes = [8, 32], strides = [1, 1]} : vector<8x96xf32> to vector<8x32xf32>
    %334 = arith.mulf %333, %276 : vector<8x32xf32>
    %335 = vector.extract_strided_slice %330 {offsets = [0, 0], sizes = [8, 32], strides = [1, 1]} : vector<8x96xf32> to vector<8x32xf32>
    %336 = arith.mulf %335, %332 : vector<8x32xf32>
    %337 = arith.addf %334, %336 : vector<8x32xf32>
    %338 = vector.extract_strided_slice %330 {offsets = [0, 64], sizes = [8, 32], strides = [1, 1]} : vector<8x96xf32> to vector<8x32xf32>
    %339 = math.tanh %337 : vector<8x32xf32>
    %340 = arith.mulf %338, %339 : vector<8x32xf32>
    %cst_66 = arith.constant dense<0.000000e+00> : vector<8x128xf32>
    %341 = tpu.matmul %279, %9, %cst_66 {dimension_numbers = #tpu.dot_dimension_numbers<[1], [0], [0], [1], [0, 0, 1, 1], [], []>} : vector<8x32xf32>, vector<32x128xf32>, vector<8x128xf32> -> vector<8x128xf32>
    %cst_67 = arith.constant dense<0.000000e+00> : vector<8x128xf32>
    %342 = tpu.matmul %300, %7, %cst_67 {dimension_numbers = #tpu.dot_dimension_numbers<[1], [0], [0], [1], [0, 0, 1, 1], [], []>} : vector<8x32xf32>, vector<32x128xf32>, vector<8x128xf32> -> vector<8x128xf32>
    %343 = arith.addf %341, %342 : vector<8x128xf32>
    %344 = vector.broadcast %11 : vector<1x128xf32> to vector<8x128xf32>
    %345 = arith.addf %343, %344 : vector<8x128xf32>
    %346 = vector.extract_strided_slice %345 {offsets = [0, 0], sizes = [8, 96], strides = [1, 1]} : vector<8x128xf32> to vector<8x96xf32>
    %347 = arith.negf %346 : vector<8x96xf32>
    %348 = math.exp %347 : vector<8x96xf32>
    %cst_68 = arith.constant 1.000000e+00 : f32
    %349 = vector.broadcast %cst_68 : f32 to vector<8x96xf32>
    %350 = arith.addf %349, %348 : vector<8x96xf32>
    %351 = arith.divf %349, %350 : vector<8x96xf32>
    %352 = vector.extract_strided_slice %345 {offsets = [0, 96], sizes = [8, 32], strides = [1, 1]} : vector<8x128xf32> to vector<8x32xf32>
    %353 = math.tanh %352 : vector<8x32xf32>
    %354 = vector.extract_strided_slice %351 {offsets = [0, 32], sizes = [8, 32], strides = [1, 1]} : vector<8x96xf32> to vector<8x32xf32>
    %355 = arith.mulf %354, %297 : vector<8x32xf32>
    %356 = vector.extract_strided_slice %351 {offsets = [0, 0], sizes = [8, 32], strides = [1, 1]} : vector<8x96xf32> to vector<8x32xf32>
    %357 = arith.mulf %356, %353 : vector<8x32xf32>
    %358 = arith.addf %355, %357 : vector<8x32xf32>
    %359 = vector.extract_strided_slice %351 {offsets = [0, 64], sizes = [8, 32], strides = [1, 1]} : vector<8x96xf32> to vector<8x32xf32>
    %360 = math.tanh %358 : vector<8x32xf32>
    %361 = arith.mulf %359, %360 : vector<8x32xf32>
    %cst_69 = arith.constant dense<0.000000e+00> : vector<8x128xf32>
    %362 = tpu.matmul %300, %10, %cst_69 {dimension_numbers = #tpu.dot_dimension_numbers<[1], [0], [0], [1], [0, 0, 1, 1], [], []>} : vector<8x32xf32>, vector<32x128xf32>, vector<8x128xf32> -> vector<8x128xf32>
    %cst_70 = arith.constant dense<0.000000e+00> : vector<8x128xf32>
    %363 = tpu.matmul %321, %8, %cst_70 {dimension_numbers = #tpu.dot_dimension_numbers<[1], [0], [0], [1], [0, 0, 1, 1], [], []>} : vector<8x32xf32>, vector<32x128xf32>, vector<8x128xf32> -> vector<8x128xf32>
    %364 = arith.addf %362, %363 : vector<8x128xf32>
    %365 = vector.broadcast %12 : vector<1x128xf32> to vector<8x128xf32>
    %366 = arith.addf %364, %365 : vector<8x128xf32>
    %367 = vector.extract_strided_slice %366 {offsets = [0, 0], sizes = [8, 96], strides = [1, 1]} : vector<8x128xf32> to vector<8x96xf32>
    %368 = arith.negf %367 : vector<8x96xf32>
    %369 = math.exp %368 : vector<8x96xf32>
    %cst_71 = arith.constant 1.000000e+00 : f32
    %370 = vector.broadcast %cst_71 : f32 to vector<8x96xf32>
    %371 = arith.addf %370, %369 : vector<8x96xf32>
    %372 = arith.divf %370, %371 : vector<8x96xf32>
    %373 = vector.extract_strided_slice %366 {offsets = [0, 96], sizes = [8, 32], strides = [1, 1]} : vector<8x128xf32> to vector<8x32xf32>
    %374 = math.tanh %373 : vector<8x32xf32>
    %375 = vector.extract_strided_slice %372 {offsets = [0, 32], sizes = [8, 32], strides = [1, 1]} : vector<8x96xf32> to vector<8x32xf32>
    %376 = arith.mulf %375, %318 : vector<8x32xf32>
    %377 = vector.extract_strided_slice %372 {offsets = [0, 0], sizes = [8, 32], strides = [1, 1]} : vector<8x96xf32> to vector<8x32xf32>
    %378 = arith.mulf %377, %374 : vector<8x32xf32>
    %379 = arith.addf %376, %378 : vector<8x32xf32>
    %380 = vector.extract_strided_slice %372 {offsets = [0, 64], sizes = [8, 32], strides = [1, 1]} : vector<8x96xf32> to vector<8x32xf32>
    %381 = math.tanh %379 : vector<8x32xf32>
    %382 = arith.mulf %380, %381 : vector<8x32xf32>
    %383 = vector.extract_strided_slice %5 {offsets = [56, 0], sizes = [8, 128], strides = [1, 1]} : vector<64x128xf32> to vector<8x128xf32>
    %cst_72 = arith.constant dense<0.000000e+00> : vector<8x128xf32>
    %384 = tpu.matmul %340, %6, %cst_72 {dimension_numbers = #tpu.dot_dimension_numbers<[1], [0], [0], [1], [0, 0, 1, 1], [], []>} : vector<8x32xf32>, vector<32x128xf32>, vector<8x128xf32> -> vector<8x128xf32>
    %385 = arith.addf %383, %384 : vector<8x128xf32>
    %386 = vector.extract_strided_slice %385 {offsets = [0, 0], sizes = [8, 96], strides = [1, 1]} : vector<8x128xf32> to vector<8x96xf32>
    %387 = arith.negf %386 : vector<8x96xf32>
    %388 = math.exp %387 : vector<8x96xf32>
    %cst_73 = arith.constant 1.000000e+00 : f32
    %389 = vector.broadcast %cst_73 : f32 to vector<8x96xf32>
    %390 = arith.addf %389, %388 : vector<8x96xf32>
    %391 = arith.divf %389, %390 : vector<8x96xf32>
    %392 = vector.extract_strided_slice %385 {offsets = [0, 96], sizes = [8, 32], strides = [1, 1]} : vector<8x128xf32> to vector<8x32xf32>
    %393 = math.tanh %392 : vector<8x32xf32>
    %394 = vector.extract_strided_slice %391 {offsets = [0, 32], sizes = [8, 32], strides = [1, 1]} : vector<8x96xf32> to vector<8x32xf32>
    %395 = arith.mulf %394, %337 : vector<8x32xf32>
    %396 = vector.extract_strided_slice %391 {offsets = [0, 0], sizes = [8, 32], strides = [1, 1]} : vector<8x96xf32> to vector<8x32xf32>
    %397 = arith.mulf %396, %393 : vector<8x32xf32>
    %398 = arith.addf %395, %397 : vector<8x32xf32>
    %399 = vector.extract_strided_slice %391 {offsets = [0, 64], sizes = [8, 32], strides = [1, 1]} : vector<8x96xf32> to vector<8x32xf32>
    %400 = math.tanh %398 : vector<8x32xf32>
    %401 = arith.mulf %399, %400 : vector<8x32xf32>
    %cst_74 = arith.constant dense<0.000000e+00> : vector<8x128xf32>
    %402 = tpu.matmul %340, %9, %cst_74 {dimension_numbers = #tpu.dot_dimension_numbers<[1], [0], [0], [1], [0, 0, 1, 1], [], []>} : vector<8x32xf32>, vector<32x128xf32>, vector<8x128xf32> -> vector<8x128xf32>
    %cst_75 = arith.constant dense<0.000000e+00> : vector<8x128xf32>
    %403 = tpu.matmul %361, %7, %cst_75 {dimension_numbers = #tpu.dot_dimension_numbers<[1], [0], [0], [1], [0, 0, 1, 1], [], []>} : vector<8x32xf32>, vector<32x128xf32>, vector<8x128xf32> -> vector<8x128xf32>
    %404 = arith.addf %402, %403 : vector<8x128xf32>
    %405 = vector.broadcast %11 : vector<1x128xf32> to vector<8x128xf32>
    %406 = arith.addf %404, %405 : vector<8x128xf32>
    %407 = vector.extract_strided_slice %406 {offsets = [0, 0], sizes = [8, 96], strides = [1, 1]} : vector<8x128xf32> to vector<8x96xf32>
    %408 = arith.negf %407 : vector<8x96xf32>
    %409 = math.exp %408 : vector<8x96xf32>
    %cst_76 = arith.constant 1.000000e+00 : f32
    %410 = vector.broadcast %cst_76 : f32 to vector<8x96xf32>
    %411 = arith.addf %410, %409 : vector<8x96xf32>
    %412 = arith.divf %410, %411 : vector<8x96xf32>
    %413 = vector.extract_strided_slice %406 {offsets = [0, 96], sizes = [8, 32], strides = [1, 1]} : vector<8x128xf32> to vector<8x32xf32>
    %414 = math.tanh %413 : vector<8x32xf32>
    %415 = vector.extract_strided_slice %412 {offsets = [0, 32], sizes = [8, 32], strides = [1, 1]} : vector<8x96xf32> to vector<8x32xf32>
    %416 = arith.mulf %415, %358 : vector<8x32xf32>
    %417 = vector.extract_strided_slice %412 {offsets = [0, 0], sizes = [8, 32], strides = [1, 1]} : vector<8x96xf32> to vector<8x32xf32>
    %418 = arith.mulf %417, %414 : vector<8x32xf32>
    %419 = arith.addf %416, %418 : vector<8x32xf32>
    %420 = vector.extract_strided_slice %412 {offsets = [0, 64], sizes = [8, 32], strides = [1, 1]} : vector<8x96xf32> to vector<8x32xf32>
    %421 = math.tanh %419 : vector<8x32xf32>
    %422 = arith.mulf %420, %421 : vector<8x32xf32>
    %cst_77 = arith.constant dense<0.000000e+00> : vector<8x128xf32>
    %423 = tpu.matmul %361, %10, %cst_77 {dimension_numbers = #tpu.dot_dimension_numbers<[1], [0], [0], [1], [0, 0, 1, 1], [], []>} : vector<8x32xf32>, vector<32x128xf32>, vector<8x128xf32> -> vector<8x128xf32>
    %cst_78 = arith.constant dense<0.000000e+00> : vector<8x128xf32>
    %424 = tpu.matmul %382, %8, %cst_78 {dimension_numbers = #tpu.dot_dimension_numbers<[1], [0], [0], [1], [0, 0, 1, 1], [], []>} : vector<8x32xf32>, vector<32x128xf32>, vector<8x128xf32> -> vector<8x128xf32>
    %425 = arith.addf %423, %424 : vector<8x128xf32>
    %426 = vector.broadcast %12 : vector<1x128xf32> to vector<8x128xf32>
    %427 = arith.addf %425, %426 : vector<8x128xf32>
    %428 = vector.extract_strided_slice %427 {offsets = [0, 0], sizes = [8, 96], strides = [1, 1]} : vector<8x128xf32> to vector<8x96xf32>
    %429 = arith.negf %428 : vector<8x96xf32>
    %430 = math.exp %429 : vector<8x96xf32>
    %cst_79 = arith.constant 1.000000e+00 : f32
    %431 = vector.broadcast %cst_79 : f32 to vector<8x96xf32>
    %432 = arith.addf %431, %430 : vector<8x96xf32>
    %433 = arith.divf %431, %432 : vector<8x96xf32>
    %434 = vector.extract_strided_slice %427 {offsets = [0, 96], sizes = [8, 32], strides = [1, 1]} : vector<8x128xf32> to vector<8x32xf32>
    %435 = math.tanh %434 : vector<8x32xf32>
    %436 = vector.extract_strided_slice %433 {offsets = [0, 32], sizes = [8, 32], strides = [1, 1]} : vector<8x96xf32> to vector<8x32xf32>
    %437 = arith.mulf %436, %379 : vector<8x32xf32>
    %438 = vector.extract_strided_slice %433 {offsets = [0, 0], sizes = [8, 32], strides = [1, 1]} : vector<8x96xf32> to vector<8x32xf32>
    %439 = arith.mulf %438, %435 : vector<8x32xf32>
    %440 = arith.addf %437, %439 : vector<8x32xf32>
    %441 = vector.extract_strided_slice %433 {offsets = [0, 64], sizes = [8, 32], strides = [1, 1]} : vector<8x96xf32> to vector<8x32xf32>
    %442 = math.tanh %440 : vector<8x32xf32>
    %443 = arith.mulf %441, %442 : vector<8x32xf32>
    %cst_80 = arith.constant dense<0.000000e+00> : vector<8x128xf32>
    %444 = tpu.matmul %401, %9, %cst_80 {dimension_numbers = #tpu.dot_dimension_numbers<[1], [0], [0], [1], [0, 0, 1, 1], [], []>} : vector<8x32xf32>, vector<32x128xf32>, vector<8x128xf32> -> vector<8x128xf32>
    %cst_81 = arith.constant dense<0.000000e+00> : vector<8x128xf32>
    %445 = tpu.matmul %422, %7, %cst_81 {dimension_numbers = #tpu.dot_dimension_numbers<[1], [0], [0], [1], [0, 0, 1, 1], [], []>} : vector<8x32xf32>, vector<32x128xf32>, vector<8x128xf32> -> vector<8x128xf32>
    %446 = arith.addf %444, %445 : vector<8x128xf32>
    %447 = vector.broadcast %11 : vector<1x128xf32> to vector<8x128xf32>
    %448 = arith.addf %446, %447 : vector<8x128xf32>
    %449 = vector.extract_strided_slice %448 {offsets = [0, 0], sizes = [8, 96], strides = [1, 1]} : vector<8x128xf32> to vector<8x96xf32>
    %450 = arith.negf %449 : vector<8x96xf32>
    %451 = math.exp %450 : vector<8x96xf32>
    %cst_82 = arith.constant 1.000000e+00 : f32
    %452 = vector.broadcast %cst_82 : f32 to vector<8x96xf32>
    %453 = arith.addf %452, %451 : vector<8x96xf32>
    %454 = arith.divf %452, %453 : vector<8x96xf32>
    %455 = vector.extract_strided_slice %448 {offsets = [0, 96], sizes = [8, 32], strides = [1, 1]} : vector<8x128xf32> to vector<8x32xf32>
    %456 = math.tanh %455 : vector<8x32xf32>
    %457 = vector.extract_strided_slice %454 {offsets = [0, 32], sizes = [8, 32], strides = [1, 1]} : vector<8x96xf32> to vector<8x32xf32>
    %458 = arith.mulf %457, %419 : vector<8x32xf32>
    %459 = vector.extract_strided_slice %454 {offsets = [0, 0], sizes = [8, 32], strides = [1, 1]} : vector<8x96xf32> to vector<8x32xf32>
    %460 = arith.mulf %459, %456 : vector<8x32xf32>
    %461 = arith.addf %458, %460 : vector<8x32xf32>
    %462 = vector.extract_strided_slice %454 {offsets = [0, 64], sizes = [8, 32], strides = [1, 1]} : vector<8x96xf32> to vector<8x32xf32>
    %463 = math.tanh %461 : vector<8x32xf32>
    %464 = arith.mulf %462, %463 : vector<8x32xf32>
    %cst_83 = arith.constant dense<0.000000e+00> : vector<8x128xf32>
    %465 = tpu.matmul %422, %10, %cst_83 {dimension_numbers = #tpu.dot_dimension_numbers<[1], [0], [0], [1], [0, 0, 1, 1], [], []>} : vector<8x32xf32>, vector<32x128xf32>, vector<8x128xf32> -> vector<8x128xf32>
    %cst_84 = arith.constant dense<0.000000e+00> : vector<8x128xf32>
    %466 = tpu.matmul %443, %8, %cst_84 {dimension_numbers = #tpu.dot_dimension_numbers<[1], [0], [0], [1], [0, 0, 1, 1], [], []>} : vector<8x32xf32>, vector<32x128xf32>, vector<8x128xf32> -> vector<8x128xf32>
    %467 = arith.addf %465, %466 : vector<8x128xf32>
    %468 = vector.broadcast %12 : vector<1x128xf32> to vector<8x128xf32>
    %469 = arith.addf %467, %468 : vector<8x128xf32>
    %470 = vector.extract_strided_slice %469 {offsets = [0, 0], sizes = [8, 96], strides = [1, 1]} : vector<8x128xf32> to vector<8x96xf32>
    %471 = arith.negf %470 : vector<8x96xf32>
    %472 = math.exp %471 : vector<8x96xf32>
    %cst_85 = arith.constant 1.000000e+00 : f32
    %473 = vector.broadcast %cst_85 : f32 to vector<8x96xf32>
    %474 = arith.addf %473, %472 : vector<8x96xf32>
    %475 = arith.divf %473, %474 : vector<8x96xf32>
    %476 = vector.extract_strided_slice %469 {offsets = [0, 96], sizes = [8, 32], strides = [1, 1]} : vector<8x128xf32> to vector<8x32xf32>
    %477 = math.tanh %476 : vector<8x32xf32>
    %478 = vector.extract_strided_slice %475 {offsets = [0, 32], sizes = [8, 32], strides = [1, 1]} : vector<8x96xf32> to vector<8x32xf32>
    %479 = arith.mulf %478, %440 : vector<8x32xf32>
    %480 = vector.extract_strided_slice %475 {offsets = [0, 0], sizes = [8, 32], strides = [1, 1]} : vector<8x96xf32> to vector<8x32xf32>
    %481 = arith.mulf %480, %477 : vector<8x32xf32>
    %482 = arith.addf %479, %481 : vector<8x32xf32>
    %483 = vector.extract_strided_slice %475 {offsets = [0, 64], sizes = [8, 32], strides = [1, 1]} : vector<8x96xf32> to vector<8x32xf32>
    %484 = math.tanh %482 : vector<8x32xf32>
    %485 = arith.mulf %483, %484 : vector<8x32xf32>
    %cst_86 = arith.constant dense<0.000000e+00> : vector<8x128xf32>
    %486 = tpu.matmul %464, %10, %cst_86 {dimension_numbers = #tpu.dot_dimension_numbers<[1], [0], [0], [1], [0, 0, 1, 1], [], []>} : vector<8x32xf32>, vector<32x128xf32>, vector<8x128xf32> -> vector<8x128xf32>
    %cst_87 = arith.constant dense<0.000000e+00> : vector<8x128xf32>
    %487 = tpu.matmul %485, %8, %cst_87 {dimension_numbers = #tpu.dot_dimension_numbers<[1], [0], [0], [1], [0, 0, 1, 1], [], []>} : vector<8x32xf32>, vector<32x128xf32>, vector<8x128xf32> -> vector<8x128xf32>
    %488 = arith.addf %486, %487 : vector<8x128xf32>
    %489 = vector.broadcast %12 : vector<1x128xf32> to vector<8x128xf32>
    %490 = arith.addf %488, %489 : vector<8x128xf32>
    %491 = vector.extract_strided_slice %490 {offsets = [0, 0], sizes = [8, 96], strides = [1, 1]} : vector<8x128xf32> to vector<8x96xf32>
    %492 = arith.negf %491 : vector<8x96xf32>
    %493 = math.exp %492 : vector<8x96xf32>
    %cst_88 = arith.constant 1.000000e+00 : f32
    %494 = vector.broadcast %cst_88 : f32 to vector<8x96xf32>
    %495 = arith.addf %494, %493 : vector<8x96xf32>
    %496 = arith.divf %494, %495 : vector<8x96xf32>
    %497 = vector.extract_strided_slice %490 {offsets = [0, 96], sizes = [8, 32], strides = [1, 1]} : vector<8x128xf32> to vector<8x32xf32>
    %498 = math.tanh %497 : vector<8x32xf32>
    %499 = vector.extract_strided_slice %496 {offsets = [0, 32], sizes = [8, 32], strides = [1, 1]} : vector<8x96xf32> to vector<8x32xf32>
    %500 = arith.mulf %499, %482 : vector<8x32xf32>
    %501 = vector.extract_strided_slice %496 {offsets = [0, 0], sizes = [8, 32], strides = [1, 1]} : vector<8x96xf32> to vector<8x32xf32>
    %502 = arith.mulf %501, %498 : vector<8x32xf32>
    %503 = arith.addf %500, %502 : vector<8x32xf32>
    %504 = vector.extract_strided_slice %496 {offsets = [0, 64], sizes = [8, 32], strides = [1, 1]} : vector<8x96xf32> to vector<8x32xf32>
    %505 = math.tanh %503 : vector<8x32xf32>
    %506 = arith.mulf %504, %505 : vector<8x32xf32>
    %c0_89 = arith.constant 0 : index
    %c0_90 = arith.constant 0 : index
    %507 = vector.load %arg10[%c0_89, %c0_90] : memref<32x3xf32, #tpu.memory_space<vmem>>, vector<32x3xf32>
    %cst_91 = arith.constant dense<0.000000e+00> : vector<8x3xf32>
    %508 = tpu.matmul %506, %507, %cst_91 {dimension_numbers = #tpu.dot_dimension_numbers<[1], [0], [0], [1], [0, 0, 1, 1], [], []>} : vector<8x32xf32>, vector<32x3xf32>, vector<8x3xf32> -> vector<8x3xf32>
    %c0_92 = arith.constant 0 : index
    %c0_93 = arith.constant 0 : index
    %509 = vector.load %arg11[%c0_92, %c0_93] : memref<1x3xf32, #tpu.memory_space<vmem>>, vector<1x3xf32>
    %510 = vector.broadcast %509 : vector<1x3xf32> to vector<8x3xf32>
    %511 = arith.addf %508, %510 : vector<8x3xf32>
    %c0_94 = arith.constant 0 : index
    %c0_95 = arith.constant 0 : index
    %512 = vector.load %arg12[%c0_94, %c0_95] : memref<8x3xf32, #tpu.memory_space<vmem>>, vector<8x3xf32>
    tpu.vector_store %arg12[%c0_94, %c0_95], %511 {strides = array<i32>} : memref<8x3xf32, #tpu.memory_space<vmem>>, vector<8x3xf32>,
    return
  }
}

</mosaic_0001>

<llo_original>
// kernel: stock_lstm_forward.1
$region0: #{stock_lstm_forward.1}
  #allocation0 [shape = 'u32[]', space=smem, size = 0x4, offset = 0x4, fixed_abs, tag = 'smem constant byte address 0x4 - core index']
  #allocation1 [shape = 'u32[144,128]{1,0:T(1,128)}', space=vmem, size = 0x12000, scoped, tag = 'internal scratch']
  %s0 = inlined_call_operand.vmem [shape: f32[64,4], index: 0, kind: input, shape index: {}]
  %s1 = inlined_call_operand.vmem [shape: f32[4,128], index: 1, kind: input, shape index: {}]
  %s2 = inlined_call_operand.vmem [shape: f32[32,128], index: 2, kind: input, shape index: {}]
  %s3 = inlined_call_operand.vmem [shape: f32[1,128], index: 3, kind: input, shape index: {}]
  %s4 = inlined_call_operand.vmem [shape: f32[32,128], index: 4, kind: input, shape index: {}]
  %s5 = inlined_call_operand.vmem [shape: f32[32,128], index: 5, kind: input, shape index: {}]
  %s6 = inlined_call_operand.vmem [shape: f32[1,128], index: 6, kind: input, shape index: {}]
  %s7 = inlined_call_operand.vmem [shape: f32[32,128], index: 7, kind: input, shape index: {}]
  %s8 = inlined_call_operand.hbm [shape: f32[32,128], index: 8, kind: input, shape index: {}]
  %s9 = inlined_call_operand.vmem [shape: f32[1,128], index: 9, kind: input, shape index: {}]
  %s10 = inlined_call_operand.vmem [shape: f32[32,3], index: 10, kind: input, shape index: {}]
  %s11 = inlined_call_operand.vmem [shape: f32[1,3], index: 11, kind: input, shape index: {}]
  %s12 = inlined_call_operand.vmem [shape: f32[8,3], index: 12, kind: output, shape index: {}]
  %s13 = sld [smem:[#allocation0]]
  $region62: #{stock_lstm_forward.1} parent=0
    _
  %s15 = ssub.s32 1, %s13
  %s16 = scalar_select 0, %s15, %s13
  $region1: #{stock_lstm_forward.1} parent=0
    #allocation2 [shape = 'u8[16384]{0}', space=vmem, size = 0x4000, scoped, tag = 'input window, operand 8, single buffered']
    #allocation3 [shape = 's32[1]{0}', space=sflag, size = 0x4, scoped, tag = 'scoped memory for stock_lstm_forward.1']
    %17 = vsyncpa [#allocation3], 0
    // Predicated region
    $region2: #{stock_lstm_forward.1} parent=1 // pred_check
      _
    $region3: #{stock_lstm_forward.1} parent=1 // pred_check_branch
      %19 = sbr.rel (0) target = $region5
    $region4: #{stock_lstm_forward.1} parent=1 // pred_region
      _
    $region5: #{stock_lstm_forward.1} parent=1 // pred_fallthru
      _
    // Predicated region
    $region6: #{stock_lstm_forward.1} parent=1 // pred_check
      _
    $region7: #{stock_lstm_forward.1} parent=1 // pred_check_branch
      %21 = sbr.rel (0) target = $region9
    $region8: #{stock_lstm_forward.1} parent=1 // pred_region
      _
    $region9: #{stock_lstm_forward.1} parent=1 // pred_fallthru
      _
    // Predicated region
    $region10: #{stock_lstm_forward.1} parent=1 // pred_check
      _
    $region11: #{stock_lstm_forward.1} parent=1 // pred_check_branch
      %23 = sbr.rel (0) target = $region13
    $region12: #{stock_lstm_forward.1} parent=1 // pred_region
      _
    $region13: #{stock_lstm_forward.1} parent=1 // pred_fallthru
      _
    // Predicated region
    $region14: #{stock_lstm_forward.1} parent=1 // pred_check
      _
    $region15: #{stock_lstm_forward.1} parent=1 // pred_check_branch
      %25 = sbr.rel (0) target = $region17
    $region16: #{stock_lstm_forward.1} parent=1 // pred_region
      _
    $region17: #{stock_lstm_forward.1} parent=1 // pred_fallthru
      _
    // Predicated region
    $region18: #{stock_lstm_forward.1} parent=1 // pred_check
      _
    $region19: #{stock_lstm_forward.1} parent=1 // pred_check_branch
      %27 = sbr.rel (0) target = $region21
    $region20: #{stock_lstm_forward.1} parent=1 // pred_region
      _
    $region21: #{stock_lstm_forward.1} parent=1 // pred_fallthru
      _
    // Predicated region
    $region22: #{stock_lstm_forward.1} parent=1 // pred_check
      _
    $region23: #{stock_lstm_forward.1} parent=1 // pred_check_branch
      %29 = sbr.rel (0) target = $region25
    $region24: #{stock_lstm_forward.1} parent=1 // pred_region
      _
    $region25: #{stock_lstm_forward.1} parent=1 // pred_fallthru
      _
    // Predicated region
    $region26: #{stock_lstm_forward.1} parent=1 // pred_check
      _
    $region27: #{stock_lstm_forward.1} parent=1 // pred_check_branch
      %31 = sbr.rel (0) target = $region29
    $region28: #{stock_lstm_forward.1} parent=1 // pred_region
      _
    $region29: #{stock_lstm_forward.1} parent=1 // pred_fallthru
      _
    // Predicated region
    $region30: #{stock_lstm_forward.1} parent=1 // pred_check
      _
    $region31: #{stock_lstm_forward.1} parent=1 // pred_check_branch
      %33 = sbr.rel (0) target = $region33
    $region32: #{stock_lstm_forward.1} parent=1 // pred_region
      _
    $region33: #{stock_lstm_forward.1} parent=1 // pred_fallthru
      _
    // Predicated region
    $region34: #{stock_lstm_forward.1} parent=1 // pred_check
      _
    $region35: #{stock_lstm_forward.1} parent=1 // pred_check_branch
      %35 = sbr.rel (0) target = $region37
    $region36: #{stock_lstm_forward.1} parent=1 // pred_region
      %s37 = ssub.s32 512, 512
      %38 = vsyncadd [#allocation3], %s37
      %s39 = sshll.u32 [#allocation2], 4
      %s40 = int_to_ptr.vmem [resolvable:$true] %s39
      %45 = dma.hbm_to_vmem [thread:$0]  %s8, 512, %s40, [#allocation3], 128, 128, 8
    $region37: #{stock_lstm_forward.1} parent=1 // pred_fallthru
      _
    // Predicated region
    $region38: #{stock_lstm_forward.1} parent=1 // pred_check
      _
    $region39: #{stock_lstm_forward.1} parent=1 // pred_check_branch
      %47 = sbr.rel (0) target = $region41
    $region40: #{stock_lstm_forward.1} parent=1 // pred_region
      _
    $region41: #{stock_lstm_forward.1} parent=1 // pred_fallthru
      _
    // Predicated region
    $region42: #{stock_lstm_forward.1} parent=1 // pred_check
      _
    $region43: #{stock_lstm_forward.1} parent=1 // pred_check_branch
      %49 = sbr.rel (0) target = $region45
    $region44: #{stock_lstm_forward.1} parent=1 // pred_region
      _
    $region45: #{stock_lstm_forward.1} parent=1 // pred_fallthru
      _
    // Predicated region
    $region46: #{stock_lstm_forward.1} parent=1 // pred_check
      _
    $region47: #{stock_lstm_forward.1} parent=1 // pred_check_branch
      %51 = sbr.rel (0) target = $region49
    $region48: #{stock_lstm_forward.1} parent=1 // pred_region
      _
    $region49: #{stock_lstm_forward.1} parent=1 // pred_fallthru
      _
    // Predicated region
    $region50: #{stock_lstm_forward.1} parent=1 // pred_check
      _
    $region51: #{stock_lstm_forward.1} parent=1 // pred_check_branch
      %53 = sbr.rel (0) target = $region53
    $region52: #{stock_lstm_forward.1} parent=1 // pred_region
      %54 = dma.done [#allocation3], 512
    $region53: #{stock_lstm_forward.1} parent=1 // pred_fallthru
      _
    %v55 = vld [vmem:[%s0] sm:$0xff]
    %v56 = vld [vmem:[%s0 + $0x8] sm:$0xff]
    %v57 = vld [vmem:[%s0 + $0x10] sm:$0xff]
    %v58 = vld [vmem:[%s0 + $0x18] sm:$0xff]
    %v59 = vld [vmem:[%s0 + $0x20] sm:$0xff]
    %v60 = vld [vmem:[%s0 + $0x28] sm:$0xff]
    %v61 = vld [vmem:[%s0 + $0x30] sm:$0xff]
    %v62 = vld [vmem:[%s0 + $0x38] sm:$0xff]
    %v63 = vld [vmem:[%s1] sm:$0xf]
    %v64 = vld [vmem:[%s3] sm:$0x1]
    %v66 = vlaneseq
    %v67 = vshrl.u32 %v66, 7
    %v68 = vsub.s32 0, %v67
    %v69 = vrot.slane %v64, %v68
    %vm71 = vcmask 31744
    %v73 = vsel %vm71, %v55, 0
    %v76 = vsel %vm71, %v56, 0
    %v79 = vsel %vm71, %v57, 0
    %v82 = vsel %vm71, %v58, 0
    %v85 = vsel %vm71, %v59, 0
    %v88 = vsel %vm71, %v60, 0
    %v91 = vsel %vm71, %v61, 0
    %v94 = vsel %vm71, %v62, 0
    %vm96 = vcmask 1043456
    %v98 = vsel %vm96, %v63, 0
    %100 = vmatprep.subr.mxu0 0.0
    %101 = vmatpush1.msra.mxu0 %v98
    %102 = vmatprep.subr.mxu0 0.0
    %103 = vmatpush1.msra.mxu0 0.0
    %104 = vmatprep.subr.mxu0 0.0
    %105 = vmatpush1.msra.mxu0 0.0
    %106 = vmatprep.subr.mxu0 0.0
    %107 = vmatpush1.msra.mxu0 0.0
    %108 = vmatprep.subr.mxu0 0.0
    %109 = vmatpush1.msra.mxu0 0.0
    %110 = vmatprep.subr.mxu0 0.0
    %111 = vmatpush1.msra.mxu0 0.0
    %112 = vmatprep.subr.mxu0 0.0
    %113 = vmatpush1.msra.mxu0 0.0
    %114 = vmatprep.subr.mxu0 0.0
    %115 = vmatpush1.msra.mxu0 0.0
    %116 = vmatprep.subr.mxu0 0.0
    %117 = vmatpush1.msra.mxu0 0.0
    %118 = vmatprep.subr.mxu0 0.0
    %119 = vmatpush1.msra.mxu0 0.0
    %120 = vmatprep.subr.mxu0 0.0
    %121 = vmatpush1.msra.mxu0 0.0
    %122 = vmatprep.subr.mxu0 0.0
    %123 = vmatpush1.msra.mxu0 0.0
    %124 = vmatprep.subr.mxu0 0.0
    %125 = vmatpush1.msra.mxu0 0.0
    %126 = vmatprep.subr.mxu0 0.0
    %127 = vmatpush1.msra.mxu0 0.0
    %128 = vmatprep.subr.mxu0 0.0
    %129 = vmatpush1.msra.mxu0 0.0
    %130 = vmatprep.subr.mxu0 0.0
    %131 = vmatpush1.msra.mxu0 0.0
    %132 = vmatprep.subr.mxu0 0.0
    %133 = vmatpush1.msra.mxu0 0.0
    %134 = vmatprep.subr.mxu0 0.0
    %135 = vmatpush1.msra.mxu0 0.0
    %136 = vmatprep.subr.mxu0 0.0
    %137 = vmatpush1.msra.mxu0 0.0
    %138 = vmatprep.subr.mxu0 0.0
    %139 = vmatpush1.msra.mxu0 0.0
    %140 = vmatprep.subr.mxu0 0.0
    %141 = vmatpush1.msra.mxu0 0.0
    %142 = vmatprep.subr.mxu0 0.0
    %143 = vmatpush1.msra.mxu0 0.0
    %144 = vmatprep.subr.mxu0 0.0
    %145 = vmatpush1.msra.mxu0 0.0
    %146 = vmatprep.subr.mxu0 0.0
    %147 = vmatpush1.msra.mxu0 0.0
    %148 = vmatprep.subr.mxu0 0.0
    %149 = vmatpush1.msra.mxu0 0.0
    %150 = vmatprep.subr.mxu0 0.0
    %151 = vmatpush1.msra.mxu0 0.0
    %152 = vmatprep.subr.mxu0 0.0
    %153 = vmatpush1.msra.mxu0 0.0
    %154 = vmatprep.subr.mxu0 0.0
    %155 = vmatpush1.msra.mxu0 0.0
    %156 = vmatprep.subr.mxu0 0.0
    %157 = vmatpush1.msra.mxu0 0.0
    %158 = vmatprep.subr.mxu0 0.0
    %159 = vmatpush1.msra.mxu0 0.0
    %160 = vmatprep.subr.mxu0 0.0
    %161 = vmatpush1.msra.mxu0 0.0
    %162 = vmatprep.subr.mxu0 0.0
    %163 = vmatpush1.msra.mxu0 0.0
    %164 = vmatprep.mubr.f32.mxu0 0.0
    %165 = vmatmul.mubr.f32.gmra.mrb[0].mxu0 %v73
    %v166 = vpop.f32.mrb[0].mxu0
    %v167 = vadd.f32 %v69, %v166
    %v168 = vpop.f32.mrb[0].mxu0
    %169 = vmatprep.mubr.f32.mxu0 0.0
    %170 = vmatmul.mubr.f32.gmra.mrb[0].mxu0 %v76
    %v171 = vpop.f32.mrb[0].mxu0
    %v172 = vadd.f32 %v69, %v171
    %v173 = vpop.f32.mrb[0].mxu0
    %174 = vmatprep.mubr.f32.mxu0 0.0
    %175 = vmatmul.mubr.f32.gmra.mrb[0].mxu0 %v79
    %v176 = vpop.f32.mrb[0].mxu0
    %v177 = vadd.f32 %v69, %v176
    %v178 = vpop.f32.mrb[0].mxu0
    %179 = vmatprep.mubr.f32.mxu0 0.0
    %180 = vmatmul.mubr.f32.gmra.mrb[0].mxu0 %v82
    %v181 = vpop.f32.mrb[0].mxu0
    %v182 = vadd.f32 %v69, %v181
    %v183 = vpop.f32.mrb[0].mxu0
    %184 = vmatprep.mubr.f32.mxu0 0.0
    %185 = vmatmul.mubr.f32.gmra.mrb[0].mxu0 %v85
    %v186 = vpop.f32.mrb[0].mxu0
    %v187 = vadd.f32 %v69, %v186
    %v188 = vpop.f32.mrb[0].mxu0
    %189 = vmatprep.mubr.f32.mxu0 0.0
    %190 = vmatmul.mubr.f32.gmra.mrb[0].mxu0 %v88
    %v191 = vpop.f32.mrb[0].mxu0
    %v192 = vadd.f32 %v69, %v191
    %v193 = vpop.f32.mrb[0].mxu0
    %194 = vmatprep.mubr.f32.mxu0 0.0
    %195 = vmatmul.mubr.f32.gmra.mrb[0].mxu0 %v91
    %v196 = vpop.f32.mrb[0].mxu0
    %v197 = vadd.f32 %v69, %v196
    %v198 = vpop.f32.mrb[0].mxu0
    %199 = vmatprep.mubr.f32.mxu0 0.0
    %200 = vmatmul.mubr.f32.gmra.mrb[0].mxu0 %v94
    %v201 = vpop.f32.mrb[0].mxu0
    %v202 = vadd.f32 %v69, %v201
    %v203 = vpop.f32.mrb[0].mxu0
    %204 = vdwg.mxu0
    %v205 = vld [vmem:[%s2] sm:$0xff]
    %v206 = vld [vmem:[%s2 + $0x8] sm:$0xff]
    %v207 = vld [vmem:[%s2 + $0x10] sm:$0xff]
    %v208 = vld [vmem:[%s2 + $0x18] sm:$0xff]
    %v209 = vld [vmem:[%s5] sm:$0xff]
    %v210 = vld [vmem:[%s5 + $0x8] sm:$0xff]
    %v211 = vld [vmem:[%s5 + $0x10] sm:$0xff]
    %v212 = vld [vmem:[%s5 + $0x18] sm:$0xff]
    %v213 = vld [vmem:[#allocation2] sm:$0xff]
    %v214 = vld [vmem:[#allocation2 + $0x8] sm:$0xff]
    %v215 = vld [vmem:[#allocation2 + $0x10] sm:$0xff]
    %v216 = vld [vmem:[#allocation2 + $0x18] sm:$0xff]
    %v217 = vld [vmem:[%s4] sm:$0xff]
    %v218 = vld [vmem:[%s4 + $0x8] sm:$0xff]
    %v219 = vld [vmem:[%s4 + $0x10] sm:$0xff]
    %v220 = vld [vmem:[%s4 + $0x18] sm:$0xff]
    %v221 = vld [vmem:[%s7] sm:$0xff]
    %v222 = vld [vmem:[%s7 + $0x8] sm:$0xff]
    %v223 = vld [vmem:[%s7 + $0x10] sm:$0xff]
    %v224 = vld [vmem:[%s7 + $0x18] sm:$0xff]
    %v225 = vld [vmem:[%s6] sm:$0x1]
    %v226 = vld [vmem:[%s9] sm:$0x1]
    %vm227 = vcmask 261120
    %v229 = vsel %vm227, 0.0, 0
    %231 = vmatprep.subr.mxu0 0.0
    %232 = vmatpush1.msra.mxu0 %v205
    %233 = vmatprep.subr.mxu0 0.0
    %234 = vmatpush1.msra.mxu0 %v206
    %235 = vmatprep.subr.mxu0 0.0
    %236 = vmatpush1.msra.mxu0 %v207
    %237 = vmatprep.subr.mxu0 0.0
    %238 = vmatpush1.msra.mxu0 %v208
    %239 = vmatprep.subr.mxu0 0.0
    %240 = vmatpush1.msra.mxu0 0.0
    %241 = vmatprep.subr.mxu0 0.0
    %242 = vmatpush1.msra.mxu0 0.0
    %243 = vmatprep.subr.mxu0 0.0
    %244 = vmatpush1.msra.mxu0 0.0
    %245 = vmatprep.subr.mxu0 0.0
    %246 = vmatpush1.msra.mxu0 0.0
    %247 = vmatprep.subr.mxu0 0.0
    %248 = vmatpush1.msra.mxu0 0.0
    %249 = vmatprep.subr.mxu0 0.0
    %250 = vmatpush1.msra.mxu0 0.0
    %251 = vmatprep.subr.mxu0 0.0
    %252 = vmatpush1.msra.mxu0 0.0
    %253 = vmatprep.subr.mxu0 0.0
    %254 = vmatpush1.msra.mxu0 0.0
    %255 = vmatprep.subr.mxu0 0.0
    %256 = vmatpush1.msra.mxu0 0.0
    %257 = vmatprep.subr.mxu0 0.0
    %258 = vmatpush1.msra.mxu0 0.0
    %259 = vmatprep.subr.mxu0 0.0
    %260 = vmatpush1.msra.mxu0 0.0
    %261 = vmatprep.subr.mxu0 0.0
    %262 = vmatpush1.msra.mxu0 0.0
    %263 = vmatprep.subr.mxu0 0.0
    %264 = vmatpush1.msra.mxu0 0.0
    %265 = vmatprep.subr.mxu0 0.0
    %266 = vmatpush1.msra.mxu0 0.0
    %267 = vmatprep.subr.mxu0 0.0
    %268 = vmatpush1.msra.mxu0 0.0
    %269 = vmatprep.subr.mxu0 0.0
    %270 = vmatpush1.msra.mxu0 0.0
    %271 = vmatprep.subr.mxu0 0.0
    %272 = vmatpush1.msra.mxu0 0.0
    %273 = vmatprep.subr.mxu0 0.0
    %274 = vmatpush1.msra.mxu0 0.0
    %275 = vmatprep.subr.mxu0 0.0
    %276 = vmatpush1.msra.mxu0 0.0
    %277 = vmatprep.subr.mxu0 0.0
    %278 = vmatpush1.msra.mxu0 0.0
    %279 = vmatprep.subr.mxu0 0.0
    %280 = vmatpush1.msra.mxu0 0.0
    %281 = vmatprep.subr.mxu0 0.0
    %282 = vmatpush1.msra.mxu0 0.0
    %283 = vmatprep.subr.mxu0 0.0
    %284 = vmatpush1.msra.mxu0 0.0
    %285 = vmatprep.subr.mxu0 0.0
    %286 = vmatpush1.msra.mxu0 0.0
    %287 = vmatprep.subr.mxu0 0.0
    %288 = vmatpush1.msra.mxu0 0.0
    %289 = vmatprep.subr.mxu0 0.0
    %290 = vmatpush1.msra.mxu0 0.0
    %291 = vmatprep.subr.mxu0 0.0
    %292 = vmatpush1.msra.mxu0 0.0
    %293 = vmatprep.subr.mxu0 0.0
    %294 = vmatpush1.msra.mxu0 0.0
    %295 = vmatprep.mubr.f32.mxu0 0.0
    %296 = vmatmul.mubr.f32.gmra.mrb[0].mxu0 %v229
    %v297 = vpop.f32.mrb[0].mxu0
    %v298 = vadd.f32 0.0, %v297
    %v299 = vpop.f32.mrb[0].mxu0
    %300 = vdwg.mxu0
    %v301 = vadd.f32 %v167, %v298
    %v302 = vxor.u32 %v301, 2147483648
    %v303 = vmul.f32 %v302, 1.442695
    %v304 = vpow.pop %v303
    %v305 = vadd.f32 %v304, 1.0
    %v306 = vrcp.pop %v305
    %v307 = vmul.f32 1.0, %v306
    %v308 = vtanh.pop %v301
    %v309 = vmul.f32 %v307, 0.0
    %311 = vrot.lane.b32.xlu0 %v308, 32
    %v312 = vpop.permute.xlu0 %311
    %v314 = vmul.f32 %v307, %v312
    %316 = vrot.lane.b32.xlu0 %v314, 32
    %v317 = vpop.permute.xlu0 %316
    %v319 = vadd.f32 %v309, %v317
    %v320 = vtanh.pop %v319
    %322 = vrot.lane.b32.xlu0 %v320, 32
    %v323 = vpop.permute.xlu0 %322
    %v325 = vmul.f32 %v307, %v323
    %327 = vrot.lane.b32.xlu0 %v325, 64
    %v328 = vpop.permute.xlu0 %327
    %v329 = vsel %vm227, %v328, 0
    %331 = vmatprep.subr.mxu0 0.0
    %332 = vmatpush1.msra.mxu0 %v205
    %333 = vmatprep.subr.mxu0 0.0
    %334 = vmatpush1.msra.mxu0 %v206
    %335 = vmatprep.subr.mxu0 0.0
    %336 = vmatpush1.msra.mxu0 %v207
    %337 = vmatprep.subr.mxu0 0.0
    %338 = vmatpush1.msra.mxu0 %v208
    %339 = vmatprep.subr.mxu0 0.0
    %340 = vmatpush1.msra.mxu0 0.0
    %341 = vmatprep.subr.mxu0 0.0
    %342 = vmatpush1.msra.mxu0 0.0
    %343 = vmatprep.subr.mxu0 0.0
    %344 = vmatpush1.msra.mxu0 0.0
    %345 = vmatprep.subr.mxu0 0.0
    %346 = vmatpush1.msra.mxu0 0.0
    %347 = vmatprep.subr.mxu0 0.0
    %348 = vmatpush1.msra.mxu0 0.0
    %349 = vmatprep.subr.mxu0 0.0
    %350 = vmatpush1.msra.mxu0 0.0
    %351 = vmatprep.subr.mxu0 0.0
    %352 = vmatpush1.msra.mxu0 0.0
    %353 = vmatprep.subr.mxu0 0.0
    %354 = vmatpush1.msra.mxu0 0.0
    %355 = vmatprep.subr.mxu0 0.0
    %356 = vmatpush1.msra.mxu0 0.0
    %357 = vmatprep.subr.mxu0 0.0
    %358 = vmatpush1.msra.mxu0 0.0
    %359 = vmatprep.subr.mxu0 0.0
    %360 = vmatpush1.msra.mxu0 0.0
    %361 = vmatprep.subr.mxu0 0.0
    %362 = vmatpush1.msra.mxu0 0.0
    %363 = vmatprep.subr.mxu0 0.0
    %364 = vmatpush1.msra.mxu0 0.0
    %365 = vmatprep.subr.mxu0 0.0
    %366 = vmatpush1.msra.mxu0 0.0
    %367 = vmatprep.subr.mxu0 0.0
    %368 = vmatpush1.msra.mxu0 0.0
    %369 = vmatprep.subr.mxu0 0.0
    %370 = vmatpush1.msra.mxu0 0.0
    %371 = vmatprep.subr.mxu0 0.0
    %372 = vmatpush1.msra.mxu0 0.0
    %373 = vmatprep.subr.mxu0 0.0
    %374 = vmatpush1.msra.mxu0 0.0
    %375 = vmatprep.subr.mxu0 0.0
    %376 = vmatpush1.msra.mxu0 0.0
    %377 = vmatprep.subr.mxu0 0.0
    %378 = vmatpush1.msra.mxu0 0.0
    %379 = vmatprep.subr.mxu0 0.0
    %380 = vmatpush1.msra.mxu0 0.0
    %381 = vmatprep.subr.mxu0 0.0
    %382 = vmatpush1.msra.mxu0 0.0
    %383 = vmatprep.subr.mxu0 0.0
    %384 = vmatpush1.msra.mxu0 0.0
    %385 = vmatprep.subr.mxu0 0.0
    %386 = vmatpush1.msra.mxu0 0.0
    %387 = vmatprep.subr.mxu0 0.0
    %388 = vmatpush1.msra.mxu0 0.0
    %389 = vmatprep.subr.mxu0 0.0
    %390 = vmatpush1.msra.mxu0 0.0
    %391 = vmatprep.subr.mxu0 0.0
    %392 = vmatpush1.msra.mxu0 0.0
    %393 = vmatprep.subr.mxu0 0.0
    %394 = vmatpush1.msra.mxu0 0.0
    %395 = vmatprep.mubr.f32.mxu0 0.0
    %396 = vmatmul.mubr.f32.gmra.mrb[0].mxu0 %v329
    %v397 = vpop.f32.mrb[0].mxu0
    %v398 = vadd.f32 0.0, %v397
    %v399 = vpop.f32.mrb[0].mxu0
    %400 = vdwg.mxu0
    %v401 = vadd.f32 %v172, %v398
    %v402 = vxor.u32 %v401, 2147483648
    %v403 = vmul.f32 %v402, 1.442695
    %v404 = vpow.pop %v403
    %v405 = vadd.f32 %v404, 1.0
    %v406 = vrcp.pop %v405
    %v407 = vmul.f32 1.0, %v406
    %v408 = vtanh.pop %v401
    %v409 = vmul.f32 %v407, %v319
    %411 = vrot.lane.b32.xlu0 %v408, 32
    %v412 = vpop.permute.xlu0 %411
    %v414 = vmul.f32 %v407, %v412
    %416 = vrot.lane.b32.xlu0 %v414, 32
    %v417 = vpop.permute.xlu0 %416
    %v419 = vadd.f32 %v409, %v417
    %v420 = vtanh.pop %v419
    %422 = vrot.lane.b32.xlu0 %v420, 32
    %v423 = vpop.permute.xlu0 %422
    %v425 = vmul.f32 %v407, %v423
    %426 = vmatprep.subr.mxu0 0.0
    %427 = vmatpush1.msra.mxu0 %v209
    %428 = vmatprep.subr.mxu0 0.0
    %429 = vmatpush1.msra.mxu0 %v210
    %430 = vmatprep.subr.mxu0 0.0
    %431 = vmatpush1.msra.mxu0 %v211
    %432 = vmatprep.subr.mxu0 0.0
    %433 = vmatpush1.msra.mxu0 %v212
    %434 = vmatprep.subr.mxu0 0.0
    %435 = vmatpush1.msra.mxu0 0.0
    %436 = vmatprep.subr.mxu0 0.0
    %437 = vmatpush1.msra.mxu0 0.0
    %438 = vmatprep.subr.mxu0 0.0
    %439 = vmatpush1.msra.mxu0 0.0
    %440 = vmatprep.subr.mxu0 0.0
    %441 = vmatpush1.msra.mxu0 0.0
    %442 = vmatprep.subr.mxu0 0.0
    %443 = vmatpush1.msra.mxu0 0.0
    %444 = vmatprep.subr.mxu0 0.0
    %445 = vmatpush1.msra.mxu0 0.0
    %446 = vmatprep.subr.mxu0 0.0
    %447 = vmatpush1.msra.mxu0 0.0
    %448 = vmatprep.subr.mxu0 0.0
    %449 = vmatpush1.msra.mxu0 0.0
    %450 = vmatprep.subr.mxu0 0.0
    %451 = vmatpush1.msra.mxu0 0.0
    %452 = vmatprep.subr.mxu0 0.0
    %453 = vmatpush1.msra.mxu0 0.0
    %454 = vmatprep.subr.mxu0 0.0
    %455 = vmatpush1.msra.mxu0 0.0
    %456 = vmatprep.subr.mxu0 0.0
    %457 = vmatpush1.msra.mxu0 0.0
    %458 = vmatprep.subr.mxu0 0.0
    %459 = vmatpush1.msra.mxu0 0.0
    %460 = vmatprep.subr.mxu0 0.0
    %461 = vmatpush1.msra.mxu0 0.0
    %462 = vmatprep.subr.mxu0 0.0
    %463 = vmatpush1.msra.mxu0 0.0
    %464 = vmatprep.subr.mxu0 0.0
    %465 = vmatpush1.msra.mxu0 0.0
    %466 = vmatprep.subr.mxu0 0.0
    %467 = vmatpush1.msra.mxu0 0.0
    %468 = vmatprep.subr.mxu0 0.0
    %469 = vmatpush1.msra.mxu0 0.0
    %470 = vmatprep.subr.mxu0 0.0
    %471 = vmatpush1.msra.mxu0 0.0
    %472 = vmatprep.subr.mxu0 0.0
    %473 = vmatpush1.msra.mxu0 0.0
    %474 = vmatprep.subr.mxu0 0.0
    %475 = vmatpush1.msra.mxu0 0.0
    %476 = vmatprep.subr.mxu0 0.0
    %477 = vmatpush1.msra.mxu0 0.0
    %478 = vmatprep.subr.mxu0 0.0
    %479 = vmatpush1.msra.mxu0 0.0
    %480 = vmatprep.subr.mxu0 0.0
    %481 = vmatpush1.msra.mxu0 0.0
    %482 = vmatprep.subr.mxu0 0.0
    %483 = vmatpush1.msra.mxu0 0.0
    %484 = vmatprep.subr.mxu0 0.0
    %485 = vmatpush1.msra.mxu0 0.0
    %486 = vmatprep.subr.mxu0 0.0
    %487 = vmatpush1.msra.mxu0 0.0
    %488 = vmatprep.subr.mxu0 0.0
    %489 = vmatpush1.msra.mxu0 0.0
    %490 = vmatprep.mubr.f32.mxu0 0.0
    %491 = vmatmul.mubr.f32.gmra.mrb[0].mxu0 %v229
    %v492 = vpop.f32.mrb[0].mxu0
    %v493 = vadd.f32 0.0, %v492
    %v494 = vpop.f32.mrb[0].mxu0
    %495 = vdwg.mxu0
    %496 = vmatprep.subr.mxu0 0.0
    %497 = vmatpush1.msra.mxu0 %v217
    %498 = vmatprep.subr.mxu0 0.0
    %499 = vmatpush1.msra.mxu0 %v218
    %500 = vmatprep.subr.mxu0 0.0
    %501 = vmatpush1.msra.mxu0 %v219
    %502 = vmatprep.subr.mxu0 0.0
    %503 = vmatpush1.msra.mxu0 %v220
    %504 = vmatprep.subr.mxu0 0.0
    %505 = vmatpush1.msra.mxu0 0.0
    %506 = vmatprep.subr.mxu0 0.0
    %507 = vmatpush1.msra.mxu0 0.0
    %508 = vmatprep.subr.mxu0 0.0
    %509 = vmatpush1.msra.mxu0 0.0
    %510 = vmatprep.subr.mxu0 0.0
    %511 = vmatpush1.msra.mxu0 0.0
    %512 = vmatprep.subr.mxu0 0.0
    %513 = vmatpush1.msra.mxu0 0.0
    %514 = vmatprep.subr.mxu0 0.0
    %515 = vmatpush1.msra.mxu0 0.0
    %516 = vmatprep.subr.mxu0 0.0
    %517 = vmatpush1.msra.mxu0 0.0
    %518 = vmatprep.subr.mxu0 0.0
    %519 = vmatpush1.msra.mxu0 0.0
    %520 = vmatprep.subr.mxu0 0.0
    %521 = vmatpush1.msra.mxu0 0.0
    %522 = vmatprep.subr.mxu0 0.0
    %523 = vmatpush1.msra.mxu0 0.0
    %524 = vmatprep.subr.mxu0 0.0
    %525 = vmatpush1.msra.mxu0 0.0
    %526 = vmatprep.subr.mxu0 0.0
    %527 = vmatpush1.msra.mxu0 0.0
    %528 = vmatprep.subr.mxu0 0.0
    %529 = vmatpush1.msra.mxu0 0.0
    %530 = vmatprep.subr.mxu0 0.0
    %531 = vmatpush1.msra.mxu0 0.0
    %532 = vmatprep.subr.mxu0 0.0
    %533 = vmatpush1.msra.mxu0 0.0
    %534 = vmatprep.subr.mxu0 0.0
    %535 = vmatpush1.msra.mxu0 0.0
    %536 = vmatprep.subr.mxu0 0.0
    %537 = vmatpush1.msra.mxu0 0.0
    %538 = vmatprep.subr.mxu0 0.0
    %539 = vmatpush1.msra.mxu0 0.0
    %540 = vmatprep.subr.mxu0 0.0
    %541 = vmatpush1.msra.mxu0 0.0
    %542 = vmatprep.subr.mxu0 0.0
    %543 = vmatpush1.msra.mxu0 0.0
    %544 = vmatprep.subr.mxu0 0.0
    %545 = vmatpush1.msra.mxu0 0.0
    %546 = vmatprep.subr.mxu0 0.0
    %547 = vmatpush1.msra.mxu0 0.0
    %548 = vmatprep.subr.mxu0 0.0
    %549 = vmatpush1.msra.mxu0 0.0
    %550 = vmatprep.subr.mxu0 0.0
    %551 = vmatpush1.msra.mxu0 0.0
    %552 = vmatprep.subr.mxu0 0.0
    %553 = vmatpush1.msra.mxu0 0.0
    %554 = vmatprep.subr.mxu0 0.0
    %555 = vmatpush1.msra.mxu0 0.0
    %556 = vmatprep.subr.mxu0 0.0
    %557 = vmatpush1.msra.mxu0 0.0
    %558 = vmatprep.subr.mxu0 0.0
    %559 = vmatpush1.msra.mxu0 0.0
    %560 = vmatprep.mubr.f32.mxu0 0.0
    %561 = vmatmul.mubr.f32.gmra.mrb[0].mxu0 %v329
    %v562 = vpop.f32.mrb[0].mxu0
    %v563 = vadd.f32 %v493, %v562
    %v564 = vpop.f32.mrb[0].mxu0
    %565 = vdwg.mxu0
    %v567 = vlaneseq
    %v568 = vshrl.u32 %v567, 7
    %v569 = vsub.s32 0, %v568
    %v570 = vrot.slane %v225, %v569
    %v572 = vadd.f32 %v563, %v570
    %v573 = vxor.u32 %v572, 2147483648
    %v574 = vmul.f32 %v573, 1.442695
    %v575 = vpow.pop %v574
    %v576 = vadd.f32 %v575, 1.0
    %v577 = vrcp.pop %v576
    %v578 = vmul.f32 1.0, %v577
    %v579 = vtanh.pop %v572
    %v580 = vmul.f32 %v578, 0.0
    %582 = vrot.lane.b32.xlu0 %v579, 32
    %v583 = vpop.permute.xlu0 %582
    %v585 = vmul.f32 %v578, %v583
    %587 = vrot.lane.b32.xlu0 %v585, 32
    %v588 = vpop.permute.xlu0 %587
    %v590 = vadd.f32 %v580, %v588
    %v591 = vtanh.pop %v590
    %593 = vrot.lane.b32.xlu0 %v591, 32
    %v594 = vpop.permute.xlu0 %593
    %v596 = vmul.f32 %v578, %v594
    %598 = vrot.lane.b32.xlu0 %v425, 64
    %v599 = vpop.permute.xlu0 %598
    %v600 = vsel %vm227, %v599, 0
    %602 = vmatprep.subr.mxu0 0.0
    %603 = vmatpush1.msra.mxu0 %v205
    %604 = vmatprep.subr.mxu0 0.0
    %605 = vmatpush1.msra.mxu0 %v206
    %606 = vmatprep.subr.mxu0 0.0
    %607 = vmatpush1.msra.mxu0 %v207
    %608 = vmatprep.subr.mxu0 0.0
    %609 = vmatpush1.msra.mxu0 %v208
    %610 = vmatprep.subr.mxu0 0.0
    %611 = vmatpush1.msra.mxu0 0.0
    %612 = vmatprep.subr.mxu0 0.0
    %613 = vmatpush1.msra.mxu0 0.0
    %614 = vmatprep.subr.mxu0 0.0
    %615 = vmatpush1.msra.mxu0 0.0
    %616 = vmatprep.subr.mxu0 0.0
    %617 = vmatpush1.msra.mxu0 0.0
    %618 = vmatprep.subr.mxu0 0.0
    %619 = vmatpush1.msra.mxu0 0.0
    %620 = vmatprep.subr.mxu0 0.0
    %621 = vmatpush1.msra.mxu0 0.0
    %622 = vmatprep.subr.mxu0 0.0
    %623 = vmatpush1.msra.mxu0 0.0
    %624 = vmatprep.subr.mxu0 0.0
    %625 = vmatpush1.msra.mxu0 0.0
    %626 = vmatprep.subr.mxu0 0.0
    %627 = vmatpush1.msra.mxu0 0.0
    %628 = vmatprep.subr.mxu0 0.0
    %629 = vmatpush1.msra.mxu0 0.0
    %630 = vmatprep.subr.mxu0 0.0
    %631 = vmatpush1.msra.mxu0 0.0
    %632 = vmatprep.subr.mxu0 0.0
    %633 = vmatpush1.msra.mxu0 0.0
    %634 = vmatprep.subr.mxu0 0.0
    %635 = vmatpush1.msra.mxu0 0.0
    %636 = vmatprep.subr.mxu0 0.0
    %637 = vmatpush1.msra.mxu0 0.0
    %638 = vmatprep.subr.mxu0 0.0
    %639 = vmatpush1.msra.mxu0 0.0
    %640 = vmatprep.subr.mxu0 0.0
    %641 = vmatpush1.msra.mxu0 0.0
    %642 = vmatprep.subr.mxu0 0.0
    %643 = vmatpush1.msra.mxu0 0.0
    %644 = vmatprep.subr.mxu0 0.0
    %645 = vmatpush1.msra.mxu0 0.0
    %646 = vmatprep.subr.mxu0 0.0
    %647 = vmatpush1.msra.mxu0 0.0
    %648 = vmatprep.subr.mxu0 0.0
    %649 = vmatpush1.msra.mxu0 0.0
    %650 = vmatprep.subr.mxu0 0.0
    %651 = vmatpush1.msra.mxu0 0.0
    %652 = vmatprep.subr.mxu0 0.0
    %653 = vmatpush1.msra.mxu0 0.0
    %654 = vmatprep.subr.mxu0 0.0
    %655 = vmatpush1.msra.mxu0 0.0
    %656 = vmatprep.subr.mxu0 0.0
    %657 = vmatpush1.msra.mxu0 0.0
    %658 = vmatprep.subr.mxu0 0.0
    %659 = vmatpush1.msra.mxu0 0.0
    %660 = vmatprep.subr.mxu0 0.0
    %661 = vmatpush1.msra.mxu0 0.0
    %662 = vmatprep.subr.mxu0 0.0
    %663 = vmatpush1.msra.mxu0 0.0
    %664 = vmatprep.subr.mxu0 0.0
    %665 = vmatpush1.msra.mxu0 0.0
    %666 = vmatprep.mubr.f32.mxu0 0.0
    %667 = vmatmul.mubr.f32.gmra.mrb[0].mxu0 %v600
    %v668 = vpop.f32.mrb[0].mxu0
    %v669 = vadd.f32 0.0, %v668
    %v670 = vpop.f32.mrb[0].mxu0
    %671 = vdwg.mxu0
    %v672 = vadd.f32 %v177, %v669
    %v673 = vxor.u32 %v672, 2147483648
    %v674 = vmul.f32 %v673, 1.442695
    %v675 = vpow.pop %v674
    %v676 = vadd.f32 %v675, 1.0
    %v677 = vrcp.pop %v676
    %v678 = vmul.f32 1.0, %v677
    %v679 = vtanh.pop %v672
    %v680 = vmul.f32 %v678, %v419
    %682 = vrot.lane.b32.xlu0 %v679, 32
    %v683 = vpop.permute.xlu0 %682
    %v685 = vmul.f32 %v678, %v683
    %687 = vrot.lane.b32.xlu0 %v685, 32
    %v688 = vpop.permute.xlu0 %687
    %v690 = vadd.f32 %v680, %v688
    %v691 = vtanh.pop %v690
    %693 = vrot.lane.b32.xlu0 %v691, 32
    %v694 = vpop.permute.xlu0 %693
    %v696 = vmul.f32 %v678, %v694
    %698 = vrot.lane.b32.xlu0 %v596, 64
    %v699 = vpop.permute.xlu0 %698
    %v700 = vsel %vm227, %v699, 0
    %702 = vmatprep.subr.mxu0 0.0
    %703 = vmatpush1.msra.mxu0 %v209
    %704 = vmatprep.subr.mxu0 0.0
    %705 = vmatpush1.msra.mxu0 %v210
    %706 = vmatprep.subr.mxu0 0.0
    %707 = vmatpush1.msra.mxu0 %v211
    %708 = vmatprep.subr.mxu0 0.0
    %709 = vmatpush1.msra.mxu0 %v212
    %710 = vmatprep.subr.mxu0 0.0
    %711 = vmatpush1.msra.mxu0 0.0
    %712 = vmatprep.subr.mxu0 0.0
    %713 = vmatpush1.msra.mxu0 0.0
    %714 = vmatprep.subr.mxu0 0.0
    %715 = vmatpush1.msra.mxu0 0.0
    %716 = vmatprep.subr.mxu0 0.0
    %717 = vmatpush1.msra.mxu0 0.0
    %718 = vmatprep.subr.mxu0 0.0
    %719 = vmatpush1.msra.mxu0 0.0
    %720 = vmatprep.subr.mxu0 0.0
    %721 = vmatpush1.msra.mxu0 0.0
    %722 = vmatprep.subr.mxu0 0.0
    %723 = vmatpush1.msra.mxu0 0.0
    %724 = vmatprep.subr.mxu0 0.0
    %725 = vmatpush1.msra.mxu0 0.0
    %726 = vmatprep.subr.mxu0 0.0
    %727 = vmatpush1.msra.mxu0 0.0
    %728 = vmatprep.subr.mxu0 0.0
    %729 = vmatpush1.msra.mxu0 0.0
    %730 = vmatprep.subr.mxu0 0.0
    %731 = vmatpush1.msra.mxu0 0.0
    %732 = vmatprep.subr.mxu0 0.0
    %733 = vmatpush1.msra.mxu0 0.0
    %734 = vmatprep.subr.mxu0 0.0
    %735 = vmatpush1.msra.mxu0 0.0
    %736 = vmatprep.subr.mxu0 0.0
    %737 = vmatpush1.msra.mxu0 0.0
    %738 = vmatprep.subr.mxu0 0.0
    %739 = vmatpush1.msra.mxu0 0.0
    %740 = vmatprep.subr.mxu0 0.0
    %741 = vmatpush1.msra.mxu0 0.0
    %742 = vmatprep.subr.mxu0 0.0
    %743 = vmatpush1.msra.mxu0 0.0
    %744 = vmatprep.subr.mxu0 0.0
    %745 = vmatpush1.msra.mxu0 0.0
    %746 = vmatprep.subr.mxu0 0.0
    %747 = vmatpush1.msra.mxu0 0.0
    %748 = vmatprep.subr.mxu0 0.0
    %749 = vmatpush1.msra.mxu0 0.0
    %750 = vmatprep.subr.mxu0 0.0
    %751 = vmatpush1.msra.mxu0 0.0
    %752 = vmatprep.subr.mxu0 0.0
    %753 = vmatpush1.msra.mxu0 0.0
    %754 = vmatprep.subr.mxu0 0.0
    %755 = vmatpush1.msra.mxu0 0.0
    %756 = vmatprep.subr.mxu0 0.0
    %757 = vmatpush1.msra.mxu0 0.0
    %758 = vmatprep.subr.mxu0 0.0
    %759 = vmatpush1.msra.mxu0 0.0
    %760 = vmatprep.subr.mxu0 0.0
    %761 = vmatpush1.msra.mxu0 0.0
    %762 = vmatprep.subr.mxu0 0.0
    %763 = vmatpush1.msra.mxu0 0.0
    %764 = vmatprep.subr.mxu0 0.0
    %765 = vmatpush1.msra.mxu0 0.0
    %766 = vmatprep.mubr.f32.mxu0 0.0
    %767 = vmatmul.mubr.f32.gmra.mrb[0].mxu0 %v700
    %v768 = vpop.f32.mrb[0].mxu0
    %v769 = vadd.f32 0.0, %v768
    %v770 = vpop.f32.mrb[0].mxu0
    %771 = vdwg.mxu0
    %772 = vmatprep.subr.mxu0 0.0
    %773 = vmatpush1.msra.mxu0 %v217
    %774 = vmatprep.subr.mxu0 0.0
    %775 = vmatpush1.msra.mxu0 %v218
    %776 = vmatprep.subr.mxu0 0.0
    %777 = vmatpush1.msra.mxu0 %v219
    %778 = vmatprep.subr.mxu0 0.0
    %779 = vmatpush1.msra.mxu0 %v220
    %780 = vmatprep.subr.mxu0 0.0
    %781 = vmatpush1.msra.mxu0 0.0
    %782 = vmatprep.subr.mxu0 0.0
    %783 = vmatpush1.msra.mxu0 0.0
    %784 = vmatprep.subr.mxu0 0.0
    %785 = vmatpush1.msra.mxu0 0.0
    %786 = vmatprep.subr.mxu0 0.0
    %787 = vmatpush1.msra.mxu0 0.0
    %788 = vmatprep.subr.mxu0 0.0
    %789 = vmatpush1.msra.mxu0 0.0
    %790 = vmatprep.subr.mxu0 0.0
    %791 = vmatpush1.msra.mxu0 0.0
    %792 = vmatprep.subr.mxu0 0.0
    %793 = vmatpush1.msra.mxu0 0.0
    %794 = vmatprep.subr.mxu0 0.0
    %795 = vmatpush1.msra.mxu0 0.0
    %796 = vmatprep.subr.mxu0 0.0
    %797 = vmatpush1.msra.mxu0 0.0
    %798 = vmatprep.subr.mxu0 0.0
    %799 = vmatpush1.msra.mxu0 0.0
    %800 = vmatprep.subr.mxu0 0.0
    %801 = vmatpush1.msra.mxu0 0.0
    %802 = vmatprep.subr.mxu0 0.0
    %803 = vmatpush1.msra.mxu0 0.0
    %804 = vmatprep.subr.mxu0 0.0
    %805 = vmatpush1.msra.mxu0 0.0
    %806 = vmatprep.subr.mxu0 0.0
    %807 = vmatpush1.msra.mxu0 0.0
    %808 = vmatprep.subr.mxu0 0.0
    %809 = vmatpush1.msra.mxu0 0.0
    %810 = vmatprep.subr.mxu0 0.0
    %811 = vmatpush1.msra.mxu0 0.0
    %812 = vmatprep.subr.mxu0 0.0
    %813 = vmatpush1.msra.mxu0 0.0
    %814 = vmatprep.subr.mxu0 0.0
    %815 = vmatpush1.msra.mxu0 0.0
    %816 = vmatprep.subr.mxu0 0.0
    %817 = vmatpush1.msra.mxu0 0.0
    %818 = vmatprep.subr.mxu0 0.0
    %819 = vmatpush1.msra.mxu0 0.0
    %820 = vmatprep.subr.mxu0 0.0
    %821 = vmatpush1.msra.mxu0 0.0
    %822 = vmatprep.subr.mxu0 0.0
    %823 = vmatpush1.msra.mxu0 0.0
    %824 = vmatprep.subr.mxu0 0.0
    %825 = vmatpush1.msra.mxu0 0.0
    %826 = vmatprep.subr.mxu0 0.0
    %827 = vmatpush1.msra.mxu0 0.0
    %828 = vmatprep.subr.mxu0 0.0
    %829 = vmatpush1.msra.mxu0 0.0
    %830 = vmatprep.subr.mxu0 0.0
    %831 = vmatpush1.msra.mxu0 0.0
    %832 = vmatprep.subr.mxu0 0.0
    %833 = vmatpush1.msra.mxu0 0.0
    %834 = vmatprep.subr.mxu0 0.0
    %835 = vmatpush1.msra.mxu0 0.0
    %836 = vmatprep.mubr.f32.mxu0 0.0
    %837 = vmatmul.mubr.f32.gmra.mrb[0].mxu0 %v600
    %v838 = vpop.f32.mrb[0].mxu0
    %v839 = vadd.f32 %v769, %v838
    %v840 = vpop.f32.mrb[0].mxu0
    %841 = vdwg.mxu0
    %v842 = vadd.f32 %v839, %v570
    %v843 = vxor.u32 %v842, 2147483648
    %v844 = vmul.f32 %v843, 1.442695
    %v845 = vpow.pop %v844
    %v846 = vadd.f32 %v845, 1.0
    %v847 = vrcp.pop %v846
    %v848 = vmul.f32 1.0, %v847
    %v849 = vtanh.pop %v842
    %v850 = vmul.f32 %v848, %v590
    %852 = vrot.lane.b32.xlu0 %v849, 32
    %v853 = vpop.permute.xlu0 %852
    %v855 = vmul.f32 %v848, %v853
    %857 = vrot.lane.b32.xlu0 %v855, 32
    %v858 = vpop.permute.xlu0 %857
    %v860 = vadd.f32 %v850, %v858
    %v861 = vtanh.pop %v860
    %863 = vrot.lane.b32.xlu0 %v861, 32
    %v864 = vpop.permute.xlu0 %863
    %v866 = vmul.f32 %v848, %v864
    %867 = vmatprep.subr.mxu0 0.0
    %868 = vmatpush1.msra.mxu0 %v213
    %869 = vmatprep.subr.mxu0 0.0
    %870 = vmatpush1.msra.mxu0 %v214
    %871 = vmatprep.subr.mxu0 0.0
    %872 = vmatpush1.msra.mxu0 %v215
    %873 = vmatprep.subr.mxu0 0.0
    %874 = vmatpush1.msra.mxu0 %v216
    %875 = vmatprep.subr.mxu0 0.0
    %876 = vmatpush1.msra.mxu0 0.0
    %877 = vmatprep.subr.mxu0 0.0
    %878 = vmatpush1.msra.mxu0 0.0
    %879 = vmatprep.subr.mxu0 0.0
    %880 = vmatpush1.msra.mxu0 0.0
    %881 = vmatprep.subr.mxu0 0.0
    %882 = vmatpush1.msra.mxu0 0.0
    %883 = vmatprep.subr.mxu0 0.0
    %884 = vmatpush1.msra.mxu0 0.0
    %885 = vmatprep.subr.mxu0 0.0
    %886 = vmatpush1.msra.mxu0 0.0
    %887 = vmatprep.subr.mxu0 0.0
    %888 = vmatpush1.msra.mxu0 0.0
    %889 = vmatprep.subr.mxu0 0.0
    %890 = vmatpush1.msra.mxu0 0.0
    %891 = vmatprep.subr.mxu0 0.0
    %892 = vmatpush1.msra.mxu0 0.0
    %893 = vmatprep.subr.mxu0 0.0
    %894 = vmatpush1.msra.mxu0 0.0
    %895 = vmatprep.subr.mxu0 0.0
    %896 = vmatpush1.msra.mxu0 0.0
    %897 = vmatprep.subr.mxu0 0.0
    %898 = vmatpush1.msra.mxu0 0.0
    %899 = vmatprep.subr.mxu0 0.0
    %900 = vmatpush1.msra.mxu0 0.0
    %901 = vmatprep.subr.mxu0 0.0
    %902 = vmatpush1.msra.mxu0 0.0
    %903 = vmatprep.subr.mxu0 0.0
    %904 = vmatpush1.msra.mxu0 0.0
    %905 = vmatprep.subr.mxu0 0.0
    %906 = vmatpush1.msra.mxu0 0.0
    %907 = vmatprep.subr.mxu0 0.0
    %908 = vmatpush1.msra.mxu0 0.0
    %909 = vmatprep.subr.mxu0 0.0
    %910 = vmatpush1.msra.mxu0 0.0
    %911 = vmatprep.subr.mxu0 0.0
    %912 = vmatpush1.msra.mxu0 0.0
    %913 = vmatprep.subr.mxu0 0.0
    %914 = vmatpush1.msra.mxu0 0.0
    %915 = vmatprep.subr.mxu0 0.0
    %916 = vmatpush1.msra.mxu0 0.0
    %917 = vmatprep.subr.mxu0 0.0
    %918 = vmatpush1.msra.mxu0 0.0
    %919 = vmatprep.subr.mxu0 0.0
    %920 = vmatpush1.msra.mxu0 0.0
    %921 = vmatprep.subr.mxu0 0.0
    %922 = vmatpush1.msra.mxu0 0.0
    %923 = vmatprep.subr.mxu0 0.0
    %924 = vmatpush1.msra.mxu0 0.0
    %925 = vmatprep.subr.mxu0 0.0
    %926 = vmatpush1.msra.mxu0 0.0
    %927 = vmatprep.subr.mxu0 0.0
    %928 = vmatpush1.msra.mxu0 0.0
    %929 = vmatprep.subr.mxu0 0.0
    %930 = vmatpush1.msra.mxu0 0.0
    %931 = vmatprep.mubr.f32.mxu0 0.0
    %932 = vmatmul.mubr.f32.gmra.mrb[0].mxu0 %v229
    %v933 = vpop.f32.mrb[0].mxu0
    %v934 = vadd.f32 0.0, %v933
    %v935 = vpop.f32.mrb[0].mxu0
    %936 = vdwg.mxu0
    %937 = vmatprep.subr.mxu0 0.0
    %938 = vmatpush1.msra.mxu0 %v221
    %939 = vmatprep.subr.mxu0 0.0
    %940 = vmatpush1.msra.mxu0 %v222
    %941 = vmatprep.subr.mxu0 0.0
    %942 = vmatpush1.msra.mxu0 %v223
    %943 = vmatprep.subr.mxu0 0.0
    %944 = vmatpush1.msra.mxu0 %v224
    %945 = vmatprep.subr.mxu0 0.0
    %946 = vmatpush1.msra.mxu0 0.0
    %947 = vmatprep.subr.mxu0 0.0
    %948 = vmatpush1.msra.mxu0 0.0
    %949 = vmatprep.subr.mxu0 0.0
    %950 = vmatpush1.msra.mxu0 0.0
    %951 = vmatprep.subr.mxu0 0.0
    %952 = vmatpush1.msra.mxu0 0.0
    %953 = vmatprep.subr.mxu0 0.0
    %954 = vmatpush1.msra.mxu0 0.0
    %955 = vmatprep.subr.mxu0 0.0
    %956 = vmatpush1.msra.mxu0 0.0
    %957 = vmatprep.subr.mxu0 0.0
    %958 = vmatpush1.msra.mxu0 0.0
    %959 = vmatprep.subr.mxu0 0.0
    %960 = vmatpush1.msra.mxu0 0.0
    %961 = vmatprep.subr.mxu0 0.0
    %962 = vmatpush1.msra.mxu0 0.0
    %963 = vmatprep.subr.mxu0 0.0
    %964 = vmatpush1.msra.mxu0 0.0
    %965 = vmatprep.subr.mxu0 0.0
    %966 = vmatpush1.msra.mxu0 0.0
    %967 = vmatprep.subr.mxu0 0.0
    %968 = vmatpush1.msra.mxu0 0.0
    %969 = vmatprep.subr.mxu0 0.0
    %970 = vmatpush1.msra.mxu0 0.0
    %971 = vmatprep.subr.mxu0 0.0
    %972 = vmatpush1.msra.mxu0 0.0
    %973 = vmatprep.subr.mxu0 0.0
    %974 = vmatpush1.msra.mxu0 0.0
    %975 = vmatprep.subr.mxu0 0.0
    %976 = vmatpush1.msra.mxu0 0.0
    %977 = vmatprep.subr.mxu0 0.0
    %978 = vmatpush1.msra.mxu0 0.0
    %979 = vmatprep.subr.mxu0 0.0
    %980 = vmatpush1.msra.mxu0 0.0
    %981 = vmatprep.subr.mxu0 0.0
    %982 = vmatpush1.msra.mxu0 0.0
    %983 = vmatprep.subr.mxu0 0.0
    %984 = vmatpush1.msra.mxu0 0.0
    %985 = vmatprep.subr.mxu0 0.0
    %986 = vmatpush1.msra.mxu0 0.0
    %987 = vmatprep.subr.mxu0 0.0
    %988 = vmatpush1.msra.mxu0 0.0
    %989 = vmatprep.subr.mxu0 0.0
    %990 = vmatpush1.msra.mxu0 0.0
    %991 = vmatprep.subr.mxu0 0.0
    %992 = vmatpush1.msra.mxu0 0.0
    %993 = vmatprep.subr.mxu0 0.0
    %994 = vmatpush1.msra.mxu0 0.0
    %995 = vmatprep.subr.mxu0 0.0
    %996 = vmatpush1.msra.mxu0 0.0
    %997 = vmatprep.subr.mxu0 0.0
    %998 = vmatpush1.msra.mxu0 0.0
    %999 = vmatprep.subr.mxu0 0.0
    %1000 = vmatpush1.msra.mxu0 0.0
    %1001 = vmatprep.mubr.f32.mxu0 0.0
    %1002 = vmatmul.mubr.f32.gmra.mrb[0].mxu0 %v700
    %v1003 = vpop.f32.mrb[0].mxu0
    %v1004 = vadd.f32 %v934, %v1003
    %v1005 = vpop.f32.mrb[0].mxu0
    %1006 = vdwg.mxu0
    %v1008 = vlaneseq
    %v1009 = vshrl.u32 %v1008, 7
    %v1010 = vsub.s32 0, %v1009
    %v1011 = vrot.slane %v226, %v1010
    %v1013 = vadd.f32 %v1004, %v1011
    %v1014 = vxor.u32 %v1013, 2147483648
    %v1015 = vmul.f32 %v1014, 1.442695
    %v1016 = vpow.pop %v1015
    %v1017 = vadd.f32 %v1016, 1.0
    %v1018 = vrcp.pop %v1017
    %v1019 = vmul.f32 1.0, %v1018
    %v1020 = vtanh.pop %v1013
    %v1021 = vmul.f32 %v1019, 0.0
    %1023 = vrot.lane.b32.xlu0 %v1020, 32
    %v1024 = vpop.permute.xlu0 %1023
    %v1026 = vmul.f32 %v1019, %v1024
    %1028 = vrot.lane.b32.xlu0 %v1026, 32
    %v1029 = vpop.permute.xlu0 %1028
    %v1031 = vadd.f32 %v1021, %v1029
    %v1032 = vtanh.pop %v1031
    %1034 = vrot.lane.b32.xlu0 %v1032, 32
    %v1035 = vpop.permute.xlu0 %1034
    %v1037 = vmul.f32 %v1019, %v1035
    %1039 = vrot.lane.b32.xlu0 %v696, 64
    %v1040 = vpop.permute.xlu0 %1039
    %v1041 = vsel %vm227, %v1040, 0
    %1043 = vmatprep.subr.mxu0 0.0
    %1044 = vmatpush1.msra.mxu0 %v205
    %1045 = vmatprep.subr.mxu0 0.0
    %1046 = vmatpush1.msra.mxu0 %v206
    %1047 = vmatprep.subr.mxu0 0.0
    %1048 = vmatpush1.msra.mxu0 %v207
    %1049 = vmatprep.subr.mxu0 0.0
    %1050 = vmatpush1.msra.mxu0 %v208
    %1051 = vmatprep.subr.mxu0 0.0
    %1052 = vmatpush1.msra.mxu0 0.0
    %1053 = vmatprep.subr.mxu0 0.0
    %1054 = vmatpush1.msra.mxu0 0.0
    %1055 = vmatprep.subr.mxu0 0.0
    %1056 = vmatpush1.msra.mxu0 0.0
    %1057 = vmatprep.subr.mxu0 0.0
    %1058 = vmatpush1.msra.mxu0 0.0
    %1059 = vmatprep.subr.mxu0 0.0
    %1060 = vmatpush1.msra.mxu0 0.0
    %1061 = vmatprep.subr.mxu0 0.0
    %1062 = vmatpush1.msra.mxu0 0.0
    %1063 = vmatprep.subr.mxu0 0.0
    %1064 = vmatpush1.msra.mxu0 0.0
    %1065 = vmatprep.subr.mxu0 0.0
    %1066 = vmatpush1.msra.mxu0 0.0
    %1067 = vmatprep.subr.mxu0 0.0
    %1068 = vmatpush1.msra.mxu0 0.0
    %1069 = vmatprep.subr.mxu0 0.0
    %1070 = vmatpush1.msra.mxu0 0.0
    %1071 = vmatprep.subr.mxu0 0.0
    %1072 = vmatpush1.msra.mxu0 0.0
    %1073 = vmatprep.subr.mxu0 0.0
    %1074 = vmatpush1.msra.mxu0 0.0
    %1075 = vmatprep.subr.mxu0 0.0
    %1076 = vmatpush1.msra.mxu0 0.0
    %1077 = vmatprep.subr.mxu0 0.0
    %1078 = vmatpush1.msra.mxu0 0.0
    %1079 = vmatprep.subr.mxu0 0.0
    %1080 = vmatpush1.msra.mxu0 0.0
    %1081 = vmatprep.subr.mxu0 0.0
    %1082 = vmatpush1.msra.mxu0 0.0
    %1083 = vmatprep.subr.mxu0 0.0
    %1084 = vmatpush1.msra.mxu0 0.0
    %1085 = vmatprep.subr.mxu0 0.0
    %1086 = vmatpush1.msra.mxu0 0.0
    %1087 = vmatprep.subr.mxu0 0.0
    %1088 = vmatpush1.msra.mxu0 0.0
    %1089 = vmatprep.subr.mxu0 0.0
    %1090 = vmatpush1.msra.mxu0 0.0
    %1091 = vmatprep.subr.mxu0 0.0
    %1092 = vmatpush1.msra.mxu0 0.0
    %1093 = vmatprep.subr.mxu0 0.0
    %1094 = vmatpush1.msra.mxu0 0.0
    %1095 = vmatprep.subr.mxu0 0.0
    %1096 = vmatpush1.msra.mxu0 0.0
    %1097 = vmatprep.subr.mxu0 0.0
    %1098 = vmatpush1.msra.mxu0 0.0
    %1099 = vmatprep.subr.mxu0 0.0
    %1100 = vmatpush1.msra.mxu0 0.0
    %1101 = vmatprep.subr.mxu0 0.0
    %1102 = vmatpush1.msra.mxu0 0.0
    %1103 = vmatprep.subr.mxu0 0.0
    %1104 = vmatpush1.msra.mxu0 0.0
    %1105 = vmatprep.subr.mxu0 0.0
    %1106 = vmatpush1.msra.mxu0 0.0
    %1107 = vmatprep.mubr.f32.mxu0 0.0
    %1108 = vmatmul.mubr.f32.gmra.mrb[0].mxu0 %v1041
    %v1109 = vpop.f32.mrb[0].mxu0
    %v1110 = vadd.f32 0.0, %v1109
    %v1111 = vpop.f32.mrb[0].mxu0
    %1112 = vdwg.mxu0
    %v1113 = vadd.f32 %v182, %v1110
    %v1114 = vxor.u32 %v1113, 2147483648
    %v1115 = vmul.f32 %v1114, 1.442695
    %v1116 = vpow.pop %v1115
    %v1117 = vadd.f32 %v1116, 1.0
    %v1118 = vrcp.pop %v1117
    %v1119 = vmul.f32 1.0, %v1118
    %v1120 = vtanh.pop %v1113
    %v1121 = vmul.f32 %v1119, %v690
    %1123 = vrot.lane.b32.xlu0 %v1120, 32
    %v1124 = vpop.permute.xlu0 %1123
    %v1126 = vmul.f32 %v1119, %v1124
    %1128 = vrot.lane.b32.xlu0 %v1126, 32
    %v1129 = vpop.permute.xlu0 %1128
    %v1131 = vadd.f32 %v1121, %v1129
    %v1132 = vtanh.pop %v1131
    %1134 = vrot.lane.b32.xlu0 %v1132, 32
    %v1135 = vpop.permute.xlu0 %1134
    %v1137 = vmul.f32 %v1119, %v1135
    %1139 = vrot.lane.b32.xlu0 %v866, 64
    %v1140 = vpop.permute.xlu0 %1139
    %v1141 = vsel %vm227, %v1140, 0
    %1143 = vmatprep.subr.mxu0 0.0
    %1144 = vmatpush1.msra.mxu0 %v209
    %1145 = vmatprep.subr.mxu0 0.0
    %1146 = vmatpush1.msra.mxu0 %v210
    %1147 = vmatprep.subr.mxu0 0.0
    %1148 = vmatpush1.msra.mxu0 %v211
    %1149 = vmatprep.subr.mxu0 0.0
    %1150 = vmatpush1.msra.mxu0 %v212
    %1151 = vmatprep.subr.mxu0 0.0
    %1152 = vmatpush1.msra.mxu0 0.0
    %1153 = vmatprep.subr.mxu0 0.0
    %1154 = vmatpush1.msra.mxu0 0.0
    %1155 = vmatprep.subr.mxu0 0.0
    %1156 = vmatpush1.msra.mxu0 0.0
    %1157 = vmatprep.subr.mxu0 0.0
    %1158 = vmatpush1.msra.mxu0 0.0
    %1159 = vmatprep.subr.mxu0 0.0
    %1160 = vmatpush1.msra.mxu0 0.0
    %1161 = vmatprep.subr.mxu0 0.0
    %1162 = vmatpush1.msra.mxu0 0.0
    %1163 = vmatprep.subr.mxu0 0.0
    %1164 = vmatpush1.msra.mxu0 0.0
    %1165 = vmatprep.subr.mxu0 0.0
    %1166 = vmatpush1.msra.mxu0 0.0
    %1167 = vmatprep.subr.mxu0 0.0
    %1168 = vmatpush1.msra.mxu0 0.0
    %1169 = vmatprep.subr.mxu0 0.0
    %1170 = vmatpush1.msra.mxu0 0.0
    %1171 = vmatprep.subr.mxu0 0.0
    %1172 = vmatpush1.msra.mxu0 0.0
    %1173 = vmatprep.subr.mxu0 0.0
    %1174 = vmatpush1.msra.mxu0 0.0
    %1175 = vmatprep.subr.mxu0 0.0
    %1176 = vmatpush1.msra.mxu0 0.0
    %1177 = vmatprep.subr.mxu0 0.0
    %1178 = vmatpush1.msra.mxu0 0.0
    %1179 = vmatprep.subr.mxu0 0.0
    %1180 = vmatpush1.msra.mxu0 0.0
    %1181 = vmatprep.subr.mxu0 0.0
    %1182 = vmatpush1.msra.mxu0 0.0
    %1183 = vmatprep.subr.mxu0 0.0
    %1184 = vmatpush1.msra.mxu0 0.0
    %1185 = vmatprep.subr.mxu0 0.0
    %1186 = vmatpush1.msra.mxu0 0.0
    %1187 = vmatprep.subr.mxu0 0.0
    %1188 = vmatpush1.msra.mxu0 0.0
    %1189 = vmatprep.subr.mxu0 0.0
    %1190 = vmatpush1.msra.mxu0 0.0
    %1191 = vmatprep.subr.mxu0 0.0
    %1192 = vmatpush1.msra.mxu0 0.0
    %1193 = vmatprep.subr.mxu0 0.0
    %1194 = vmatpush1.msra.mxu0 0.0
    %1195 = vmatprep.subr.mxu0 0.0
    %1196 = vmatpush1.msra.mxu0 0.0
    %1197 = vmatprep.subr.mxu0 0.0
    %1198 = vmatpush1.msra.mxu0 0.0
    %1199 = vmatprep.subr.mxu0 0.0
    %1200 = vmatpush1.msra.mxu0 0.0
    %1201 = vmatprep.subr.mxu0 0.0
    %1202 = vmatpush1.msra.mxu0 0.0
    %1203 = vmatprep.subr.mxu0 0.0
    %1204 = vmatpush1.msra.mxu0 0.0
    %1205 = vmatprep.subr.mxu0 0.0
    %1206 = vmatpush1.msra.mxu0 0.0
    %1207 = vmatprep.mubr.f32.mxu0 0.0
    %1208 = vmatmul.mubr.f32.gmra.mrb[0].mxu0 %v1141
    %v1209 = vpop.f32.mrb[0].mxu0
    %v1210 = vadd.f32 0.0, %v1209
    %v1211 = vpop.f32.mrb[0].mxu0
    %1212 = vdwg.mxu0
    %1213 = vmatprep.subr.mxu0 0.0
    %1214 = vmatpush1.msra.mxu0 %v217
    %1215 = vmatprep.subr.mxu0 0.0
    %1216 = vmatpush1.msra.mxu0 %v218
    %1217 = vmatprep.subr.mxu0 0.0
    %1218 = vmatpush1.msra.mxu0 %v219
    %1219 = vmatprep.subr.mxu0 0.0
    %1220 = vmatpush1.msra.mxu0 %v220
    %1221 = vmatprep.subr.mxu0 0.0
    %1222 = vmatpush1.msra.mxu0 0.0
    %1223 = vmatprep.subr.mxu0 0.0
    %1224 = vmatpush1.msra.mxu0 0.0
    %1225 = vmatprep.subr.mxu0 0.0
    %1226 = vmatpush1.msra.mxu0 0.0
    %1227 = vmatprep.subr.mxu0 0.0
    %1228 = vmatpush1.msra.mxu0 0.0
    %1229 = vmatprep.subr.mxu0 0.0
    %1230 = vmatpush1.msra.mxu0 0.0
    %1231 = vmatprep.subr.mxu0 0.0
    %1232 = vmatpush1.msra.mxu0 0.0
    %1233 = vmatprep.subr.mxu0 0.0
    %1234 = vmatpush1.msra.mxu0 0.0
    %1235 = vmatprep.subr.mxu0 0.0
    %1236 = vmatpush1.msra.mxu0 0.0
    %1237 = vmatprep.subr.mxu0 0.0
    %1238 = vmatpush1.msra.mxu0 0.0
    %1239 = vmatprep.subr.mxu0 0.0
    %1240 = vmatpush1.msra.mxu0 0.0
    %1241 = vmatprep.subr.mxu0 0.0
    %1242 = vmatpush1.msra.mxu0 0.0
    %1243 = vmatprep.subr.mxu0 0.0
    %1244 = vmatpush1.msra.mxu0 0.0
    %1245 = vmatprep.subr.mxu0 0.0
    %1246 = vmatpush1.msra.mxu0 0.0
    %1247 = vmatprep.subr.mxu0 0.0
    %1248 = vmatpush1.msra.mxu0 0.0
    %1249 = vmatprep.subr.mxu0 0.0
    %1250 = vmatpush1.msra.mxu0 0.0
    %1251 = vmatprep.subr.mxu0 0.0
    %1252 = vmatpush1.msra.mxu0 0.0
    %1253 = vmatprep.subr.mxu0 0.0
    %1254 = vmatpush1.msra.mxu0 0.0
    %1255 = vmatprep.subr.mxu0 0.0
    %1256 = vmatpush1.msra.mxu0 0.0
    %1257 = vmatprep.subr.mxu0 0.0
    %1258 = vmatpush1.msra.mxu0 0.0
    %1259 = vmatprep.subr.mxu0 0.0
    %1260 = vmatpush1.msra.mxu0 0.0
    %1261 = vmatprep.subr.mxu0 0.0
    %1262 = vmatpush1.msra.mxu0 0.0
    %1263 = vmatprep.subr.mxu0 0.0
    %1264 = vmatpush1.msra.mxu0 0.0
    %1265 = vmatprep.subr.mxu0 0.0
    %1266 = vmatpush1.msra.mxu0 0.0
    %1267 = vmatprep.subr.mxu0 0.0
    %1268 = vmatpush1.msra.mxu0 0.0
    %1269 = vmatprep.subr.mxu0 0.0
    %1270 = vmatpush1.msra.mxu0 0.0
    %1271 = vmatprep.subr.mxu0 0.0
    %1272 = vmatpush1.msra.mxu0 0.0
    %1273 = vmatprep.subr.mxu0 0.0
    %1274 = vmatpush1.msra.mxu0 0.0
    %1275 = vmatprep.subr.mxu0 0.0
    %1276 = vmatpush1.msra.mxu0 0.0
    %1277 = vmatprep.mubr.f32.mxu0 0.0
    %1278 = vmatmul.mubr.f32.gmra.mrb[0].mxu0 %v1041
    %v1279 = vpop.f32.mrb[0].mxu0
    %v1280 = vadd.f32 %v1210, %v1279
    %v1281 = vpop.f32.mrb[0].mxu0
    %1282 = vdwg.mxu0
    %v1283 = vadd.f32 %v1280, %v570
    %v1284 = vxor.u32 %v1283, 2147483648
    %v1285 = vmul.f32 %v1284, 1.442695
    %v1286 = vpow.pop %v1285
    %v1287 = vadd.f32 %v1286, 1.0
    %v1288 = vrcp.pop %v1287
    %v1289 = vmul.f32 1.0, %v1288
    %v1290 = vtanh.pop %v1283
    %v1291 = vmul.f32 %v1289, %v860
    %1293 = vrot.lane.b32.xlu0 %v1290, 32
    %v1294 = vpop.permute.xlu0 %1293
    %v1296 = vmul.f32 %v1289, %v1294
    %1298 = vrot.lane.b32.xlu0 %v1296, 32
    %v1299 = vpop.permute.xlu0 %1298
    %v1301 = vadd.f32 %v1291, %v1299
    %v1302 = vtanh.pop %v1301
    %1304 = vrot.lane.b32.xlu0 %v1302, 32
    %v1305 = vpop.permute.xlu0 %1304
    %v1307 = vmul.f32 %v1289, %v1305
    %1309 = vrot.lane.b32.xlu0 %v1037, 64
    %v1310 = vpop.permute.xlu0 %1309
    %v1311 = vsel %vm227, %v1310, 0
    %1313 = vmatprep.subr.mxu0 0.0
    %1314 = vmatpush1.msra.mxu0 %v213
    %1315 = vmatprep.subr.mxu0 0.0
    %1316 = vmatpush1.msra.mxu0 %v214
    %1317 = vmatprep.subr.mxu0 0.0
    %1318 = vmatpush1.msra.mxu0 %v215
    %1319 = vmatprep.subr.mxu0 0.0
    %1320 = vmatpush1.msra.mxu0 %v216
    %1321 = vmatprep.subr.mxu0 0.0
    %1322 = vmatpush1.msra.mxu0 0.0
    %1323 = vmatprep.subr.mxu0 0.0
    %1324 = vmatpush1.msra.mxu0 0.0
    %1325 = vmatprep.subr.mxu0 0.0
    %1326 = vmatpush1.msra.mxu0 0.0
    %1327 = vmatprep.subr.mxu0 0.0
    %1328 = vmatpush1.msra.mxu0 0.0
    %1329 = vmatprep.subr.mxu0 0.0
    %1330 = vmatpush1.msra.mxu0 0.0
    %1331 = vmatprep.subr.mxu0 0.0
    %1332 = vmatpush1.msra.mxu0 0.0
    %1333 = vmatprep.subr.mxu0 0.0
    %1334 = vmatpush1.msra.mxu0 0.0
    %1335 = vmatprep.subr.mxu0 0.0
    %1336 = vmatpush1.msra.mxu0 0.0
    %1337 = vmatprep.subr.mxu0 0.0
    %1338 = vmatpush1.msra.mxu0 0.0
    %1339 = vmatprep.subr.mxu0 0.0
    %1340 = vmatpush1.msra.mxu0 0.0
    %1341 = vmatprep.subr.mxu0 0.0
    %1342 = vmatpush1.msra.mxu0 0.0
    %1343 = vmatprep.subr.mxu0 0.0
    %1344 = vmatpush1.msra.mxu0 0.0
    %1345 = vmatprep.subr.mxu0 0.0
    %1346 = vmatpush1.msra.mxu0 0.0
    %1347 = vmatprep.subr.mxu0 0.0
    %1348 = vmatpush1.msra.mxu0 0.0
    %1349 = vmatprep.subr.mxu0 0.0
    %1350 = vmatpush1.msra.mxu0 0.0
    %1351 = vmatprep.subr.mxu0 0.0
    %1352 = vmatpush1.msra.mxu0 0.0
    %1353 = vmatprep.subr.mxu0 0.0
    %1354 = vmatpush1.msra.mxu0 0.0
    %1355 = vmatprep.subr.mxu0 0.0
    %1356 = vmatpush1.msra.mxu0 0.0
    %1357 = vmatprep.subr.mxu0 0.0
    %1358 = vmatpush1.msra.mxu0 0.0
    %1359 = vmatprep.subr.mxu0 0.0
    %1360 = vmatpush1.msra.mxu0 0.0
    %1361 = vmatprep.subr.mxu0 0.0
    %1362 = vmatpush1.msra.mxu0 0.0
    %1363 = vmatprep.subr.mxu0 0.0
    %1364 = vmatpush1.msra.mxu0 0.0
    %1365 = vmatprep.subr.mxu0 0.0
    %1366 = vmatpush1.msra.mxu0 0.0
    %1367 = vmatprep.subr.mxu0 0.0
    %1368 = vmatpush1.msra.mxu0 0.0
    %1369 = vmatprep.subr.mxu0 0.0
    %1370 = vmatpush1.msra.mxu0 0.0
    %1371 = vmatprep.subr.mxu0 0.0
    %1372 = vmatpush1.msra.mxu0 0.0
    %1373 = vmatprep.subr.mxu0 0.0
    %1374 = vmatpush1.msra.mxu0 0.0
    %1375 = vmatprep.subr.mxu0 0.0
    %1376 = vmatpush1.msra.mxu0 0.0
    %1377 = vmatprep.mubr.f32.mxu0 0.0
    %1378 = vmatmul.mubr.f32.gmra.mrb[0].mxu0 %v1311
    %v1379 = vpop.f32.mrb[0].mxu0
    %v1380 = vadd.f32 0.0, %v1379
    %v1381 = vpop.f32.mrb[0].mxu0
    %1382 = vdwg.mxu0
    %1383 = vmatprep.subr.mxu0 0.0
    %1384 = vmatpush1.msra.mxu0 %v221
    %1385 = vmatprep.subr.mxu0 0.0
    %1386 = vmatpush1.msra.mxu0 %v222
    %1387 = vmatprep.subr.mxu0 0.0
    %1388 = vmatpush1.msra.mxu0 %v223
    %1389 = vmatprep.subr.mxu0 0.0
    %1390 = vmatpush1.msra.mxu0 %v224
    %1391 = vmatprep.subr.mxu0 0.0
    %1392 = vmatpush1.msra.mxu0 0.0
    %1393 = vmatprep.subr.mxu0 0.0
    %1394 = vmatpush1.msra.mxu0 0.0
    %1395 = vmatprep.subr.mxu0 0.0
    %1396 = vmatpush1.msra.mxu0 0.0
    %1397 = vmatprep.subr.mxu0 0.0
    %1398 = vmatpush1.msra.mxu0 0.0
    %1399 = vmatprep.subr.mxu0 0.0
    %1400 = vmatpush1.msra.mxu0 0.0
    %1401 = vmatprep.subr.mxu0 0.0
    %1402 = vmatpush1.msra.mxu0 0.0
    %1403 = vmatprep.subr.mxu0 0.0
    %1404 = vmatpush1.msra.mxu0 0.0
    %1405 = vmatprep.subr.mxu0 0.0
    %1406 = vmatpush1.msra.mxu0 0.0
    %1407 = vmatprep.subr.mxu0 0.0
    %1408 = vmatpush1.msra.mxu0 0.0
    %1409 = vmatprep.subr.mxu0 0.0
    %1410 = vmatpush1.msra.mxu0 0.0
    %1411 = vmatprep.subr.mxu0 0.0
    %1412 = vmatpush1.msra.mxu0 0.0
    %1413 = vmatprep.subr.mxu0 0.0
    %1414 = vmatpush1.msra.mxu0 0.0
    %1415 = vmatprep.subr.mxu0 0.0
    %1416 = vmatpush1.msra.mxu0 0.0
    %1417 = vmatprep.subr.mxu0 0.0
    %1418 = vmatpush1.msra.mxu0 0.0
    %1419 = vmatprep.subr.mxu0 0.0
    %1420 = vmatpush1.msra.mxu0 0.0
    %1421 = vmatprep.subr.mxu0 0.0
    %1422 = vmatpush1.msra.mxu0 0.0
    %1423 = vmatprep.subr.mxu0 0.0
    %1424 = vmatpush1.msra.mxu0 0.0
    %1425 = vmatprep.subr.mxu0 0.0
    %1426 = vmatpush1.msra.mxu0 0.0
    %1427 = vmatprep.subr.mxu0 0.0
    %1428 = vmatpush1.msra.mxu0 0.0
    %1429 = vmatprep.subr.mxu0 0.0
    %1430 = vmatpush1.msra.mxu0 0.0
    %1431 = vmatprep.subr.mxu0 0.0
    %1432 = vmatpush1.msra.mxu0 0.0
    %1433 = vmatprep.subr.mxu0 0.0
    %1434 = vmatpush1.msra.mxu0 0.0
    %1435 = vmatprep.subr.mxu0 0.0
    %1436 = vmatpush1.msra.mxu0 0.0
    %1437 = vmatprep.subr.mxu0 0.0
    %1438 = vmatpush1.msra.mxu0 0.0
    %1439 = vmatprep.subr.mxu0 0.0
    %1440 = vmatpush1.msra.mxu0 0.0
    %1441 = vmatprep.subr.mxu0 0.0
    %1442 = vmatpush1.msra.mxu0 0.0
    %1443 = vmatprep.subr.mxu0 0.0
    %1444 = vmatpush1.msra.mxu0 0.0
    %1445 = vmatprep.subr.mxu0 0.0
    %1446 = vmatpush1.msra.mxu0 0.0
    %1447 = vmatprep.mubr.f32.mxu0 0.0
    %1448 = vmatmul.mubr.f32.gmra.mrb[0].mxu0 %v1141
    %v1449 = vpop.f32.mrb[0].mxu0
    %v1450 = vadd.f32 %v1380, %v1449
    %v1451 = vpop.f32.mrb[0].mxu0
    %1452 = vdwg.mxu0
    %v1453 = vadd.f32 %v1450, %v1011
    %v1454 = vxor.u32 %v1453, 2147483648
    %v1455 = vmul.f32 %v1454, 1.442695
    %v1456 = vpow.pop %v1455
    %v1457 = vadd.f32 %v1456, 1.0
    %v1458 = vrcp.pop %v1457
    %v1459 = vmul.f32 1.0, %v1458
    %v1460 = vtanh.pop %v1453
    %v1461 = vmul.f32 %v1459, %v1031
    %1463 = vrot.lane.b32.xlu0 %v1460, 32
    %v1464 = vpop.permute.xlu0 %1463
    %v1466 = vmul.f32 %v1459, %v1464
    %1468 = vrot.lane.b32.xlu0 %v1466, 32
    %v1469 = vpop.permute.xlu0 %1468
    %v1471 = vadd.f32 %v1461, %v1469
    %v1472 = vtanh.pop %v1471
    %1474 = vrot.lane.b32.xlu0 %v1472, 32
    %v1475 = vpop.permute.xlu0 %1474
    %v1477 = vmul.f32 %v1459, %v1475
    %1479 = vrot.lane.b32.xlu0 %v1137, 64
    %v1480 = vpop.permute.xlu0 %1479
    %v1481 = vsel %vm227, %v1480, 0
    %1483 = vmatprep.subr.mxu0 0.0
    %1484 = vmatpush1.msra.mxu0 %v205
    %1485 = vmatprep.subr.mxu0 0.0
    %1486 = vmatpush1.msra.mxu0 %v206
    %1487 = vmatprep.subr.mxu0 0.0
    %1488 = vmatpush1.msra.mxu0 %v207
    %1489 = vmatprep.subr.mxu0 0.0
    %1490 = vmatpush1.msra.mxu0 %v208
    %1491 = vmatprep.subr.mxu0 0.0
    %1492 = vmatpush1.msra.mxu0 0.0
    %1493 = vmatprep.subr.mxu0 0.0
    %1494 = vmatpush1.msra.mxu0 0.0
    %1495 = vmatprep.subr.mxu0 0.0
    %1496 = vmatpush1.msra.mxu0 0.0
    %1497 = vmatprep.subr.mxu0 0.0
    %1498 = vmatpush1.msra.mxu0 0.0
    %1499 = vmatprep.subr.mxu0 0.0
    %1500 = vmatpush1.msra.mxu0 0.0
    %1501 = vmatprep.subr.mxu0 0.0
    %1502 = vmatpush1.msra.mxu0 0.0
    %1503 = vmatprep.subr.mxu0 0.0
    %1504 = vmatpush1.msra.mxu0 0.0
    %1505 = vmatprep.subr.mxu0 0.0
    %1506 = vmatpush1.msra.mxu0 0.0
    %1507 = vmatprep.subr.mxu0 0.0
    %1508 = vmatpush1.msra.mxu0 0.0
    %1509 = vmatprep.subr.mxu0 0.0
    %1510 = vmatpush1.msra.mxu0 0.0
    %1511 = vmatprep.subr.mxu0 0.0
    %1512 = vmatpush1.msra.mxu0 0.0
    %1513 = vmatprep.subr.mxu0 0.0
    %1514 = vmatpush1.msra.mxu0 0.0
    %1515 = vmatprep.subr.mxu0 0.0
    %1516 = vmatpush1.msra.mxu0 0.0
    %1517 = vmatprep.subr.mxu0 0.0
    %1518 = vmatpush1.msra.mxu0 0.0
    %1519 = vmatprep.subr.mxu0 0.0
    %1520 = vmatpush1.msra.mxu0 0.0
    %1521 = vmatprep.subr.mxu0 0.0
    %1522 = vmatpush1.msra.mxu0 0.0
    %1523 = vmatprep.subr.mxu0 0.0
    %1524 = vmatpush1.msra.mxu0 0.0
    %1525 = vmatprep.subr.mxu0 0.0
    %1526 = vmatpush1.msra.mxu0 0.0
    %1527 = vmatprep.subr.mxu0 0.0
    %1528 = vmatpush1.msra.mxu0 0.0
    %1529 = vmatprep.subr.mxu0 0.0
    %1530 = vmatpush1.msra.mxu0 0.0
    %1531 = vmatprep.subr.mxu0 0.0
    %1532 = vmatpush1.msra.mxu0 0.0
    %1533 = vmatprep.subr.mxu0 0.0
    %1534 = vmatpush1.msra.mxu0 0.0
    %1535 = vmatprep.subr.mxu0 0.0
    %1536 = vmatpush1.msra.mxu0 0.0
    %1537 = vmatprep.subr.mxu0 0.0
    %1538 = vmatpush1.msra.mxu0 0.0
    %1539 = vmatprep.subr.mxu0 0.0
    %1540 = vmatpush1.msra.mxu0 0.0
    %1541 = vmatprep.subr.mxu0 0.0
    %1542 = vmatpush1.msra.mxu0 0.0
    %1543 = vmatprep.subr.mxu0 0.0
    %1544 = vmatpush1.msra.mxu0 0.0
    %1545 = vmatprep.subr.mxu0 0.0
    %1546 = vmatpush1.msra.mxu0 0.0
    %1547 = vmatprep.mubr.f32.mxu0 0.0
    %1548 = vmatmul.mubr.f32.gmra.mrb[0].mxu0 %v1481
    %v1549 = vpop.f32.mrb[0].mxu0
    %v1550 = vadd.f32 0.0, %v1549
    %v1551 = vpop.f32.mrb[0].mxu0
    %1552 = vdwg.mxu0
    %v1553 = vadd.f32 %v187, %v1550
    %v1554 = vxor.u32 %v1553, 2147483648
    %v1555 = vmul.f32 %v1554, 1.442695
    %v1556 = vpow.pop %v1555
    %v1557 = vadd.f32 %v1556, 1.0
    %v1558 = vrcp.pop %v1557
    %v1559 = vmul.f32 1.0, %v1558
    %v1560 = vtanh.pop %v1553
    %v1561 = vmul.f32 %v1559, %v1131
    %1563 = vrot.lane.b32.xlu0 %v1560, 32
    %v1564 = vpop.permute.xlu0 %1563
    %v1566 = vmul.f32 %v1559, %v1564
    %1568 = vrot.lane.b32.xlu0 %v1566, 32
    %v1569 = vpop.permute.xlu0 %1568
    %v1571 = vadd.f32 %v1561, %v1569
    %v1572 = vtanh.pop %v1571
    %1574 = vrot.lane.b32.xlu0 %v1572, 32
    %v1575 = vpop.permute.xlu0 %1574
    %v1577 = vmul.f32 %v1559, %v1575
    %1579 = vrot.lane.b32.xlu0 %v1307, 64
    %v1580 = vpop.permute.xlu0 %1579
    %v1581 = vsel %vm227, %v1580, 0
    %1583 = vmatprep.subr.mxu0 0.0
    %1584 = vmatpush1.msra.mxu0 %v209
    %1585 = vmatprep.subr.mxu0 0.0
    %1586 = vmatpush1.msra.mxu0 %v210
    %1587 = vmatprep.subr.mxu0 0.0
    %1588 = vmatpush1.msra.mxu0 %v211
    %1589 = vmatprep.subr.mxu0 0.0
    %1590 = vmatpush1.msra.mxu0 %v212
    %1591 = vmatprep.subr.mxu0 0.0
    %1592 = vmatpush1.msra.mxu0 0.0
    %1593 = vmatprep.subr.mxu0 0.0
    %1594 = vmatpush1.msra.mxu0 0.0
    %1595 = vmatprep.subr.mxu0 0.0
    %1596 = vmatpush1.msra.mxu0 0.0
    %1597 = vmatprep.subr.mxu0 0.0
    %1598 = vmatpush1.msra.mxu0 0.0
    %1599 = vmatprep.subr.mxu0 0.0
    %1600 = vmatpush1.msra.mxu0 0.0
    %1601 = vmatprep.subr.mxu0 0.0
    %1602 = vmatpush1.msra.mxu0 0.0
    %1603 = vmatprep.subr.mxu0 0.0
    %1604 = vmatpush1.msra.mxu0 0.0
    %1605 = vmatprep.subr.mxu0 0.0
    %1606 = vmatpush1.msra.mxu0 0.0
    %1607 = vmatprep.subr.mxu0 0.0
    %1608 = vmatpush1.msra.mxu0 0.0
    %1609 = vmatprep.subr.mxu0 0.0
    %1610 = vmatpush1.msra.mxu0 0.0
    %1611 = vmatprep.subr.mxu0 0.0
    %1612 = vmatpush1.msra.mxu0 0.0
    %1613 = vmatprep.subr.mxu0 0.0
    %1614 = vmatpush1.msra.mxu0 0.0
    %1615 = vmatprep.subr.mxu0 0.0
    %1616 = vmatpush1.msra.mxu0 0.0
    %1617 = vmatprep.subr.mxu0 0.0
    %1618 = vmatpush1.msra.mxu0 0.0
    %1619 = vmatprep.subr.mxu0 0.0
    %1620 = vmatpush1.msra.mxu0 0.0
    %1621 = vmatprep.subr.mxu0 0.0
    %1622 = vmatpush1.msra.mxu0 0.0
    %1623 = vmatprep.subr.mxu0 0.0
    %1624 = vmatpush1.msra.mxu0 0.0
    %1625 = vmatprep.subr.mxu0 0.0
    %1626 = vmatpush1.msra.mxu0 0.0
    %1627 = vmatprep.subr.mxu0 0.0
    %1628 = vmatpush1.msra.mxu0 0.0
    %1629 = vmatprep.subr.mxu0 0.0
    %1630 = vmatpush1.msra.mxu0 0.0
    %1631 = vmatprep.subr.mxu0 0.0
    %1632 = vmatpush1.msra.mxu0 0.0
    %1633 = vmatprep.subr.mxu0 0.0
    %1634 = vmatpush1.msra.mxu0 0.0
    %1635 = vmatprep.subr.mxu0 0.0
    %1636 = vmatpush1.msra.mxu0 0.0
    %1637 = vmatprep.subr.mxu0 0.0
    %1638 = vmatpush1.msra.mxu0 0.0
    %1639 = vmatprep.subr.mxu0 0.0
    %1640 = vmatpush1.msra.mxu0 0.0
    %1641 = vmatprep.subr.mxu0 0.0
    %1642 = vmatpush1.msra.mxu0 0.0
    %1643 = vmatprep.subr.mxu0 0.0
    %1644 = vmatpush1.msra.mxu0 0.0
    %1645 = vmatprep.subr.mxu0 0.0
    %1646 = vmatpush1.msra.mxu0 0.0
    %1647 = vmatprep.mubr.f32.mxu0 0.0
    %1648 = vmatmul.mubr.f32.gmra.mrb[0].mxu0 %v1581
    %v1649 = vpop.f32.mrb[0].mxu0
    %v1650 = vadd.f32 0.0, %v1649
    %v1651 = vpop.f32.mrb[0].mxu0
    %1652 = vdwg.mxu0
    %1653 = vmatprep.subr.mxu0 0.0
    %1654 = vmatpush1.msra.mxu0 %v217
    %1655 = vmatprep.subr.mxu0 0.0
    %1656 = vmatpush1.msra.mxu0 %v218
    %1657 = vmatprep.subr.mxu0 0.0
    %1658 = vmatpush1.msra.mxu0 %v219
    %1659 = vmatprep.subr.mxu0 0.0
    %1660 = vmatpush1.msra.mxu0 %v220
    %1661 = vmatprep.subr.mxu0 0.0
    %1662 = vmatpush1.msra.mxu0 0.0
    %1663 = vmatprep.subr.mxu0 0.0
    %1664 = vmatpush1.msra.mxu0 0.0
    %1665 = vmatprep.subr.mxu0 0.0
    %1666 = vmatpush1.msra.mxu0 0.0
    %1667 = vmatprep.subr.mxu0 0.0
    %1668 = vmatpush1.msra.mxu0 0.0
    %1669 = vmatprep.subr.mxu0 0.0
    %1670 = vmatpush1.msra.mxu0 0.0
    %1671 = vmatprep.subr.mxu0 0.0
    %1672 = vmatpush1.msra.mxu0 0.0
    %1673 = vmatprep.subr.mxu0 0.0
    %1674 = vmatpush1.msra.mxu0 0.0
    %1675 = vmatprep.subr.mxu0 0.0
    %1676 = vmatpush1.msra.mxu0 0.0
    %1677 = vmatprep.subr.mxu0 0.0
    %1678 = vmatpush1.msra.mxu0 0.0
    %1679 = vmatprep.subr.mxu0 0.0
    %1680 = vmatpush1.msra.mxu0 0.0
    %1681 = vmatprep.subr.mxu0 0.0
    %1682 = vmatpush1.msra.mxu0 0.0
    %1683 = vmatprep.subr.mxu0 0.0
    %1684 = vmatpush1.msra.mxu0 0.0
    %1685 = vmatprep.subr.mxu0 0.0
    %1686 = vmatpush1.msra.mxu0 0.0
    %1687 = vmatprep.subr.mxu0 0.0
    %1688 = vmatpush1.msra.mxu0 0.0
    %1689 = vmatprep.subr.mxu0 0.0
    %1690 = vmatpush1.msra.mxu0 0.0
    %1691 = vmatprep.subr.mxu0 0.0
    %1692 = vmatpush1.msra.mxu0 0.0
    %1693 = vmatprep.subr.mxu0 0.0
    %1694 = vmatpush1.msra.mxu0 0.0
    %1695 = vmatprep.subr.mxu0 0.0
    %1696 = vmatpush1.msra.mxu0 0.0
    %1697 = vmatprep.subr.mxu0 0.0
    %1698 = vmatpush1.msra.mxu0 0.0
    %1699 = vmatprep.subr.mxu0 0.0
    %1700 = vmatpush1.msra.mxu0 0.0
    %1701 = vmatprep.subr.mxu0 0.0
    %1702 = vmatpush1.msra.mxu0 0.0
    %1703 = vmatprep.subr.mxu0 0.0
    %1704 = vmatpush1.msra.mxu0 0.0
    %1705 = vmatprep.subr.mxu0 0.0
    %1706 = vmatpush1.msra.mxu0 0.0
    %1707 = vmatprep.subr.mxu0 0.0
    %1708 = vmatpush1.msra.mxu0 0.0
    %1709 = vmatprep.subr.mxu0 0.0
    %1710 = vmatpush1.msra.mxu0 0.0
    %1711 = vmatprep.subr.mxu0 0.0
    %1712 = vmatpush1.msra.mxu0 0.0
    %1713 = vmatprep.subr.mxu0 0.0
    %1714 = vmatpush1.msra.mxu0 0.0
    %1715 = vmatprep.subr.mxu0 0.0
    %1716 = vmatpush1.msra.mxu0 0.0
    %1717 = vmatprep.mubr.f32.mxu0 0.0
    %1718 = vmatmul.mubr.f32.gmra.mrb[0].mxu0 %v1481
    %v1719 = vpop.f32.mrb[0].mxu0
    %v1720 = vadd.f32 %v1650, %v1719
    %v1721 = vpop.f32.mrb[0].mxu0
    %1722 = vdwg.mxu0
    %v1723 = vadd.f32 %v1720, %v570
    %v1724 = vxor.u32 %v1723, 2147483648
    %v1725 = vmul.f32 %v1724, 1.442695
    %v1726 = vpow.pop %v1725
    %v1727 = vadd.f32 %v1726, 1.0
    %v1728 = vrcp.pop %v1727
    %v1729 = vmul.f32 1.0, %v1728
    %v1730 = vtanh.pop %v1723
    %v1731 = vmul.f32 %v1729, %v1301
    %1733 = vrot.lane.b32.xlu0 %v1730, 32
    %v1734 = vpop.permute.xlu0 %1733
    %v1736 = vmul.f32 %v1729, %v1734
    %1738 = vrot.lane.b32.xlu0 %v1736, 32
    %v1739 = vpop.permute.xlu0 %1738
    %v1741 = vadd.f32 %v1731, %v1739
    %v1742 = vtanh.pop %v1741
    %1744 = vrot.lane.b32.xlu0 %v1742, 32
    %v1745 = vpop.permute.xlu0 %1744
    %v1747 = vmul.f32 %v1729, %v1745
    %1749 = vrot.lane.b32.xlu0 %v1477, 64
    %v1750 = vpop.permute.xlu0 %1749
    %v1751 = vsel %vm227, %v1750, 0
    %1753 = vmatprep.subr.mxu0 0.0
    %1754 = vmatpush1.msra.mxu0 %v213
    %1755 = vmatprep.subr.mxu0 0.0
    %1756 = vmatpush1.msra.mxu0 %v214
    %1757 = vmatprep.subr.mxu0 0.0
    %1758 = vmatpush1.msra.mxu0 %v215
    %1759 = vmatprep.subr.mxu0 0.0
    %1760 = vmatpush1.msra.mxu0 %v216
    %1761 = vmatprep.subr.mxu0 0.0
    %1762 = vmatpush1.msra.mxu0 0.0
    %1763 = vmatprep.subr.mxu0 0.0
    %1764 = vmatpush1.msra.mxu0 0.0
    %1765 = vmatprep.subr.mxu0 0.0
    %1766 = vmatpush1.msra.mxu0 0.0
    %1767 = vmatprep.subr.mxu0 0.0
    %1768 = vmatpush1.msra.mxu0 0.0
    %1769 = vmatprep.subr.mxu0 0.0
    %1770 = vmatpush1.msra.mxu0 0.0
    %1771 = vmatprep.subr.mxu0 0.0
    %1772 = vmatpush1.msra.mxu0 0.0
    %1773 = vmatprep.subr.mxu0 0.0
    %1774 = vmatpush1.msra.mxu0 0.0
    %1775 = vmatprep.subr.mxu0 0.0
    %1776 = vmatpush1.msra.mxu0 0.0
    %1777 = vmatprep.subr.mxu0 0.0
    %1778 = vmatpush1.msra.mxu0 0.0
    %1779 = vmatprep.subr.mxu0 0.0
    %1780 = vmatpush1.msra.mxu0 0.0
    %1781 = vmatprep.subr.mxu0 0.0
    %1782 = vmatpush1.msra.mxu0 0.0
    %1783 = vmatprep.subr.mxu0 0.0
    %1784 = vmatpush1.msra.mxu0 0.0
    %1785 = vmatprep.subr.mxu0 0.0
    %1786 = vmatpush1.msra.mxu0 0.0
    %1787 = vmatprep.subr.mxu0 0.0
    %1788 = vmatpush1.msra.mxu0 0.0
    %1789 = vmatprep.subr.mxu0 0.0
    %1790 = vmatpush1.msra.mxu0 0.0
    %1791 = vmatprep.subr.mxu0 0.0
    %1792 = vmatpush1.msra.mxu0 0.0
    %1793 = vmatprep.subr.mxu0 0.0
    %1794 = vmatpush1.msra.mxu0 0.0
    %1795 = vmatprep.subr.mxu0 0.0
    %1796 = vmatpush1.msra.mxu0 0.0
    %1797 = vmatprep.subr.mxu0 0.0
    %1798 = vmatpush1.msra.mxu0 0.0
    %1799 = vmatprep.subr.mxu0 0.0
    %1800 = vmatpush1.msra.mxu0 0.0
    %1801 = vmatprep.subr.mxu0 0.0
    %1802 = vmatpush1.msra.mxu0 0.0
    %1803 = vmatprep.subr.mxu0 0.0
    %1804 = vmatpush1.msra.mxu0 0.0
    %1805 = vmatprep.subr.mxu0 0.0
    %1806 = vmatpush1.msra.mxu0 0.0
    %1807 = vmatprep.subr.mxu0 0.0
    %1808 = vmatpush1.msra.mxu0 0.0
    %1809 = vmatprep.subr.mxu0 0.0
    %1810 = vmatpush1.msra.mxu0 0.0
    %1811 = vmatprep.subr.mxu0 0.0
    %1812 = vmatpush1.msra.mxu0 0.0
    %1813 = vmatprep.subr.mxu0 0.0
    %1814 = vmatpush1.msra.mxu0 0.0
    %1815 = vmatprep.subr.mxu0 0.0
    %1816 = vmatpush1.msra.mxu0 0.0
    %1817 = vmatprep.mubr.f32.mxu0 0.0
    %1818 = vmatmul.mubr.f32.gmra.mrb[0].mxu0 %v1751
    %v1819 = vpop.f32.mrb[0].mxu0
    %v1820 = vadd.f32 0.0, %v1819
    %v1821 = vpop.f32.mrb[0].mxu0
    %1822 = vdwg.mxu0
    %1823 = vmatprep.subr.mxu0 0.0
    %1824 = vmatpush1.msra.mxu0 %v221
    %1825 = vmatprep.subr.mxu0 0.0
    %1826 = vmatpush1.msra.mxu0 %v222
    %1827 = vmatprep.subr.mxu0 0.0
    %1828 = vmatpush1.msra.mxu0 %v223
    %1829 = vmatprep.subr.mxu0 0.0
    %1830 = vmatpush1.msra.mxu0 %v224
    %1831 = vmatprep.subr.mxu0 0.0
    %1832 = vmatpush1.msra.mxu0 0.0
    %1833 = vmatprep.subr.mxu0 0.0
    %1834 = vmatpush1.msra.mxu0 0.0
    %1835 = vmatprep.subr.mxu0 0.0
    %1836 = vmatpush1.msra.mxu0 0.0
    %1837 = vmatprep.subr.mxu0 0.0
    %1838 = vmatpush1.msra.mxu0 0.0
    %1839 = vmatprep.subr.mxu0 0.0
    %1840 = vmatpush1.msra.mxu0 0.0
    %1841 = vmatprep.subr.mxu0 0.0
    %1842 = vmatpush1.msra.mxu0 0.0
    %1843 = vmatprep.subr.mxu0 0.0
    %1844 = vmatpush1.msra.mxu0 0.0
    %1845 = vmatprep.subr.mxu0 0.0
    %1846 = vmatpush1.msra.mxu0 0.0
    %1847 = vmatprep.subr.mxu0 0.0
    %1848 = vmatpush1.msra.mxu0 0.0
    %1849 = vmatprep.subr.mxu0 0.0
    %1850 = vmatpush1.msra.mxu0 0.0
    %1851 = vmatprep.subr.mxu0 0.0
    %1852 = vmatpush1.msra.mxu0 0.0
    %1853 = vmatprep.subr.mxu0 0.0
    %1854 = vmatpush1.msra.mxu0 0.0
    %1855 = vmatprep.subr.mxu0 0.0
    %1856 = vmatpush1.msra.mxu0 0.0
    %1857 = vmatprep.subr.mxu0 0.0
    %1858 = vmatpush1.msra.mxu0 0.0
    %1859 = vmatprep.subr.mxu0 0.0
    %1860 = vmatpush1.msra.mxu0 0.0
    %1861 = vmatprep.subr.mxu0 0.0
    %1862 = vmatpush1.msra.mxu0 0.0
    %1863 = vmatprep.subr.mxu0 0.0
    %1864 = vmatpush1.msra.mxu0 0.0
    %1865 = vmatprep.subr.mxu0 0.0
    %1866 = vmatpush1.msra.mxu0 0.0
    %1867 = vmatprep.subr.mxu0 0.0
    %1868 = vmatpush1.msra.mxu0 0.0
    %1869 = vmatprep.subr.mxu0 0.0
    %1870 = vmatpush1.msra.mxu0 0.0
    %1871 = vmatprep.subr.mxu0 0.0
    %1872 = vmatpush1.msra.mxu0 0.0
    %1873 = vmatprep.subr.mxu0 0.0
    %1874 = vmatpush1.msra.mxu0 0.0
    %1875 = vmatprep.subr.mxu0 0.0
    %1876 = vmatpush1.msra.mxu0 0.0
    %1877 = vmatprep.subr.mxu0 0.0
    %1878 = vmatpush1.msra.mxu0 0.0
    %1879 = vmatprep.subr.mxu0 0.0
    %1880 = vmatpush1.msra.mxu0 0.0
    %1881 = vmatprep.subr.mxu0 0.0
    %1882 = vmatpush1.msra.mxu0 0.0
    %1883 = vmatprep.subr.mxu0 0.0
    %1884 = vmatpush1.msra.mxu0 0.0
    %1885 = vmatprep.subr.mxu0 0.0
    %1886 = vmatpush1.msra.mxu0 0.0
    %1887 = vmatprep.mubr.f32.mxu0 0.0
    %1888 = vmatmul.mubr.f32.gmra.mrb[0].mxu0 %v1581
    %v1889 = vpop.f32.mrb[0].mxu0
    %v1890 = vadd.f32 %v1820, %v1889
    %v1891 = vpop.f32.mrb[0].mxu0
    %1892 = vdwg.mxu0
    %v1893 = vadd.f32 %v1890, %v1011
    %v1894 = vxor.u32 %v1893, 2147483648
    %v1895 = vmul.f32 %v1894, 1.442695
    %v1896 = vpow.pop %v1895
    %v1897 = vadd.f32 %v1896, 1.0
    %v1898 = vrcp.pop %v1897
    %v1899 = vmul.f32 1.0, %v1898
    %v1900 = vtanh.pop %v1893
    %v1901 = vmul.f32 %v1899, %v1471
    %1903 = vrot.lane.b32.xlu0 %v1900, 32
    %v1904 = vpop.permute.xlu0 %1903
    %v1906 = vmul.f32 %v1899, %v1904
    %1908 = vrot.lane.b32.xlu0 %v1906, 32
    %v1909 = vpop.permute.xlu0 %1908
    %v1911 = vadd.f32 %v1901, %v1909
    %v1912 = vtanh.pop %v1911
    %1914 = vrot.lane.b32.xlu0 %v1912, 32
    %v1915 = vpop.permute.xlu0 %1914
    %v1917 = vmul.f32 %v1899, %v1915
    %1919 = vrot.lane.b32.xlu0 %v1577, 64
    %v1920 = vpop.permute.xlu0 %1919
    %v1921 = vsel %vm227, %v1920, 0
    %1923 = vmatprep.subr.mxu0 0.0
    %1924 = vmatpush1.msra.mxu0 %v205
    %1925 = vmatprep.subr.mxu0 0.0
    %1926 = vmatpush1.msra.mxu0 %v206
    %1927 = vmatprep.subr.mxu0 0.0
    %1928 = vmatpush1.msra.mxu0 %v207
    %1929 = vmatprep.subr.mxu0 0.0
    %1930 = vmatpush1.msra.mxu0 %v208
    %1931 = vmatprep.subr.mxu0 0.0
    %1932 = vmatpush1.msra.mxu0 0.0
    %1933 = vmatprep.subr.mxu0 0.0
    %1934 = vmatpush1.msra.mxu0 0.0
    %1935 = vmatprep.subr.mxu0 0.0
    %1936 = vmatpush1.msra.mxu0 0.0
    %1937 = vmatprep.subr.mxu0 0.0
    %1938 = vmatpush1.msra.mxu0 0.0
    %1939 = vmatprep.subr.mxu0 0.0
    %1940 = vmatpush1.msra.mxu0 0.0
    %1941 = vmatprep.subr.mxu0 0.0
    %1942 = vmatpush1.msra.mxu0 0.0
    %1943 = vmatprep.subr.mxu0 0.0
    %1944 = vmatpush1.msra.mxu0 0.0
    %1945 = vmatprep.subr.mxu0 0.0
    %1946 = vmatpush1.msra.mxu0 0.0
    %1947 = vmatprep.subr.mxu0 0.0
    %1948 = vmatpush1.msra.mxu0 0.0
    %1949 = vmatprep.subr.mxu0 0.0
    %1950 = vmatpush1.msra.mxu0 0.0
    %1951 = vmatprep.subr.mxu0 0.0
    %1952 = vmatpush1.msra.mxu0 0.0
    %1953 = vmatprep.subr.mxu0 0.0
    %1954 = vmatpush1.msra.mxu0 0.0
    %1955 = vmatprep.subr.mxu0 0.0
    %1956 = vmatpush1.msra.mxu0 0.0
    %1957 = vmatprep.subr.mxu0 0.0
    %1958 = vmatpush1.msra.mxu0 0.0
    %1959 = vmatprep.subr.mxu0 0.0
    %1960 = vmatpush1.msra.mxu0 0.0
    %1961 = vmatprep.subr.mxu0 0.0
    %1962 = vmatpush1.msra.mxu0 0.0
    %1963 = vmatprep.subr.mxu0 0.0
    %1964 = vmatpush1.msra.mxu0 0.0
    %1965 = vmatprep.subr.mxu0 0.0
    %1966 = vmatpush1.msra.mxu0 0.0
    %1967 = vmatprep.subr.mxu0 0.0
    %1968 = vmatpush1.msra.mxu0 0.0
    %1969 = vmatprep.subr.mxu0 0.0
    %1970 = vmatpush1.msra.mxu0 0.0
    %1971 = vmatprep.subr.mxu0 0.0
    %1972 = vmatpush1.msra.mxu0 0.0
    %1973 = vmatprep.subr.mxu0 0.0
    %1974 = vmatpush1.msra.mxu0 0.0
    %1975 = vmatprep.subr.mxu0 0.0
    %1976 = vmatpush1.msra.mxu0 0.0
    %1977 = vmatprep.subr.mxu0 0.0
    %1978 = vmatpush1.msra.mxu0 0.0
    %1979 = vmatprep.subr.mxu0 0.0
    %1980 = vmatpush1.msra.mxu0 0.0
    %1981 = vmatprep.subr.mxu0 0.0
    %1982 = vmatpush1.msra.mxu0 0.0
    %1983 = vmatprep.subr.mxu0 0.0
    %1984 = vmatpush1.msra.mxu0 0.0
    %1985 = vmatprep.subr.mxu0 0.0
    %1986 = vmatpush1.msra.mxu0 0.0
    %1987 = vmatprep.mubr.f32.mxu0 0.0
    %1988 = vmatmul.mubr.f32.gmra.mrb[0].mxu0 %v1921
    %v1989 = vpop.f32.mrb[0].mxu0
    %v1990 = vadd.f32 0.0, %v1989
    %v1991 = vpop.f32.mrb[0].mxu0
    %1992 = vdwg.mxu0
    %v1993 = vadd.f32 %v192, %v1990
    %v1994 = vxor.u32 %v1993, 2147483648
    %v1995 = vmul.f32 %v1994, 1.442695
    %v1996 = vpow.pop %v1995
    %v1997 = vadd.f32 %v1996, 1.0
    %v1998 = vrcp.pop %v1997
    %v1999 = vmul.f32 1.0, %v1998
    %v2000 = vtanh.pop %v1993
    %v2001 = vmul.f32 %v1999, %v1571
    %2003 = vrot.lane.b32.xlu0 %v2000, 32
    %v2004 = vpop.permute.xlu0 %2003
    %v2006 = vmul.f32 %v1999, %v2004
    %2008 = vrot.lane.b32.xlu0 %v2006, 32
    %v2009 = vpop.permute.xlu0 %2008
    %v2011 = vadd.f32 %v2001, %v2009
    %v2012 = vtanh.pop %v2011
    %2014 = vrot.lane.b32.xlu0 %v2012, 32
    %v2015 = vpop.permute.xlu0 %2014
    %v2017 = vmul.f32 %v1999, %v2015
    %2019 = vrot.lane.b32.xlu0 %v1747, 64
    %v2020 = vpop.permute.xlu0 %2019
    %v2021 = vsel %vm227, %v2020, 0
    %2023 = vmatprep.subr.mxu0 0.0
    %2024 = vmatpush1.msra.mxu0 %v209
    %2025 = vmatprep.subr.mxu0 0.0
    %2026 = vmatpush1.msra.mxu0 %v210
    %2027 = vmatprep.subr.mxu0 0.0
    %2028 = vmatpush1.msra.mxu0 %v211
    %2029 = vmatprep.subr.mxu0 0.0
    %2030 = vmatpush1.msra.mxu0 %v212
    %2031 = vmatprep.subr.mxu0 0.0
    %2032 = vmatpush1.msra.mxu0 0.0
    %2033 = vmatprep.subr.mxu0 0.0
    %2034 = vmatpush1.msra.mxu0 0.0
    %2035 = vmatprep.subr.mxu0 0.0
    %2036 = vmatpush1.msra.mxu0 0.0
    %2037 = vmatprep.subr.mxu0 0.0
    %2038 = vmatpush1.msra.mxu0 0.0
    %2039 = vmatprep.subr.mxu0 0.0
    %2040 = vmatpush1.msra.mxu0 0.0
    %2041 = vmatprep.subr.mxu0 0.0
    %2042 = vmatpush1.msra.mxu0 0.0
    %2043 = vmatprep.subr.mxu0 0.0
    %2044 = vmatpush1.msra.mxu0 0.0
    %2045 = vmatprep.subr.mxu0 0.0
    %2046 = vmatpush1.msra.mxu0 0.0
    %2047 = vmatprep.subr.mxu0 0.0
    %2048 = vmatpush1.msra.mxu0 0.0
    %2049 = vmatprep.subr.mxu0 0.0
    %2050 = vmatpush1.msra.mxu0 0.0
    %2051 = vmatprep.subr.mxu0 0.0
    %2052 = vmatpush1.msra.mxu0 0.0
    %2053 = vmatprep.subr.mxu0 0.0
    %2054 = vmatpush1.msra.mxu0 0.0
    %2055 = vmatprep.subr.mxu0 0.0
    %2056 = vmatpush1.msra.mxu0 0.0
    %2057 = vmatprep.subr.mxu0 0.0
    %2058 = vmatpush1.msra.mxu0 0.0
    %2059 = vmatprep.subr.mxu0 0.0
    %2060 = vmatpush1.msra.mxu0 0.0
    %2061 = vmatprep.subr.mxu0 0.0
    %2062 = vmatpush1.msra.mxu0 0.0
    %2063 = vmatprep.subr.mxu0 0.0
    %2064 = vmatpush1.msra.mxu0 0.0
    %2065 = vmatprep.subr.mxu0 0.0
    %2066 = vmatpush1.msra.mxu0 0.0
    %2067 = vmatprep.subr.mxu0 0.0
    %2068 = vmatpush1.msra.mxu0 0.0
    %2069 = vmatprep.subr.mxu0 0.0
    %2070 = vmatpush1.msra.mxu0 0.0
    %2071 = vmatprep.subr.mxu0 0.0
    %2072 = vmatpush1.msra.mxu0 0.0
    %2073 = vmatprep.subr.mxu0 0.0
    %2074 = vmatpush1.msra.mxu0 0.0
    %2075 = vmatprep.subr.mxu0 0.0
    %2076 = vmatpush1.msra.mxu0 0.0
    %2077 = vmatprep.subr.mxu0 0.0
    %2078 = vmatpush1.msra.mxu0 0.0
    %2079 = vmatprep.subr.mxu0 0.0
    %2080 = vmatpush1.msra.mxu0 0.0
    %2081 = vmatprep.subr.mxu0 0.0
    %2082 = vmatpush1.msra.mxu0 0.0
    %2083 = vmatprep.subr.mxu0 0.0
    %2084 = vmatpush1.msra.mxu0 0.0
    %2085 = vmatprep.subr.mxu0 0.0
    %2086 = vmatpush1.msra.mxu0 0.0
    %2087 = vmatprep.mubr.f32.mxu0 0.0
    %2088 = vmatmul.mubr.f32.gmra.mrb[0].mxu0 %v2021
    %v2089 = vpop.f32.mrb[0].mxu0
    %v2090 = vadd.f32 0.0, %v2089
    %v2091 = vpop.f32.mrb[0].mxu0
    %2092 = vdwg.mxu0
    %2093 = vmatprep.subr.mxu0 0.0
    %2094 = vmatpush1.msra.mxu0 %v217
    %2095 = vmatprep.subr.mxu0 0.0
    %2096 = vmatpush1.msra.mxu0 %v218
    %2097 = vmatprep.subr.mxu0 0.0
    %2098 = vmatpush1.msra.mxu0 %v219
    %2099 = vmatprep.subr.mxu0 0.0
    %2100 = vmatpush1.msra.mxu0 %v220
    %2101 = vmatprep.subr.mxu0 0.0
    %2102 = vmatpush1.msra.mxu0 0.0
    %2103 = vmatprep.subr.mxu0 0.0
    %2104 = vmatpush1.msra.mxu0 0.0
    %2105 = vmatprep.subr.mxu0 0.0
    %2106 = vmatpush1.msra.mxu0 0.0
    %2107 = vmatprep.subr.mxu0 0.0
    %2108 = vmatpush1.msra.mxu0 0.0
    %2109 = vmatprep.subr.mxu0 0.0
    %2110 = vmatpush1.msra.mxu0 0.0
    %2111 = vmatprep.subr.mxu0 0.0
    %2112 = vmatpush1.msra.mxu0 0.0
    %2113 = vmatprep.subr.mxu0 0.0
    %2114 = vmatpush1.msra.mxu0 0.0
    %2115 = vmatprep.subr.mxu0 0.0
    %2116 = vmatpush1.msra.mxu0 0.0
    %2117 = vmatprep.subr.mxu0 0.0
    %2118 = vmatpush1.msra.mxu0 0.0
    %2119 = vmatprep.subr.mxu0 0.0
    %2120 = vmatpush1.msra.mxu0 0.0
    %2121 = vmatprep.subr.mxu0 0.0
    %2122 = vmatpush1.msra.mxu0 0.0
    %2123 = vmatprep.subr.mxu0 0.0
    %2124 = vmatpush1.msra.mxu0 0.0
    %2125 = vmatprep.subr.mxu0 0.0
    %2126 = vmatpush1.msra.mxu0 0.0
    %2127 = vmatprep.subr.mxu0 0.0
    %2128 = vmatpush1.msra.mxu0 0.0
    %2129 = vmatprep.subr.mxu0 0.0
    %2130 = vmatpush1.msra.mxu0 0.0
    %2131 = vmatprep.subr.mxu0 0.0
    %2132 = vmatpush1.msra.mxu0 0.0
    %2133 = vmatprep.subr.mxu0 0.0
    %2134 = vmatpush1.msra.mxu0 0.0
    %2135 = vmatprep.subr.mxu0 0.0
    %2136 = vmatpush1.msra.mxu0 0.0
    %2137 = vmatprep.subr.mxu0 0.0
    %2138 = vmatpush1.msra.mxu0 0.0
    %2139 = vmatprep.subr.mxu0 0.0
    %2140 = vmatpush1.msra.mxu0 0.0
    %2141 = vmatprep.subr.mxu0 0.0
    %2142 = vmatpush1.msra.mxu0 0.0
    %2143 = vmatprep.subr.mxu0 0.0
    %2144 = vmatpush1.msra.mxu0 0.0
    %2145 = vmatprep.subr.mxu0 0.0
    %2146 = vmatpush1.msra.mxu0 0.0
    %2147 = vmatprep.subr.mxu0 0.0
    %2148 = vmatpush1.msra.mxu0 0.0
    %2149 = vmatprep.subr.mxu0 0.0
    %2150 = vmatpush1.msra.mxu0 0.0
    %2151 = vmatprep.subr.mxu0 0.0
    %2152 = vmatpush1.msra.mxu0 0.0
    %2153 = vmatprep.subr.mxu0 0.0
    %2154 = vmatpush1.msra.mxu0 0.0
    %2155 = vmatprep.subr.mxu0 0.0
    %2156 = vmatpush1.msra.mxu0 0.0
    %2157 = vmatprep.mubr.f32.mxu0 0.0
    %2158 = vmatmul.mubr.f32.gmra.mrb[0].mxu0 %v1921
    %v2159 = vpop.f32.mrb[0].mxu0
    %v2160 = vadd.f32 %v2090, %v2159
    %v2161 = vpop.f32.mrb[0].mxu0
    %2162 = vdwg.mxu0
    %v2163 = vadd.f32 %v2160, %v570
    %v2164 = vxor.u32 %v2163, 2147483648
    %v2165 = vmul.f32 %v2164, 1.442695
    %v2166 = vpow.pop %v2165
    %v2167 = vadd.f32 %v2166, 1.0
    %v2168 = vrcp.pop %v2167
    %v2169 = vmul.f32 1.0, %v2168
    %v2170 = vtanh.pop %v2163
    %v2171 = vmul.f32 %v2169, %v1741
    %2173 = vrot.lane.b32.xlu0 %v2170, 32
    %v2174 = vpop.permute.xlu0 %2173
    %v2176 = vmul.f32 %v2169, %v2174
    %2178 = vrot.lane.b32.xlu0 %v2176, 32
    %v2179 = vpop.permute.xlu0 %2178
    %v2181 = vadd.f32 %v2171, %v2179
    %v2182 = vtanh.pop %v2181
    %2184 = vrot.lane.b32.xlu0 %v2182, 32
    %v2185 = vpop.permute.xlu0 %2184
    %v2187 = vmul.f32 %v2169, %v2185
    %2189 = vrot.lane.b32.xlu0 %v1917, 64
    %v2190 = vpop.permute.xlu0 %2189
    %v2191 = vsel %vm227, %v2190, 0
    %2193 = vmatprep.subr.mxu0 0.0
    %2194 = vmatpush1.msra.mxu0 %v213
    %2195 = vmatprep.subr.mxu0 0.0
    %2196 = vmatpush1.msra.mxu0 %v214
    %2197 = vmatprep.subr.mxu0 0.0
    %2198 = vmatpush1.msra.mxu0 %v215
    %2199 = vmatprep.subr.mxu0 0.0
    %2200 = vmatpush1.msra.mxu0 %v216
    %2201 = vmatprep.subr.mxu0 0.0
    %2202 = vmatpush1.msra.mxu0 0.0
    %2203 = vmatprep.subr.mxu0 0.0
    %2204 = vmatpush1.msra.mxu0 0.0
    %2205 = vmatprep.subr.mxu0 0.0
    %2206 = vmatpush1.msra.mxu0 0.0
    %2207 = vmatprep.subr.mxu0 0.0
    %2208 = vmatpush1.msra.mxu0 0.0
    %2209 = vmatprep.subr.mxu0 0.0
    %2210 = vmatpush1.msra.mxu0 0.0
    %2211 = vmatprep.subr.mxu0 0.0
    %2212 = vmatpush1.msra.mxu0 0.0
    %2213 = vmatprep.subr.mxu0 0.0
    %2214 = vmatpush1.msra.mxu0 0.0
    %2215 = vmatprep.subr.mxu0 0.0
    %2216 = vmatpush1.msra.mxu0 0.0
    %2217 = vmatprep.subr.mxu0 0.0
    %2218 = vmatpush1.msra.mxu0 0.0
    %2219 = vmatprep.subr.mxu0 0.0
    %2220 = vmatpush1.msra.mxu0 0.0
    %2221 = vmatprep.subr.mxu0 0.0
    %2222 = vmatpush1.msra.mxu0 0.0
    %2223 = vmatprep.subr.mxu0 0.0
    %2224 = vmatpush1.msra.mxu0 0.0
    %2225 = vmatprep.subr.mxu0 0.0
    %2226 = vmatpush1.msra.mxu0 0.0
    %2227 = vmatprep.subr.mxu0 0.0
    %2228 = vmatpush1.msra.mxu0 0.0
    %2229 = vmatprep.subr.mxu0 0.0
    %2230 = vmatpush1.msra.mxu0 0.0
    %2231 = vmatprep.subr.mxu0 0.0
    %2232 = vmatpush1.msra.mxu0 0.0
    %2233 = vmatprep.subr.mxu0 0.0
    %2234 = vmatpush1.msra.mxu0 0.0
    %2235 = vmatprep.subr.mxu0 0.0
    %2236 = vmatpush1.msra.mxu0 0.0
    %2237 = vmatprep.subr.mxu0 0.0
    %2238 = vmatpush1.msra.mxu0 0.0
    %2239 = vmatprep.subr.mxu0 0.0
    %2240 = vmatpush1.msra.mxu0 0.0
    %2241 = vmatprep.subr.mxu0 0.0
    %2242 = vmatpush1.msra.mxu0 0.0
    %2243 = vmatprep.subr.mxu0 0.0
    %2244 = vmatpush1.msra.mxu0 0.0
    %2245 = vmatprep.subr.mxu0 0.0
    %2246 = vmatpush1.msra.mxu0 0.0
    %2247 = vmatprep.subr.mxu0 0.0
    %2248 = vmatpush1.msra.mxu0 0.0
    %2249 = vmatprep.subr.mxu0 0.0
    %2250 = vmatpush1.msra.mxu0 0.0
    %2251 = vmatprep.subr.mxu0 0.0
    %2252 = vmatpush1.msra.mxu0 0.0
    %2253 = vmatprep.subr.mxu0 0.0
    %2254 = vmatpush1.msra.mxu0 0.0
    %2255 = vmatprep.subr.mxu0 0.0
    %2256 = vmatpush1.msra.mxu0 0.0
    %2257 = vmatprep.mubr.f32.mxu0 0.0
    %2258 = vmatmul.mubr.f32.gmra.mrb[0].mxu0 %v2191
    %v2259 = vpop.f32.mrb[0].mxu0
    %v2260 = vadd.f32 0.0, %v2259
    %v2261 = vpop.f32.mrb[0].mxu0
    %2262 = vdwg.mxu0
    %2263 = vmatprep.subr.mxu0 0.0
    %2264 = vmatpush1.msra.mxu0 %v221
    %2265 = vmatprep.subr.mxu0 0.0
    %2266 = vmatpush1.msra.mxu0 %v222
    %2267 = vmatprep.subr.mxu0 0.0
    %2268 = vmatpush1.msra.mxu0 %v223
    %2269 = vmatprep.subr.mxu0 0.0
    %2270 = vmatpush1.msra.mxu0 %v224
    %2271 = vmatprep.subr.mxu0 0.0
    %2272 = vmatpush1.msra.mxu0 0.0
    %2273 = vmatprep.subr.mxu0 0.0
    %2274 = vmatpush1.msra.mxu0 0.0
    %2275 = vmatprep.subr.mxu0 0.0
    %2276 = vmatpush1.msra.mxu0 0.0
    %2277 = vmatprep.subr.mxu0 0.0
    %2278 = vmatpush1.msra.mxu0 0.0
    %2279 = vmatprep.subr.mxu0 0.0
    %2280 = vmatpush1.msra.mxu0 0.0
    %2281 = vmatprep.subr.mxu0 0.0
    %2282 = vmatpush1.msra.mxu0 0.0
    %2283 = vmatprep.subr.mxu0 0.0
    %2284 = vmatpush1.msra.mxu0 0.0
    %2285 = vmatprep.subr.mxu0 0.0
    %2286 = vmatpush1.msra.mxu0 0.0
    %2287 = vmatprep.subr.mxu0 0.0
    %2288 = vmatpush1.msra.mxu0 0.0
    %2289 = vmatprep.subr.mxu0 0.0
    %2290 = vmatpush1.msra.mxu0 0.0
    %2291 = vmatprep.subr.mxu0 0.0
    %2292 = vmatpush1.msra.mxu0 0.0
    %2293 = vmatprep.subr.mxu0 0.0
    %2294 = vmatpush1.msra.mxu0 0.0
    %2295 = vmatprep.subr.mxu0 0.0
    %2296 = vmatpush1.msra.mxu0 0.0
    %2297 = vmatprep.subr.mxu0 0.0
    %2298 = vmatpush1.msra.mxu0 0.0
    %2299 = vmatprep.subr.mxu0 0.0
    %2300 = vmatpush1.msra.mxu0 0.0
    %2301 = vmatprep.subr.mxu0 0.0
    %2302 = vmatpush1.msra.mxu0 0.0
    %2303 = vmatprep.subr.mxu0 0.0
    %2304 = vmatpush1.msra.mxu0 0.0
    %2305 = vmatprep.subr.mxu0 0.0
    %2306 = vmatpush1.msra.mxu0 0.0
    %2307 = vmatprep.subr.mxu0 0.0
    %2308 = vmatpush1.msra.mxu0 0.0
    %2309 = vmatprep.subr.mxu0 0.0
    %2310 = vmatpush1.msra.mxu0 0.0
    %2311 = vmatprep.subr.mxu0 0.0
    %2312 = vmatpush1.msra.mxu0 0.0
    %2313 = vmatprep.subr.mxu0 0.0
    %2314 = vmatpush1.msra.mxu0 0.0
    %2315 = vmatprep.subr.mxu0 0.0
    %2316 = vmatpush1.msra.mxu0 0.0
    %2317 = vmatprep.subr.mxu0 0.0
    %2318 = vmatpush1.msra.mxu0 0.0
    %2319 = vmatprep.subr.mxu0 0.0
    %2320 = vmatpush1.msra.mxu0 0.0
    %2321 = vmatprep.subr.mxu0 0.0
    %2322 = vmatpush1.msra.mxu0 0.0
    %2323 = vmatprep.subr.mxu0 0.0
    %2324 = vmatpush1.msra.mxu0 0.0
    %2325 = vmatprep.subr.mxu0 0.0
    %2326 = vmatpush1.msra.mxu0 0.0
    %2327 = vmatprep.mubr.f32.mxu0 0.0
    %2328 = vmatmul.mubr.f32.gmra.mrb[0].mxu0 %v2021
    %v2329 = vpop.f32.mrb[0].mxu0
    %v2330 = vadd.f32 %v2260, %v2329
    %v2331 = vpop.f32.mrb[0].mxu0
    %2332 = vdwg.mxu0
    %v2333 = vadd.f32 %v2330, %v1011
    %v2334 = vxor.u32 %v2333, 2147483648
    %v2335 = vmul.f32 %v2334, 1.442695
    %v2336 = vpow.pop %v2335
    %v2337 = vadd.f32 %v2336, 1.0
    %v2338 = vrcp.pop %v2337
    %v2339 = vmul.f32 1.0, %v2338
    %v2340 = vtanh.pop %v2333
    %v2341 = vmul.f32 %v2339, %v1911
    %2343 = vrot.lane.b32.xlu0 %v2340, 32
    %v2344 = vpop.permute.xlu0 %2343
    %v2346 = vmul.f32 %v2339, %v2344
    %2348 = vrot.lane.b32.xlu0 %v2346, 32
    %v2349 = vpop.permute.xlu0 %2348
    %v2351 = vadd.f32 %v2341, %v2349
    %v2352 = vtanh.pop %v2351
    %2354 = vrot.lane.b32.xlu0 %v2352, 32
    %v2355 = vpop.permute.xlu0 %2354
    %v2357 = vmul.f32 %v2339, %v2355
    %2359 = vrot.lane.b32.xlu0 %v2017, 64
    %v2360 = vpop.permute.xlu0 %2359
    %v2361 = vsel %vm227, %v2360, 0
    %2363 = vmatprep.subr.mxu0 0.0
    %2364 = vmatpush1.msra.mxu0 %v205
    %2365 = vmatprep.subr.mxu0 0.0
    %2366 = vmatpush1.msra.mxu0 %v206
    %2367 = vmatprep.subr.mxu0 0.0
    %2368 = vmatpush1.msra.mxu0 %v207
    %2369 = vmatprep.subr.mxu0 0.0
    %2370 = vmatpush1.msra.mxu0 %v208
    %2371 = vmatprep.subr.mxu0 0.0
    %2372 = vmatpush1.msra.mxu0 0.0
    %2373 = vmatprep.subr.mxu0 0.0
    %2374 = vmatpush1.msra.mxu0 0.0
    %2375 = vmatprep.subr.mxu0 0.0
    %2376 = vmatpush1.msra.mxu0 0.0
    %2377 = vmatprep.subr.mxu0 0.0
    %2378 = vmatpush1.msra.mxu0 0.0
    %2379 = vmatprep.subr.mxu0 0.0
    %2380 = vmatpush1.msra.mxu0 0.0
    %2381 = vmatprep.subr.mxu0 0.0
    %2382 = vmatpush1.msra.mxu0 0.0
    %2383 = vmatprep.subr.mxu0 0.0
    %2384 = vmatpush1.msra.mxu0 0.0
    %2385 = vmatprep.subr.mxu0 0.0
    %2386 = vmatpush1.msra.mxu0 0.0
    %2387 = vmatprep.subr.mxu0 0.0
    %2388 = vmatpush1.msra.mxu0 0.0
    %2389 = vmatprep.subr.mxu0 0.0
    %2390 = vmatpush1.msra.mxu0 0.0
    %2391 = vmatprep.subr.mxu0 0.0
    %2392 = vmatpush1.msra.mxu0 0.0
    %2393 = vmatprep.subr.mxu0 0.0
    %2394 = vmatpush1.msra.mxu0 0.0
    %2395 = vmatprep.subr.mxu0 0.0
    %2396 = vmatpush1.msra.mxu0 0.0
    %2397 = vmatprep.subr.mxu0 0.0
    %2398 = vmatpush1.msra.mxu0 0.0
    %2399 = vmatprep.subr.mxu0 0.0
    %2400 = vmatpush1.msra.mxu0 0.0
    %2401 = vmatprep.subr.mxu0 0.0
    %2402 = vmatpush1.msra.mxu0 0.0
    %2403 = vmatprep.subr.mxu0 0.0
    %2404 = vmatpush1.msra.mxu0 0.0
    %2405 = vmatprep.subr.mxu0 0.0
    %2406 = vmatpush1.msra.mxu0 0.0
    %2407 = vmatprep.subr.mxu0 0.0
    %2408 = vmatpush1.msra.mxu0 0.0
    %2409 = vmatprep.subr.mxu0 0.0
    %2410 = vmatpush1.msra.mxu0 0.0
    %2411 = vmatprep.subr.mxu0 0.0
    %2412 = vmatpush1.msra.mxu0 0.0
    %2413 = vmatprep.subr.mxu0 0.0
    %2414 = vmatpush1.msra.mxu0 0.0
    %2415 = vmatprep.subr.mxu0 0.0
    %2416 = vmatpush1.msra.mxu0 0.0
    %2417 = vmatprep.subr.mxu0 0.0
    %2418 = vmatpush1.msra.mxu0 0.0
    %2419 = vmatprep.subr.mxu0 0.0
    %2420 = vmatpush1.msra.mxu0 0.0
    %2421 = vmatprep.subr.mxu0 0.0
    %2422 = vmatpush1.msra.mxu0 0.0
    %2423 = vmatprep.subr.mxu0 0.0
    %2424 = vmatpush1.msra.mxu0 0.0
    %2425 = vmatprep.subr.mxu0 0.0
    %2426 = vmatpush1.msra.mxu0 0.0
    %2427 = vmatprep.mubr.f32.mxu0 0.0
    %2428 = vmatmul.mubr.f32.gmra.mrb[0].mxu0 %v2361
    %v2429 = vpop.f32.mrb[0].mxu0
    %v2430 = vadd.f32 0.0, %v2429
    %v2431 = vpop.f32.mrb[0].mxu0
    %2432 = vdwg.mxu0
    %v2433 = vadd.f32 %v197, %v2430
    %v2434 = vxor.u32 %v2433, 2147483648
    %v2435 = vmul.f32 %v2434, 1.442695
    %v2436 = vpow.pop %v2435
    %v2437 = vadd.f32 %v2436, 1.0
    %v2438 = vrcp.pop %v2437
    %v2439 = vmul.f32 1.0, %v2438
    %v2440 = vtanh.pop %v2433
    %v2441 = vmul.f32 %v2439, %v2011
    %2443 = vrot.lane.b32.xlu0 %v2440, 32
    %v2444 = vpop.permute.xlu0 %2443
    %v2446 = vmul.f32 %v2439, %v2444
    %2448 = vrot.lane.b32.xlu0 %v2446, 32
    %v2449 = vpop.permute.xlu0 %2448
    %v2451 = vadd.f32 %v2441, %v2449
    %v2452 = vtanh.pop %v2451
    %2454 = vrot.lane.b32.xlu0 %v2452, 32
    %v2455 = vpop.permute.xlu0 %2454
    %v2457 = vmul.f32 %v2439, %v2455
    %2459 = vrot.lane.b32.xlu0 %v2187, 64
    %v2460 = vpop.permute.xlu0 %2459
    %v2461 = vsel %vm227, %v2460, 0
    %2463 = vmatprep.subr.mxu0 0.0
    %2464 = vmatpush1.msra.mxu0 %v209
    %2465 = vmatprep.subr.mxu0 0.0
    %2466 = vmatpush1.msra.mxu0 %v210
    %2467 = vmatprep.subr.mxu0 0.0
    %2468 = vmatpush1.msra.mxu0 %v211
    %2469 = vmatprep.subr.mxu0 0.0
    %2470 = vmatpush1.msra.mxu0 %v212
    %2471 = vmatprep.subr.mxu0 0.0
    %2472 = vmatpush1.msra.mxu0 0.0
    %2473 = vmatprep.subr.mxu0 0.0
    %2474 = vmatpush1.msra.mxu0 0.0
    %2475 = vmatprep.subr.mxu0 0.0
    %2476 = vmatpush1.msra.mxu0 0.0
    %2477 = vmatprep.subr.mxu0 0.0
    %2478 = vmatpush1.msra.mxu0 0.0
    %2479 = vmatprep.subr.mxu0 0.0
    %2480 = vmatpush1.msra.mxu0 0.0
    %2481 = vmatprep.subr.mxu0 0.0
    %2482 = vmatpush1.msra.mxu0 0.0
    %2483 = vmatprep.subr.mxu0 0.0
    %2484 = vmatpush1.msra.mxu0 0.0
    %2485 = vmatprep.subr.mxu0 0.0
    %2486 = vmatpush1.msra.mxu0 0.0
    %2487 = vmatprep.subr.mxu0 0.0
    %2488 = vmatpush1.msra.mxu0 0.0
    %2489 = vmatprep.subr.mxu0 0.0
    %2490 = vmatpush1.msra.mxu0 0.0
    %2491 = vmatprep.subr.mxu0 0.0
    %2492 = vmatpush1.msra.mxu0 0.0
    %2493 = vmatprep.subr.mxu0 0.0
    %2494 = vmatpush1.msra.mxu0 0.0
    %2495 = vmatprep.subr.mxu0 0.0
    %2496 = vmatpush1.msra.mxu0 0.0
    %2497 = vmatprep.subr.mxu0 0.0
    %2498 = vmatpush1.msra.mxu0 0.0
    %2499 = vmatprep.subr.mxu0 0.0
    %2500 = vmatpush1.msra.mxu0 0.0
    %2501 = vmatprep.subr.mxu0 0.0
    %2502 = vmatpush1.msra.mxu0 0.0
    %2503 = vmatprep.subr.mxu0 0.0
    %2504 = vmatpush1.msra.mxu0 0.0
    %2505 = vmatprep.subr.mxu0 0.0
    %2506 = vmatpush1.msra.mxu0 0.0
    %2507 = vmatprep.subr.mxu0 0.0
    %2508 = vmatpush1.msra.mxu0 0.0
    %2509 = vmatprep.subr.mxu0 0.0
    %2510 = vmatpush1.msra.mxu0 0.0
    %2511 = vmatprep.subr.mxu0 0.0
    %2512 = vmatpush1.msra.mxu0 0.0
    %2513 = vmatprep.subr.mxu0 0.0
    %2514 = vmatpush1.msra.mxu0 0.0
    %2515 = vmatprep.subr.mxu0 0.0
    %2516 = vmatpush1.msra.mxu0 0.0
    %2517 = vmatprep.subr.mxu0 0.0
    %2518 = vmatpush1.msra.mxu0 0.0
    %2519 = vmatprep.subr.mxu0 0.0
    %2520 = vmatpush1.msra.mxu0 0.0
    %2521 = vmatprep.subr.mxu0 0.0
    %2522 = vmatpush1.msra.mxu0 0.0
    %2523 = vmatprep.subr.mxu0 0.0
    %2524 = vmatpush1.msra.mxu0 0.0
    %2525 = vmatprep.subr.mxu0 0.0
    %2526 = vmatpush1.msra.mxu0 0.0
    %2527 = vmatprep.mubr.f32.mxu0 0.0
    %2528 = vmatmul.mubr.f32.gmra.mrb[0].mxu0 %v2461
    %v2529 = vpop.f32.mrb[0].mxu0
    %v2530 = vadd.f32 0.0, %v2529
    %v2531 = vpop.f32.mrb[0].mxu0
    %2532 = vdwg.mxu0
    %2533 = vmatprep.subr.mxu0 0.0
    %2534 = vmatpush1.msra.mxu0 %v217
    %2535 = vmatprep.subr.mxu0 0.0
    %2536 = vmatpush1.msra.mxu0 %v218
    %2537 = vmatprep.subr.mxu0 0.0
    %2538 = vmatpush1.msra.mxu0 %v219
    %2539 = vmatprep.subr.mxu0 0.0
    %2540 = vmatpush1.msra.mxu0 %v220
    %2541 = vmatprep.subr.mxu0 0.0
    %2542 = vmatpush1.msra.mxu0 0.0
    %2543 = vmatprep.subr.mxu0 0.0
    %2544 = vmatpush1.msra.mxu0 0.0
    %2545 = vmatprep.subr.mxu0 0.0
    %2546 = vmatpush1.msra.mxu0 0.0
    %2547 = vmatprep.subr.mxu0 0.0
    %2548 = vmatpush1.msra.mxu0 0.0
    %2549 = vmatprep.subr.mxu0 0.0
    %2550 = vmatpush1.msra.mxu0 0.0
    %2551 = vmatprep.subr.mxu0 0.0
    %2552 = vmatpush1.msra.mxu0 0.0
    %2553 = vmatprep.subr.mxu0 0.0
    %2554 = vmatpush1.msra.mxu0 0.0
    %2555 = vmatprep.subr.mxu0 0.0
    %2556 = vmatpush1.msra.mxu0 0.0
    %2557 = vmatprep.subr.mxu0 0.0
    %2558 = vmatpush1.msra.mxu0 0.0
    %2559 = vmatprep.subr.mxu0 0.0
    %2560 = vmatpush1.msra.mxu0 0.0
    %2561 = vmatprep.subr.mxu0 0.0
    %2562 = vmatpush1.msra.mxu0 0.0
    %2563 = vmatprep.subr.mxu0 0.0
    %2564 = vmatpush1.msra.mxu0 0.0
    %2565 = vmatprep.subr.mxu0 0.0
    %2566 = vmatpush1.msra.mxu0 0.0
    %2567 = vmatprep.subr.mxu0 0.0
    %2568 = vmatpush1.msra.mxu0 0.0
    %2569 = vmatprep.subr.mxu0 0.0
    %2570 = vmatpush1.msra.mxu0 0.0
    %2571 = vmatprep.subr.mxu0 0.0
    %2572 = vmatpush1.msra.mxu0 0.0
    %2573 = vmatprep.subr.mxu0 0.0
    %2574 = vmatpush1.msra.mxu0 0.0
    %2575 = vmatprep.subr.mxu0 0.0
    %2576 = vmatpush1.msra.mxu0 0.0
    %2577 = vmatprep.subr.mxu0 0.0
    %2578 = vmatpush1.msra.mxu0 0.0
    %2579 = vmatprep.subr.mxu0 0.0
    %2580 = vmatpush1.msra.mxu0 0.0
    %2581 = vmatprep.subr.mxu0 0.0
    %2582 = vmatpush1.msra.mxu0 0.0
    %2583 = vmatprep.subr.mxu0 0.0
    %2584 = vmatpush1.msra.mxu0 0.0
    %2585 = vmatprep.subr.mxu0 0.0
    %2586 = vmatpush1.msra.mxu0 0.0
    %2587 = vmatprep.subr.mxu0 0.0
    %2588 = vmatpush1.msra.mxu0 0.0
    %2589 = vmatprep.subr.mxu0 0.0
    %2590 = vmatpush1.msra.mxu0 0.0
    %2591 = vmatprep.subr.mxu0 0.0
    %2592 = vmatpush1.msra.mxu0 0.0
    %2593 = vmatprep.subr.mxu0 0.0
    %2594 = vmatpush1.msra.mxu0 0.0
    %2595 = vmatprep.subr.mxu0 0.0
    %2596 = vmatpush1.msra.mxu0 0.0
    %2597 = vmatprep.mubr.f32.mxu0 0.0
    %2598 = vmatmul.mubr.f32.gmra.mrb[0].mxu0 %v2361
    %v2599 = vpop.f32.mrb[0].mxu0
    %v2600 = vadd.f32 %v2530, %v2599
    %v2601 = vpop.f32.mrb[0].mxu0
    %2602 = vdwg.mxu0
    %v2603 = vadd.f32 %v2600, %v570
    %v2604 = vxor.u32 %v2603, 2147483648
    %v2605 = vmul.f32 %v2604, 1.442695
    %v2606 = vpow.pop %v2605
    %v2607 = vadd.f32 %v2606, 1.0
    %v2608 = vrcp.pop %v2607
    %v2609 = vmul.f32 1.0, %v2608
    %v2610 = vtanh.pop %v2603
    %v2611 = vmul.f32 %v2609, %v2181
    %2613 = vrot.lane.b32.xlu0 %v2610, 32
    %v2614 = vpop.permute.xlu0 %2613
    %v2616 = vmul.f32 %v2609, %v2614
    %2618 = vrot.lane.b32.xlu0 %v2616, 32
    %v2619 = vpop.permute.xlu0 %2618
    %v2621 = vadd.f32 %v2611, %v2619
    %v2622 = vtanh.pop %v2621
    %2624 = vrot.lane.b32.xlu0 %v2622, 32
    %v2625 = vpop.permute.xlu0 %2624
    %v2627 = vmul.f32 %v2609, %v2625
    %2629 = vrot.lane.b32.xlu0 %v2357, 64
    %v2630 = vpop.permute.xlu0 %2629
    %v2631 = vsel %vm227, %v2630, 0
    %2633 = vmatprep.subr.mxu0 0.0
    %2634 = vmatpush1.msra.mxu0 %v213
    %2635 = vmatprep.subr.mxu0 0.0
    %2636 = vmatpush1.msra.mxu0 %v214
    %2637 = vmatprep.subr.mxu0 0.0
    %2638 = vmatpush1.msra.mxu0 %v215
    %2639 = vmatprep.subr.mxu0 0.0
    %2640 = vmatpush1.msra.mxu0 %v216
    %2641 = vmatprep.subr.mxu0 0.0
    %2642 = vmatpush1.msra.mxu0 0.0
    %2643 = vmatprep.subr.mxu0 0.0
    %2644 = vmatpush1.msra.mxu0 0.0
    %2645 = vmatprep.subr.mxu0 0.0
    %2646 = vmatpush1.msra.mxu0 0.0
    %2647 = vmatprep.subr.mxu0 0.0
    %2648 = vmatpush1.msra.mxu0 0.0
    %2649 = vmatprep.subr.mxu0 0.0
    %2650 = vmatpush1.msra.mxu0 0.0
    %2651 = vmatprep.subr.mxu0 0.0
    %2652 = vmatpush1.msra.mxu0 0.0
    %2653 = vmatprep.subr.mxu0 0.0
    %2654 = vmatpush1.msra.mxu0 0.0
    %2655 = vmatprep.subr.mxu0 0.0
    %2656 = vmatpush1.msra.mxu0 0.0
    %2657 = vmatprep.subr.mxu0 0.0
    %2658 = vmatpush1.msra.mxu0 0.0
    %2659 = vmatprep.subr.mxu0 0.0
    %2660 = vmatpush1.msra.mxu0 0.0
    %2661 = vmatprep.subr.mxu0 0.0
    %2662 = vmatpush1.msra.mxu0 0.0
    %2663 = vmatprep.subr.mxu0 0.0
    %2664 = vmatpush1.msra.mxu0 0.0
    %2665 = vmatprep.subr.mxu0 0.0
    %2666 = vmatpush1.msra.mxu0 0.0
    %2667 = vmatprep.subr.mxu0 0.0
    %2668 = vmatpush1.msra.mxu0 0.0
    %2669 = vmatprep.subr.mxu0 0.0
    %2670 = vmatpush1.msra.mxu0 0.0
    %2671 = vmatprep.subr.mxu0 0.0
    %2672 = vmatpush1.msra.mxu0 0.0
    %2673 = vmatprep.subr.mxu0 0.0
    %2674 = vmatpush1.msra.mxu0 0.0
    %2675 = vmatprep.subr.mxu0 0.0
    %2676 = vmatpush1.msra.mxu0 0.0
    %2677 = vmatprep.subr.mxu0 0.0
    %2678 = vmatpush1.msra.mxu0 0.0
    %2679 = vmatprep.subr.mxu0 0.0
    %2680 = vmatpush1.msra.mxu0 0.0
    %2681 = vmatprep.subr.mxu0 0.0
    %2682 = vmatpush1.msra.mxu0 0.0
    %2683 = vmatprep.subr.mxu0 0.0
    %2684 = vmatpush1.msra.mxu0 0.0
    %2685 = vmatprep.subr.mxu0 0.0
    %2686 = vmatpush1.msra.mxu0 0.0
    %2687 = vmatprep.subr.mxu0 0.0
    %2688 = vmatpush1.msra.mxu0 0.0
    %2689 = vmatprep.subr.mxu0 0.0
    %2690 = vmatpush1.msra.mxu0 0.0
    %2691 = vmatprep.subr.mxu0 0.0
    %2692 = vmatpush1.msra.mxu0 0.0
    %2693 = vmatprep.subr.mxu0 0.0
    %2694 = vmatpush1.msra.mxu0 0.0
    %2695 = vmatprep.subr.mxu0 0.0
    %2696 = vmatpush1.msra.mxu0 0.0
    %2697 = vmatprep.mubr.f32.mxu0 0.0
    %2698 = vmatmul.mubr.f32.gmra.mrb[0].mxu0 %v2631
    %v2699 = vpop.f32.mrb[0].mxu0
    %v2700 = vadd.f32 0.0, %v2699
    %v2701 = vpop.f32.mrb[0].mxu0
    %2702 = vdwg.mxu0
    %2703 = vmatprep.subr.mxu0 0.0
    %2704 = vmatpush1.msra.mxu0 %v221
    %2705 = vmatprep.subr.mxu0 0.0
    %2706 = vmatpush1.msra.mxu0 %v222
    %2707 = vmatprep.subr.mxu0 0.0
    %2708 = vmatpush1.msra.mxu0 %v223
    %2709 = vmatprep.subr.mxu0 0.0
    %2710 = vmatpush1.msra.mxu0 %v224
    %2711 = vmatprep.subr.mxu0 0.0
    %2712 = vmatpush1.msra.mxu0 0.0
    %2713 = vmatprep.subr.mxu0 0.0
    %2714 = vmatpush1.msra.mxu0 0.0
    %2715 = vmatprep.subr.mxu0 0.0
    %2716 = vmatpush1.msra.mxu0 0.0
    %2717 = vmatprep.subr.mxu0 0.0
    %2718 = vmatpush1.msra.mxu0 0.0
    %2719 = vmatprep.subr.mxu0 0.0
    %2720 = vmatpush1.msra.mxu0 0.0
    %2721 = vmatprep.subr.mxu0 0.0
    %2722 = vmatpush1.msra.mxu0 0.0
    %2723 = vmatprep.subr.mxu0 0.0
    %2724 = vmatpush1.msra.mxu0 0.0
    %2725 = vmatprep.subr.mxu0 0.0
    %2726 = vmatpush1.msra.mxu0 0.0
    %2727 = vmatprep.subr.mxu0 0.0
    %2728 = vmatpush1.msra.mxu0 0.0
    %2729 = vmatprep.subr.mxu0 0.0
    %2730 = vmatpush1.msra.mxu0 0.0
    %2731 = vmatprep.subr.mxu0 0.0
    %2732 = vmatpush1.msra.mxu0 0.0
    %2733 = vmatprep.subr.mxu0 0.0
    %2734 = vmatpush1.msra.mxu0 0.0
    %2735 = vmatprep.subr.mxu0 0.0
    %2736 = vmatpush1.msra.mxu0 0.0
    %2737 = vmatprep.subr.mxu0 0.0
    %2738 = vmatpush1.msra.mxu0 0.0
    %2739 = vmatprep.subr.mxu0 0.0
    %2740 = vmatpush1.msra.mxu0 0.0
    %2741 = vmatprep.subr.mxu0 0.0
    %2742 = vmatpush1.msra.mxu0 0.0
    %2743 = vmatprep.subr.mxu0 0.0
    %2744 = vmatpush1.msra.mxu0 0.0
    %2745 = vmatprep.subr.mxu0 0.0
    %2746 = vmatpush1.msra.mxu0 0.0
    %2747 = vmatprep.subr.mxu0 0.0
    %2748 = vmatpush1.msra.mxu0 0.0
    %2749 = vmatprep.subr.mxu0 0.0
    %2750 = vmatpush1.msra.mxu0 0.0
    %2751 = vmatprep.subr.mxu0 0.0
    %2752 = vmatpush1.msra.mxu0 0.0
    %2753 = vmatprep.subr.mxu0 0.0
    %2754 = vmatpush1.msra.mxu0 0.0
    %2755 = vmatprep.subr.mxu0 0.0
    %2756 = vmatpush1.msra.mxu0 0.0
    %2757 = vmatprep.subr.mxu0 0.0
    %2758 = vmatpush1.msra.mxu0 0.0
    %2759 = vmatprep.subr.mxu0 0.0
    %2760 = vmatpush1.msra.mxu0 0.0
    %2761 = vmatprep.subr.mxu0 0.0
    %2762 = vmatpush1.msra.mxu0 0.0
    %2763 = vmatprep.subr.mxu0 0.0
    %2764 = vmatpush1.msra.mxu0 0.0
    %2765 = vmatprep.subr.mxu0 0.0
    %2766 = vmatpush1.msra.mxu0 0.0
    %2767 = vmatprep.mubr.f32.mxu0 0.0
    %2768 = vmatmul.mubr.f32.gmra.mrb[0].mxu0 %v2461
    %v2769 = vpop.f32.mrb[0].mxu0
    %v2770 = vadd.f32 %v2700, %v2769
    %v2771 = vpop.f32.mrb[0].mxu0
    %2772 = vdwg.mxu0
    %v2773 = vadd.f32 %v2770, %v1011
    %v2774 = vxor.u32 %v2773, 2147483648
    %v2775 = vmul.f32 %v2774, 1.442695
    %v2776 = vpow.pop %v2775
    %v2777 = vadd.f32 %v2776, 1.0
    %v2778 = vrcp.pop %v2777
    %v2779 = vmul.f32 1.0, %v2778
    %v2780 = vtanh.pop %v2773
    %v2781 = vmul.f32 %v2779, %v2351
    %2783 = vrot.lane.b32.xlu0 %v2780, 32
    %v2784 = vpop.permute.xlu0 %2783
    %v2786 = vmul.f32 %v2779, %v2784
    %2788 = vrot.lane.b32.xlu0 %v2786, 32
    %v2789 = vpop.permute.xlu0 %2788
    %v2791 = vadd.f32 %v2781, %v2789
    %v2792 = vtanh.pop %v2791
    %2794 = vrot.lane.b32.xlu0 %v2792, 32
    %v2795 = vpop.permute.xlu0 %2794
    %v2797 = vmul.f32 %v2779, %v2795
    %2799 = vrot.lane.b32.xlu0 %v2457, 64
    %v2800 = vpop.permute.xlu0 %2799
    %v2801 = vsel %vm227, %v2800, 0
    %2803 = vmatprep.subr.mxu0 0.0
    %2804 = vmatpush1.msra.mxu0 %v205
    %2805 = vmatprep.subr.mxu0 0.0
    %2806 = vmatpush1.msra.mxu0 %v206
    %2807 = vmatprep.subr.mxu0 0.0
    %2808 = vmatpush1.msra.mxu0 %v207
    %2809 = vmatprep.subr.mxu0 0.0
    %2810 = vmatpush1.msra.mxu0 %v208
    %2811 = vmatprep.subr.mxu0 0.0
    %2812 = vmatpush1.msra.mxu0 0.0
    %2813 = vmatprep.subr.mxu0 0.0
    %2814 = vmatpush1.msra.mxu0 0.0
    %2815 = vmatprep.subr.mxu0 0.0
    %2816 = vmatpush1.msra.mxu0 0.0
    %2817 = vmatprep.subr.mxu0 0.0
    %2818 = vmatpush1.msra.mxu0 0.0
    %2819 = vmatprep.subr.mxu0 0.0
    %2820 = vmatpush1.msra.mxu0 0.0
    %2821 = vmatprep.subr.mxu0 0.0
    %2822 = vmatpush1.msra.mxu0 0.0
    %2823 = vmatprep.subr.mxu0 0.0
    %2824 = vmatpush1.msra.mxu0 0.0
    %2825 = vmatprep.subr.mxu0 0.0
    %2826 = vmatpush1.msra.mxu0 0.0
    %2827 = vmatprep.subr.mxu0 0.0
    %2828 = vmatpush1.msra.mxu0 0.0
    %2829 = vmatprep.subr.mxu0 0.0
    %2830 = vmatpush1.msra.mxu0 0.0
    %2831 = vmatprep.subr.mxu0 0.0
    %2832 = vmatpush1.msra.mxu0 0.0
    %2833 = vmatprep.subr.mxu0 0.0
    %2834 = vmatpush1.msra.mxu0 0.0
    %2835 = vmatprep.subr.mxu0 0.0
    %2836 = vmatpush1.msra.mxu0 0.0
    %2837 = vmatprep.subr.mxu0 0.0
    %2838 = vmatpush1.msra.mxu0 0.0
    %2839 = vmatprep.subr.mxu0 0.0
    %2840 = vmatpush1.msra.mxu0 0.0
    %2841 = vmatprep.subr.mxu0 0.0
    %2842 = vmatpush1.msra.mxu0 0.0
    %2843 = vmatprep.subr.mxu0 0.0
    %2844 = vmatpush1.msra.mxu0 0.0
    %2845 = vmatprep.subr.mxu0 0.0
    %2846 = vmatpush1.msra.mxu0 0.0
    %2847 = vmatprep.subr.mxu0 0.0
    %2848 = vmatpush1.msra.mxu0 0.0
    %2849 = vmatprep.subr.mxu0 0.0
    %2850 = vmatpush1.msra.mxu0 0.0
    %2851 = vmatprep.subr.mxu0 0.0
    %2852 = vmatpush1.msra.mxu0 0.0
    %2853 = vmatprep.subr.mxu0 0.0
    %2854 = vmatpush1.msra.mxu0 0.0
    %2855 = vmatprep.subr.mxu0 0.0
    %2856 = vmatpush1.msra.mxu0 0.0
    %2857 = vmatprep.subr.mxu0 0.0
    %2858 = vmatpush1.msra.mxu0 0.0
    %2859 = vmatprep.subr.mxu0 0.0
    %2860 = vmatpush1.msra.mxu0 0.0
    %2861 = vmatprep.subr.mxu0 0.0
    %2862 = vmatpush1.msra.mxu0 0.0
    %2863 = vmatprep.subr.mxu0 0.0
    %2864 = vmatpush1.msra.mxu0 0.0
    %2865 = vmatprep.subr.mxu0 0.0
    %2866 = vmatpush1.msra.mxu0 0.0
    %2867 = vmatprep.mubr.f32.mxu0 0.0
    %2868 = vmatmul.mubr.f32.gmra.mrb[0].mxu0 %v2801
    %v2869 = vpop.f32.mrb[0].mxu0
    %v2870 = vadd.f32 0.0, %v2869
    %v2871 = vpop.f32.mrb[0].mxu0
    %2872 = vdwg.mxu0
    %v2873 = vadd.f32 %v202, %v2870
    %v2874 = vxor.u32 %v2873, 2147483648
    %v2875 = vmul.f32 %v2874, 1.442695
    %v2876 = vpow.pop %v2875
    %v2877 = vadd.f32 %v2876, 1.0
    %v2878 = vrcp.pop %v2877
    %v2879 = vmul.f32 1.0, %v2878
    %v2880 = vtanh.pop %v2873
    %v2881 = vmul.f32 %v2879, %v2451
    %2883 = vrot.lane.b32.xlu0 %v2880, 32
    %v2884 = vpop.permute.xlu0 %2883
    %v2886 = vmul.f32 %v2879, %v2884
    %2888 = vrot.lane.b32.xlu0 %v2886, 32
    %v2889 = vpop.permute.xlu0 %2888
    %v2891 = vadd.f32 %v2881, %v2889
    %v2892 = vtanh.pop %v2891
    %2894 = vrot.lane.b32.xlu0 %v2892, 32
    %v2895 = vpop.permute.xlu0 %2894
    %v2897 = vmul.f32 %v2879, %v2895
    %2899 = vrot.lane.b32.xlu0 %v2627, 64
    %v2900 = vpop.permute.xlu0 %2899
    %v2901 = vsel %vm227, %v2900, 0
    %2903 = vmatprep.subr.mxu0 0.0
    %2904 = vmatpush1.msra.mxu0 %v209
    %2905 = vmatprep.subr.mxu0 0.0
    %2906 = vmatpush1.msra.mxu0 %v210
    %2907 = vmatprep.subr.mxu0 0.0
    %2908 = vmatpush1.msra.mxu0 %v211
    %2909 = vmatprep.subr.mxu0 0.0
    %2910 = vmatpush1.msra.mxu0 %v212
    %2911 = vmatprep.subr.mxu0 0.0
    %2912 = vmatpush1.msra.mxu0 0.0
    %2913 = vmatprep.subr.mxu0 0.0
    %2914 = vmatpush1.msra.mxu0 0.0
    %2915 = vmatprep.subr.mxu0 0.0
    %2916 = vmatpush1.msra.mxu0 0.0
    %2917 = vmatprep.subr.mxu0 0.0
    %2918 = vmatpush1.msra.mxu0 0.0
    %2919 = vmatprep.subr.mxu0 0.0
    %2920 = vmatpush1.msra.mxu0 0.0
    %2921 = vmatprep.subr.mxu0 0.0
    %2922 = vmatpush1.msra.mxu0 0.0
    %2923 = vmatprep.subr.mxu0 0.0
    %2924 = vmatpush1.msra.mxu0 0.0
    %2925 = vmatprep.subr.mxu0 0.0
    %2926 = vmatpush1.msra.mxu0 0.0
    %2927 = vmatprep.subr.mxu0 0.0
    %2928 = vmatpush1.msra.mxu0 0.0
    %2929 = vmatprep.subr.mxu0 0.0
    %2930 = vmatpush1.msra.mxu0 0.0
    %2931 = vmatprep.subr.mxu0 0.0
    %2932 = vmatpush1.msra.mxu0 0.0
    %2933 = vmatprep.subr.mxu0 0.0
    %2934 = vmatpush1.msra.mxu0 0.0
    %2935 = vmatprep.subr.mxu0 0.0
    %2936 = vmatpush1.msra.mxu0 0.0
    %2937 = vmatprep.subr.mxu0 0.0
    %2938 = vmatpush1.msra.mxu0 0.0
    %2939 = vmatprep.subr.mxu0 0.0
    %2940 = vmatpush1.msra.mxu0 0.0
    %2941 = vmatprep.subr.mxu0 0.0
    %2942 = vmatpush1.msra.mxu0 0.0
    %2943 = vmatprep.subr.mxu0 0.0
    %2944 = vmatpush1.msra.mxu0 0.0
    %2945 = vmatprep.subr.mxu0 0.0
    %2946 = vmatpush1.msra.mxu0 0.0
    %2947 = vmatprep.subr.mxu0 0.0
    %2948 = vmatpush1.msra.mxu0 0.0
    %2949 = vmatprep.subr.mxu0 0.0
    %2950 = vmatpush1.msra.mxu0 0.0
    %2951 = vmatprep.subr.mxu0 0.0
    %2952 = vmatpush1.msra.mxu0 0.0
    %2953 = vmatprep.subr.mxu0 0.0
    %2954 = vmatpush1.msra.mxu0 0.0
    %2955 = vmatprep.subr.mxu0 0.0
    %2956 = vmatpush1.msra.mxu0 0.0
    %2957 = vmatprep.subr.mxu0 0.0
    %2958 = vmatpush1.msra.mxu0 0.0
    %2959 = vmatprep.subr.mxu0 0.0
    %2960 = vmatpush1.msra.mxu0 0.0
    %2961 = vmatprep.subr.mxu0 0.0
    %2962 = vmatpush1.msra.mxu0 0.0
    %2963 = vmatprep.subr.mxu0 0.0
    %2964 = vmatpush1.msra.mxu0 0.0
    %2965 = vmatprep.subr.mxu0 0.0
    %2966 = vmatpush1.msra.mxu0 0.0
    %2967 = vmatprep.mubr.f32.mxu0 0.0
    %2968 = vmatmul.mubr.f32.gmra.mrb[0].mxu0 %v2901
    %v2969 = vpop.f32.mrb[0].mxu0
    %v2970 = vadd.f32 0.0, %v2969
    %v2971 = vpop.f32.mrb[0].mxu0
    %2972 = vdwg.mxu0
    %2973 = vmatprep.subr.mxu0 0.0
    %2974 = vmatpush1.msra.mxu0 %v217
    %2975 = vmatprep.subr.mxu0 0.0
    %2976 = vmatpush1.msra.mxu0 %v218
    %2977 = vmatprep.subr.mxu0 0.0
    %2978 = vmatpush1.msra.mxu0 %v219
    %2979 = vmatprep.subr.mxu0 0.0
    %2980 = vmatpush1.msra.mxu0 %v220
    %2981 = vmatprep.subr.mxu0 0.0
    %2982 = vmatpush1.msra.mxu0 0.0
    %2983 = vmatprep.subr.mxu0 0.0
    %2984 = vmatpush1.msra.mxu0 0.0
    %2985 = vmatprep.subr.mxu0 0.0
    %2986 = vmatpush1.msra.mxu0 0.0
    %2987 = vmatprep.subr.mxu0 0.0
    %2988 = vmatpush1.msra.mxu0 0.0
    %2989 = vmatprep.subr.mxu0 0.0
    %2990 = vmatpush1.msra.mxu0 0.0
    %2991 = vmatprep.subr.mxu0 0.0
    %2992 = vmatpush1.msra.mxu0 0.0
    %2993 = vmatprep.subr.mxu0 0.0
    %2994 = vmatpush1.msra.mxu0 0.0
    %2995 = vmatprep.subr.mxu0 0.0
    %2996 = vmatpush1.msra.mxu0 0.0
    %2997 = vmatprep.subr.mxu0 0.0
    %2998 = vmatpush1.msra.mxu0 0.0
    %2999 = vmatprep.subr.mxu0 0.0
    %3000 = vmatpush1.msra.mxu0 0.0
    %3001 = vmatprep.subr.mxu0 0.0
    %3002 = vmatpush1.msra.mxu0 0.0
    %3003 = vmatprep.subr.mxu0 0.0
    %3004 = vmatpush1.msra.mxu0 0.0
    %3005 = vmatprep.subr.mxu0 0.0
    %3006 = vmatpush1.msra.mxu0 0.0
    %3007 = vmatprep.subr.mxu0 0.0
    %3008 = vmatpush1.msra.mxu0 0.0
    %3009 = vmatprep.subr.mxu0 0.0
    %3010 = vmatpush1.msra.mxu0 0.0
    %3011 = vmatprep.subr.mxu0 0.0
    %3012 = vmatpush1.msra.mxu0 0.0
    %3013 = vmatprep.subr.mxu0 0.0
    %3014 = vmatpush1.msra.mxu0 0.0
    %3015 = vmatprep.subr.mxu0 0.0
    %3016 = vmatpush1.msra.mxu0 0.0
    %3017 = vmatprep.subr.mxu0 0.0
    %3018 = vmatpush1.msra.mxu0 0.0
    %3019 = vmatprep.subr.mxu0 0.0
    %3020 = vmatpush1.msra.mxu0 0.0
    %3021 = vmatprep.subr.mxu0 0.0
    %3022 = vmatpush1.msra.mxu0 0.0
    %3023 = vmatprep.subr.mxu0 0.0
    %3024 = vmatpush1.msra.mxu0 0.0
    %3025 = vmatprep.subr.mxu0 0.0
    %3026 = vmatpush1.msra.mxu0 0.0
    %3027 = vmatprep.subr.mxu0 0.0
    %3028 = vmatpush1.msra.mxu0 0.0
    %3029 = vmatprep.subr.mxu0 0.0
    %3030 = vmatpush1.msra.mxu0 0.0
    %3031 = vmatprep.subr.mxu0 0.0
    %3032 = vmatpush1.msra.mxu0 0.0
    %3033 = vmatprep.subr.mxu0 0.0
    %3034 = vmatpush1.msra.mxu0 0.0
    %3035 = vmatprep.subr.mxu0 0.0
    %3036 = vmatpush1.msra.mxu0 0.0
    %3037 = vmatprep.mubr.f32.mxu0 0.0
    %3038 = vmatmul.mubr.f32.gmra.mrb[0].mxu0 %v2801
    %v3039 = vpop.f32.mrb[0].mxu0
    %v3040 = vadd.f32 %v2970, %v3039
    %v3041 = vpop.f32.mrb[0].mxu0
    %3042 = vdwg.mxu0
    %v3043 = vadd.f32 %v3040, %v570
    %v3044 = vxor.u32 %v3043, 2147483648
    %v3045 = vmul.f32 %v3044, 1.442695
    %v3046 = vpow.pop %v3045
    %v3047 = vadd.f32 %v3046, 1.0
    %v3048 = vrcp.pop %v3047
    %v3049 = vmul.f32 1.0, %v3048
    %v3050 = vtanh.pop %v3043
    %v3051 = vmul.f32 %v3049, %v2621
    %3053 = vrot.lane.b32.xlu0 %v3050, 32
    %v3054 = vpop.permute.xlu0 %3053
    %v3056 = vmul.f32 %v3049, %v3054
    %3058 = vrot.lane.b32.xlu0 %v3056, 32
    %v3059 = vpop.permute.xlu0 %3058
    %v3061 = vadd.f32 %v3051, %v3059
    %v3062 = vtanh.pop %v3061
    %3064 = vrot.lane.b32.xlu0 %v3062, 32
    %v3065 = vpop.permute.xlu0 %3064
    %v3067 = vmul.f32 %v3049, %v3065
    %3069 = vrot.lane.b32.xlu0 %v2797, 64
    %v3070 = vpop.permute.xlu0 %3069
    %v3071 = vsel %vm227, %v3070, 0
    %3073 = vmatprep.subr.mxu0 0.0
    %3074 = vmatpush1.msra.mxu0 %v213
    %3075 = vmatprep.subr.mxu0 0.0
    %3076 = vmatpush1.msra.mxu0 %v214
    %3077 = vmatprep.subr.mxu0 0.0
    %3078 = vmatpush1.msra.mxu0 %v215
    %3079 = vmatprep.subr.mxu0 0.0
    %3080 = vmatpush1.msra.mxu0 %v216
    %3081 = vmatprep.subr.mxu0 0.0
    %3082 = vmatpush1.msra.mxu0 0.0
    %3083 = vmatprep.subr.mxu0 0.0
    %3084 = vmatpush1.msra.mxu0 0.0
    %3085 = vmatprep.subr.mxu0 0.0
    %3086 = vmatpush1.msra.mxu0 0.0
    %3087 = vmatprep.subr.mxu0 0.0
    %3088 = vmatpush1.msra.mxu0 0.0
    %3089 = vmatprep.subr.mxu0 0.0
    %3090 = vmatpush1.msra.mxu0 0.0
    %3091 = vmatprep.subr.mxu0 0.0
    %3092 = vmatpush1.msra.mxu0 0.0
    %3093 = vmatprep.subr.mxu0 0.0
    %3094 = vmatpush1.msra.mxu0 0.0
    %3095 = vmatprep.subr.mxu0 0.0
    %3096 = vmatpush1.msra.mxu0 0.0
    %3097 = vmatprep.subr.mxu0 0.0
    %3098 = vmatpush1.msra.mxu0 0.0
    %3099 = vmatprep.subr.mxu0 0.0
    %3100 = vmatpush1.msra.mxu0 0.0
    %3101 = vmatprep.subr.mxu0 0.0
    %3102 = vmatpush1.msra.mxu0 0.0
    %3103 = vmatprep.subr.mxu0 0.0
    %3104 = vmatpush1.msra.mxu0 0.0
    %3105 = vmatprep.subr.mxu0 0.0
    %3106 = vmatpush1.msra.mxu0 0.0
    %3107 = vmatprep.subr.mxu0 0.0
    %3108 = vmatpush1.msra.mxu0 0.0
    %3109 = vmatprep.subr.mxu0 0.0
    %3110 = vmatpush1.msra.mxu0 0.0
    %3111 = vmatprep.subr.mxu0 0.0
    %3112 = vmatpush1.msra.mxu0 0.0
    %3113 = vmatprep.subr.mxu0 0.0
    %3114 = vmatpush1.msra.mxu0 0.0
    %3115 = vmatprep.subr.mxu0 0.0
    %3116 = vmatpush1.msra.mxu0 0.0
    %3117 = vmatprep.subr.mxu0 0.0
    %3118 = vmatpush1.msra.mxu0 0.0
    %3119 = vmatprep.subr.mxu0 0.0
    %3120 = vmatpush1.msra.mxu0 0.0
    %3121 = vmatprep.subr.mxu0 0.0
    %3122 = vmatpush1.msra.mxu0 0.0
    %3123 = vmatprep.subr.mxu0 0.0
    %3124 = vmatpush1.msra.mxu0 0.0
    %3125 = vmatprep.subr.mxu0 0.0
    %3126 = vmatpush1.msra.mxu0 0.0
    %3127 = vmatprep.subr.mxu0 0.0
    %3128 = vmatpush1.msra.mxu0 0.0
    %3129 = vmatprep.subr.mxu0 0.0
    %3130 = vmatpush1.msra.mxu0 0.0
    %3131 = vmatprep.subr.mxu0 0.0
    %3132 = vmatpush1.msra.mxu0 0.0
    %3133 = vmatprep.subr.mxu0 0.0
    %3134 = vmatpush1.msra.mxu0 0.0
    %3135 = vmatprep.subr.mxu0 0.0
    %3136 = vmatpush1.msra.mxu0 0.0
    %3137 = vmatprep.mubr.f32.mxu0 0.0
    %3138 = vmatmul.mubr.f32.gmra.mrb[0].mxu0 %v3071
    %v3139 = vpop.f32.mrb[0].mxu0
    %v3140 = vadd.f32 0.0, %v3139
    %v3141 = vpop.f32.mrb[0].mxu0
    %3142 = vdwg.mxu0
    %3143 = vmatprep.subr.mxu0 0.0
    %3144 = vmatpush1.msra.mxu0 %v221
    %3145 = vmatprep.subr.mxu0 0.0
    %3146 = vmatpush1.msra.mxu0 %v222
    %3147 = vmatprep.subr.mxu0 0.0
    %3148 = vmatpush1.msra.mxu0 %v223
    %3149 = vmatprep.subr.mxu0 0.0
    %3150 = vmatpush1.msra.mxu0 %v224
    %3151 = vmatprep.subr.mxu0 0.0
    %3152 = vmatpush1.msra.mxu0 0.0
    %3153 = vmatprep.subr.mxu0 0.0
    %3154 = vmatpush1.msra.mxu0 0.0
    %3155 = vmatprep.subr.mxu0 0.0
    %3156 = vmatpush1.msra.mxu0 0.0
    %3157 = vmatprep.subr.mxu0 0.0
    %3158 = vmatpush1.msra.mxu0 0.0
    %3159 = vmatprep.subr.mxu0 0.0
    %3160 = vmatpush1.msra.mxu0 0.0
    %3161 = vmatprep.subr.mxu0 0.0
    %3162 = vmatpush1.msra.mxu0 0.0
    %3163 = vmatprep.subr.mxu0 0.0
    %3164 = vmatpush1.msra.mxu0 0.0
    %3165 = vmatprep.subr.mxu0 0.0
    %3166 = vmatpush1.msra.mxu0 0.0
    %3167 = vmatprep.subr.mxu0 0.0
    %3168 = vmatpush1.msra.mxu0 0.0
    %3169 = vmatprep.subr.mxu0 0.0
    %3170 = vmatpush1.msra.mxu0 0.0
    %3171 = vmatprep.subr.mxu0 0.0
    %3172 = vmatpush1.msra.mxu0 0.0
    %3173 = vmatprep.subr.mxu0 0.0
    %3174 = vmatpush1.msra.mxu0 0.0
    %3175 = vmatprep.subr.mxu0 0.0
    %3176 = vmatpush1.msra.mxu0 0.0
    %3177 = vmatprep.subr.mxu0 0.0
    %3178 = vmatpush1.msra.mxu0 0.0
    %3179 = vmatprep.subr.mxu0 0.0
    %3180 = vmatpush1.msra.mxu0 0.0
    %3181 = vmatprep.subr.mxu0 0.0
    %3182 = vmatpush1.msra.mxu0 0.0
    %3183 = vmatprep.subr.mxu0 0.0
    %3184 = vmatpush1.msra.mxu0 0.0
    %3185 = vmatprep.subr.mxu0 0.0
    %3186 = vmatpush1.msra.mxu0 0.0
    %3187 = vmatprep.subr.mxu0 0.0
    %3188 = vmatpush1.msra.mxu0 0.0
    %3189 = vmatprep.subr.mxu0 0.0
    %3190 = vmatpush1.msra.mxu0 0.0
    %3191 = vmatprep.subr.mxu0 0.0
    %3192 = vmatpush1.msra.mxu0 0.0
    %3193 = vmatprep.subr.mxu0 0.0
    %3194 = vmatpush1.msra.mxu0 0.0
    %3195 = vmatprep.subr.mxu0 0.0
    %3196 = vmatpush1.msra.mxu0 0.0
    %3197 = vmatprep.subr.mxu0 0.0
    %3198 = vmatpush1.msra.mxu0 0.0
    %3199 = vmatprep.subr.mxu0 0.0
    %3200 = vmatpush1.msra.mxu0 0.0
    %3201 = vmatprep.subr.mxu0 0.0
    %3202 = vmatpush1.msra.mxu0 0.0
    %3203 = vmatprep.subr.mxu0 0.0
    %3204 = vmatpush1.msra.mxu0 0.0
    %3205 = vmatprep.subr.mxu0 0.0
    %3206 = vmatpush1.msra.mxu0 0.0
    %3207 = vmatprep.mubr.f32.mxu0 0.0
    %3208 = vmatmul.mubr.f32.gmra.mrb[0].mxu0 %v2901
    %v3209 = vpop.f32.mrb[0].mxu0
    %v3210 = vadd.f32 %v3140, %v3209
    %v3211 = vpop.f32.mrb[0].mxu0
    %3212 = vdwg.mxu0
    %v3213 = vadd.f32 %v3210, %v1011
    %v3214 = vxor.u32 %v3213, 2147483648
    %v3215 = vmul.f32 %v3214, 1.442695
    %v3216 = vpow.pop %v3215
    %v3217 = vadd.f32 %v3216, 1.0
    %v3218 = vrcp.pop %v3217
    %v3219 = vmul.f32 1.0, %v3218
    %v3220 = vtanh.pop %v3213
    %v3221 = vmul.f32 %v3219, %v2791
    %3223 = vrot.lane.b32.xlu0 %v3220, 32
    %v3224 = vpop.permute.xlu0 %3223
    %v3226 = vmul.f32 %v3219, %v3224
    %3228 = vrot.lane.b32.xlu0 %v3226, 32
    %v3229 = vpop.permute.xlu0 %3228
    %v3231 = vadd.f32 %v3221, %v3229
    %v3232 = vtanh.pop %v3231
    %3234 = vrot.lane.b32.xlu0 %v3232, 32
    %v3235 = vpop.permute.xlu0 %3234
    %v3237 = vmul.f32 %v3219, %v3235
    %3239 = vrot.lane.b32.xlu0 %v3067, 64
    %v3240 = vpop.permute.xlu0 %3239
    %v3241 = vsel %vm227, %v3240, 0
    %3243 = vmatprep.subr.mxu0 0.0
    %3244 = vmatpush1.msra.mxu0 %v209
    %3245 = vmatprep.subr.mxu0 0.0
    %3246 = vmatpush1.msra.mxu0 %v210
    %3247 = vmatprep.subr.mxu0 0.0
    %3248 = vmatpush1.msra.mxu0 %v211
    %3249 = vmatprep.subr.mxu0 0.0
    %3250 = vmatpush1.msra.mxu0 %v212
    %3251 = vmatprep.subr.mxu0 0.0
    %3252 = vmatpush1.msra.mxu0 0.0
    %3253 = vmatprep.subr.mxu0 0.0
    %3254 = vmatpush1.msra.mxu0 0.0
    %3255 = vmatprep.subr.mxu0 0.0
    %3256 = vmatpush1.msra.mxu0 0.0
    %3257 = vmatprep.subr.mxu0 0.0
    %3258 = vmatpush1.msra.mxu0 0.0
    %3259 = vmatprep.subr.mxu0 0.0
    %3260 = vmatpush1.msra.mxu0 0.0
    %3261 = vmatprep.subr.mxu0 0.0
    %3262 = vmatpush1.msra.mxu0 0.0
    %3263 = vmatprep.subr.mxu0 0.0
    %3264 = vmatpush1.msra.mxu0 0.0
    %3265 = vmatprep.subr.mxu0 0.0
    %3266 = vmatpush1.msra.mxu0 0.0
    %3267 = vmatprep.subr.mxu0 0.0
    %3268 = vmatpush1.msra.mxu0 0.0
    %3269 = vmatprep.subr.mxu0 0.0
    %3270 = vmatpush1.msra.mxu0 0.0
    %3271 = vmatprep.subr.mxu0 0.0
    %3272 = vmatpush1.msra.mxu0 0.0
    %3273 = vmatprep.subr.mxu0 0.0
    %3274 = vmatpush1.msra.mxu0 0.0
    %3275 = vmatprep.subr.mxu0 0.0
    %3276 = vmatpush1.msra.mxu0 0.0
    %3277 = vmatprep.subr.mxu0 0.0
    %3278 = vmatpush1.msra.mxu0 0.0
    %3279 = vmatprep.subr.mxu0 0.0
    %3280 = vmatpush1.msra.mxu0 0.0
    %3281 = vmatprep.subr.mxu0 0.0
    %3282 = vmatpush1.msra.mxu0 0.0
    %3283 = vmatprep.subr.mxu0 0.0
    %3284 = vmatpush1.msra.mxu0 0.0
    %3285 = vmatprep.subr.mxu0 0.0
    %3286 = vmatpush1.msra.mxu0 0.0
    %3287 = vmatprep.subr.mxu0 0.0
    %3288 = vmatpush1.msra.mxu0 0.0
    %3289 = vmatprep.subr.mxu0 0.0
    %3290 = vmatpush1.msra.mxu0 0.0
    %3291 = vmatprep.subr.mxu0 0.0
    %3292 = vmatpush1.msra.mxu0 0.0
    %3293 = vmatprep.subr.mxu0 0.0
    %3294 = vmatpush1.msra.mxu0 0.0
    %3295 = vmatprep.subr.mxu0 0.0
    %3296 = vmatpush1.msra.mxu0 0.0
    %3297 = vmatprep.subr.mxu0 0.0
    %3298 = vmatpush1.msra.mxu0 0.0
    %3299 = vmatprep.subr.mxu0 0.0
    %3300 = vmatpush1.msra.mxu0 0.0
    %3301 = vmatprep.subr.mxu0 0.0
    %3302 = vmatpush1.msra.mxu0 0.0
    %3303 = vmatprep.subr.mxu0 0.0
    %3304 = vmatpush1.msra.mxu0 0.0
    %3305 = vmatprep.subr.mxu0 0.0
    %3306 = vmatpush1.msra.mxu0 0.0
    %3307 = vmatprep.mubr.f32.mxu0 0.0
    %3308 = vmatmul.mubr.f32.gmra.mrb[0].mxu0 %v3241
    %v3309 = vpop.f32.mrb[0].mxu0
    %v3310 = vadd.f32 0.0, %v3309
    %v3311 = vpop.f32.mrb[0].mxu0
    %3312 = vdwg.mxu0
    %3314 = vrot.lane.b32.xlu0 %v2897, 64
    %v3315 = vpop.permute.xlu0 %3314
    %v3316 = vsel %vm227, %v3315, 0
    %3318 = vmatprep.subr.mxu0 0.0
    %3319 = vmatpush1.msra.mxu0 %v217
    %3320 = vmatprep.subr.mxu0 0.0
    %3321 = vmatpush1.msra.mxu0 %v218
    %3322 = vmatprep.subr.mxu0 0.0
    %3323 = vmatpush1.msra.mxu0 %v219
    %3324 = vmatprep.subr.mxu0 0.0
    %3325 = vmatpush1.msra.mxu0 %v220
    %3326 = vmatprep.subr.mxu0 0.0
    %3327 = vmatpush1.msra.mxu0 0.0
    %3328 = vmatprep.subr.mxu0 0.0
    %3329 = vmatpush1.msra.mxu0 0.0
    %3330 = vmatprep.subr.mxu0 0.0
    %3331 = vmatpush1.msra.mxu0 0.0
    %3332 = vmatprep.subr.mxu0 0.0
    %3333 = vmatpush1.msra.mxu0 0.0
    %3334 = vmatprep.subr.mxu0 0.0
    %3335 = vmatpush1.msra.mxu0 0.0
    %3336 = vmatprep.subr.mxu0 0.0
    %3337 = vmatpush1.msra.mxu0 0.0
    %3338 = vmatprep.subr.mxu0 0.0
    %3339 = vmatpush1.msra.mxu0 0.0
    %3340 = vmatprep.subr.mxu0 0.0
    %3341 = vmatpush1.msra.mxu0 0.0
    %3342 = vmatprep.subr.mxu0 0.0
    %3343 = vmatpush1.msra.mxu0 0.0
    %3344 = vmatprep.subr.mxu0 0.0
    %3345 = vmatpush1.msra.mxu0 0.0
    %3346 = vmatprep.subr.mxu0 0.0
    %3347 = vmatpush1.msra.mxu0 0.0
    %3348 = vmatprep.subr.mxu0 0.0
    %3349 = vmatpush1.msra.mxu0 0.0
    %3350 = vmatprep.subr.mxu0 0.0
    %3351 = vmatpush1.msra.mxu0 0.0
    %3352 = vmatprep.subr.mxu0 0.0
    %3353 = vmatpush1.msra.mxu0 0.0
    %3354 = vmatprep.subr.mxu0 0.0
    %3355 = vmatpush1.msra.mxu0 0.0
    %3356 = vmatprep.subr.mxu0 0.0
    %3357 = vmatpush1.msra.mxu0 0.0
    %3358 = vmatprep.subr.mxu0 0.0
    %3359 = vmatpush1.msra.mxu0 0.0
    %3360 = vmatprep.subr.mxu0 0.0
    %3361 = vmatpush1.msra.mxu0 0.0
    %3362 = vmatprep.subr.mxu0 0.0
    %3363 = vmatpush1.msra.mxu0 0.0
    %3364 = vmatprep.subr.mxu0 0.0
    %3365 = vmatpush1.msra.mxu0 0.0
    %3366 = vmatprep.subr.mxu0 0.0
    %3367 = vmatpush1.msra.mxu0 0.0
    %3368 = vmatprep.subr.mxu0 0.0
    %3369 = vmatpush1.msra.mxu0 0.0
    %3370 = vmatprep.subr.mxu0 0.0
    %3371 = vmatpush1.msra.mxu0 0.0
    %3372 = vmatprep.subr.mxu0 0.0
    %3373 = vmatpush1.msra.mxu0 0.0
    %3374 = vmatprep.subr.mxu0 0.0
    %3375 = vmatpush1.msra.mxu0 0.0
    %3376 = vmatprep.subr.mxu0 0.0
    %3377 = vmatpush1.msra.mxu0 0.0
    %3378 = vmatprep.subr.mxu0 0.0
    %3379 = vmatpush1.msra.mxu0 0.0
    %3380 = vmatprep.subr.mxu0 0.0
    %3381 = vmatpush1.msra.mxu0 0.0
    %3382 = vmatprep.mubr.f32.mxu0 0.0
    %3383 = vmatmul.mubr.f32.gmra.mrb[0].mxu0 %v3316
    %v3384 = vpop.f32.mrb[0].mxu0
    %v3385 = vadd.f32 %v3310, %v3384
    %v3386 = vpop.f32.mrb[0].mxu0
    %3387 = vdwg.mxu0
    %v3388 = vadd.f32 %v3385, %v570
    %v3389 = vxor.u32 %v3388, 2147483648
    %v3390 = vmul.f32 %v3389, 1.442695
    %v3391 = vpow.pop %v3390
    %v3392 = vadd.f32 %v3391, 1.0
    %v3393 = vrcp.pop %v3392
    %v3394 = vmul.f32 1.0, %v3393
    %v3395 = vtanh.pop %v3388
    %v3396 = vmul.f32 %v3394, %v3061
    %3398 = vrot.lane.b32.xlu0 %v3395, 32
    %v3399 = vpop.permute.xlu0 %3398
    %v3401 = vmul.f32 %v3394, %v3399
    %3403 = vrot.lane.b32.xlu0 %v3401, 32
    %v3404 = vpop.permute.xlu0 %3403
    %v3406 = vadd.f32 %v3396, %v3404
    %v3407 = vtanh.pop %v3406
    %3409 = vrot.lane.b32.xlu0 %v3407, 32
    %v3410 = vpop.permute.xlu0 %3409
    %v3412 = vmul.f32 %v3394, %v3410
    %3414 = vrot.lane.b32.xlu0 %v3237, 64
    %v3415 = vpop.permute.xlu0 %3414
    %v3416 = vsel %vm227, %v3415, 0
    %3418 = vmatprep.subr.mxu0 0.0
    %3419 = vmatpush1.msra.mxu0 %v213
    %3420 = vmatprep.subr.mxu0 0.0
    %3421 = vmatpush1.msra.mxu0 %v214
    %3422 = vmatprep.subr.mxu0 0.0
    %3423 = vmatpush1.msra.mxu0 %v215
    %3424 = vmatprep.subr.mxu0 0.0
    %3425 = vmatpush1.msra.mxu0 %v216
    %3426 = vmatprep.subr.mxu0 0.0
    %3427 = vmatpush1.msra.mxu0 0.0
    %3428 = vmatprep.subr.mxu0 0.0
    %3429 = vmatpush1.msra.mxu0 0.0
    %3430 = vmatprep.subr.mxu0 0.0
    %3431 = vmatpush1.msra.mxu0 0.0
    %3432 = vmatprep.subr.mxu0 0.0
    %3433 = vmatpush1.msra.mxu0 0.0
    %3434 = vmatprep.subr.mxu0 0.0
    %3435 = vmatpush1.msra.mxu0 0.0
    %3436 = vmatprep.subr.mxu0 0.0
    %3437 = vmatpush1.msra.mxu0 0.0
    %3438 = vmatprep.subr.mxu0 0.0
    %3439 = vmatpush1.msra.mxu0 0.0
    %3440 = vmatprep.subr.mxu0 0.0
    %3441 = vmatpush1.msra.mxu0 0.0
    %3442 = vmatprep.subr.mxu0 0.0
    %3443 = vmatpush1.msra.mxu0 0.0
    %3444 = vmatprep.subr.mxu0 0.0
    %3445 = vmatpush1.msra.mxu0 0.0
    %3446 = vmatprep.subr.mxu0 0.0
    %3447 = vmatpush1.msra.mxu0 0.0
    %3448 = vmatprep.subr.mxu0 0.0
    %3449 = vmatpush1.msra.mxu0 0.0
    %3450 = vmatprep.subr.mxu0 0.0
    %3451 = vmatpush1.msra.mxu0 0.0
    %3452 = vmatprep.subr.mxu0 0.0
    %3453 = vmatpush1.msra.mxu0 0.0
    %3454 = vmatprep.subr.mxu0 0.0
    %3455 = vmatpush1.msra.mxu0 0.0
    %3456 = vmatprep.subr.mxu0 0.0
    %3457 = vmatpush1.msra.mxu0 0.0
    %3458 = vmatprep.subr.mxu0 0.0
    %3459 = vmatpush1.msra.mxu0 0.0
    %3460 = vmatprep.subr.mxu0 0.0
    %3461 = vmatpush1.msra.mxu0 0.0
    %3462 = vmatprep.subr.mxu0 0.0
    %3463 = vmatpush1.msra.mxu0 0.0
    %3464 = vmatprep.subr.mxu0 0.0
    %3465 = vmatpush1.msra.mxu0 0.0
    %3466 = vmatprep.subr.mxu0 0.0
    %3467 = vmatpush1.msra.mxu0 0.0
    %3468 = vmatprep.subr.mxu0 0.0
    %3469 = vmatpush1.msra.mxu0 0.0
    %3470 = vmatprep.subr.mxu0 0.0
    %3471 = vmatpush1.msra.mxu0 0.0
    %3472 = vmatprep.subr.mxu0 0.0
    %3473 = vmatpush1.msra.mxu0 0.0
    %3474 = vmatprep.subr.mxu0 0.0
    %3475 = vmatpush1.msra.mxu0 0.0
    %3476 = vmatprep.subr.mxu0 0.0
    %3477 = vmatpush1.msra.mxu0 0.0
    %3478 = vmatprep.subr.mxu0 0.0
    %3479 = vmatpush1.msra.mxu0 0.0
    %3480 = vmatprep.subr.mxu0 0.0
    %3481 = vmatpush1.msra.mxu0 0.0
    %3482 = vmatprep.mubr.f32.mxu0 0.0
    %3483 = vmatmul.mubr.f32.gmra.mrb[0].mxu0 %v3416
    %v3484 = vpop.f32.mrb[0].mxu0
    %v3485 = vadd.f32 0.0, %v3484
    %v3486 = vpop.f32.mrb[0].mxu0
    %3487 = vdwg.mxu0
    %3488 = vmatprep.subr.mxu0 0.0
    %3489 = vmatpush1.msra.mxu0 %v221
    %3490 = vmatprep.subr.mxu0 0.0
    %3491 = vmatpush1.msra.mxu0 %v222
    %3492 = vmatprep.subr.mxu0 0.0
    %3493 = vmatpush1.msra.mxu0 %v223
    %3494 = vmatprep.subr.mxu0 0.0
    %3495 = vmatpush1.msra.mxu0 %v224
    %3496 = vmatprep.subr.mxu0 0.0
    %3497 = vmatpush1.msra.mxu0 0.0
    %3498 = vmatprep.subr.mxu0 0.0
    %3499 = vmatpush1.msra.mxu0 0.0
    %3500 = vmatprep.subr.mxu0 0.0
    %3501 = vmatpush1.msra.mxu0 0.0
    %3502 = vmatprep.subr.mxu0 0.0
    %3503 = vmatpush1.msra.mxu0 0.0
    %3504 = vmatprep.subr.mxu0 0.0
    %3505 = vmatpush1.msra.mxu0 0.0
    %3506 = vmatprep.subr.mxu0 0.0
    %3507 = vmatpush1.msra.mxu0 0.0
    %3508 = vmatprep.subr.mxu0 0.0
    %3509 = vmatpush1.msra.mxu0 0.0
    %3510 = vmatprep.subr.mxu0 0.0
    %3511 = vmatpush1.msra.mxu0 0.0
    %3512 = vmatprep.subr.mxu0 0.0
    %3513 = vmatpush1.msra.mxu0 0.0
    %3514 = vmatprep.subr.mxu0 0.0
    %3515 = vmatpush1.msra.mxu0 0.0
    %3516 = vmatprep.subr.mxu0 0.0
    %3517 = vmatpush1.msra.mxu0 0.0
    %3518 = vmatprep.subr.mxu0 0.0
    %3519 = vmatpush1.msra.mxu0 0.0
    %3520 = vmatprep.subr.mxu0 0.0
    %3521 = vmatpush1.msra.mxu0 0.0
    %3522 = vmatprep.subr.mxu0 0.0
    %3523 = vmatpush1.msra.mxu0 0.0
    %3524 = vmatprep.subr.mxu0 0.0
    %3525 = vmatpush1.msra.mxu0 0.0
    %3526 = vmatprep.subr.mxu0 0.0
    %3527 = vmatpush1.msra.mxu0 0.0
    %3528 = vmatprep.subr.mxu0 0.0
    %3529 = vmatpush1.msra.mxu0 0.0
    %3530 = vmatprep.subr.mxu0 0.0
    %3531 = vmatpush1.msra.mxu0 0.0
    %3532 = vmatprep.subr.mxu0 0.0
    %3533 = vmatpush1.msra.mxu0 0.0
    %3534 = vmatprep.subr.mxu0 0.0
    %3535 = vmatpush1.msra.mxu0 0.0
    %3536 = vmatprep.subr.mxu0 0.0
    %3537 = vmatpush1.msra.mxu0 0.0
    %3538 = vmatprep.subr.mxu0 0.0
    %3539 = vmatpush1.msra.mxu0 0.0
    %3540 = vmatprep.subr.mxu0 0.0
    %3541 = vmatpush1.msra.mxu0 0.0
    %3542 = vmatprep.subr.mxu0 0.0
    %3543 = vmatpush1.msra.mxu0 0.0
    %3544 = vmatprep.subr.mxu0 0.0
    %3545 = vmatpush1.msra.mxu0 0.0
    %3546 = vmatprep.subr.mxu0 0.0
    %3547 = vmatpush1.msra.mxu0 0.0
    %3548 = vmatprep.subr.mxu0 0.0
    %3549 = vmatpush1.msra.mxu0 0.0
    %3550 = vmatprep.subr.mxu0 0.0
    %3551 = vmatpush1.msra.mxu0 0.0
    %3552 = vmatprep.mubr.f32.mxu0 0.0
    %3553 = vmatmul.mubr.f32.gmra.mrb[0].mxu0 %v3241
    %v3554 = vpop.f32.mrb[0].mxu0
    %v3555 = vadd.f32 %v3485, %v3554
    %v3556 = vpop.f32.mrb[0].mxu0
    %3557 = vdwg.mxu0
    %v3558 = vadd.f32 %v3555, %v1011
    %v3559 = vxor.u32 %v3558, 2147483648
    %v3560 = vmul.f32 %v3559, 1.442695
    %v3561 = vpow.pop %v3560
    %v3562 = vadd.f32 %v3561, 1.0
    %v3563 = vrcp.pop %v3562
    %v3564 = vmul.f32 1.0, %v3563
    %v3565 = vtanh.pop %v3558
    %v3566 = vmul.f32 %v3564, %v3231
    %3568 = vrot.lane.b32.xlu0 %v3565, 32
    %v3569 = vpop.permute.xlu0 %3568
    %v3571 = vmul.f32 %v3564, %v3569
    %3573 = vrot.lane.b32.xlu0 %v3571, 32
    %v3574 = vpop.permute.xlu0 %3573
    %v3576 = vadd.f32 %v3566, %v3574
    %v3577 = vtanh.pop %v3576
    %3579 = vrot.lane.b32.xlu0 %v3577, 32
    %v3580 = vpop.permute.xlu0 %3579
    %v3582 = vmul.f32 %v3564, %v3580
    %3584 = vrot.lane.b32.xlu0 %v3582, 64
    %v3585 = vpop.permute.xlu0 %3584
    %v3586 = vsel %vm227, %v3585, 0
    %3588 = vmatprep.subr.mxu0 0.0
    %3589 = vmatpush1.msra.mxu0 %v213
    %3590 = vmatprep.subr.mxu0 0.0
    %3591 = vmatpush1.msra.mxu0 %v214
    %3592 = vmatprep.subr.mxu0 0.0
    %3593 = vmatpush1.msra.mxu0 %v215
    %3594 = vmatprep.subr.mxu0 0.0
    %3595 = vmatpush1.msra.mxu0 %v216
    %3596 = vmatprep.subr.mxu0 0.0
    %3597 = vmatpush1.msra.mxu0 0.0
    %3598 = vmatprep.subr.mxu0 0.0
    %3599 = vmatpush1.msra.mxu0 0.0
    %3600 = vmatprep.subr.mxu0 0.0
    %3601 = vmatpush1.msra.mxu0 0.0
    %3602 = vmatprep.subr.mxu0 0.0
    %3603 = vmatpush1.msra.mxu0 0.0
    %3604 = vmatprep.subr.mxu0 0.0
    %3605 = vmatpush1.msra.mxu0 0.0
    %3606 = vmatprep.subr.mxu0 0.0
    %3607 = vmatpush1.msra.mxu0 0.0
    %3608 = vmatprep.subr.mxu0 0.0
    %3609 = vmatpush1.msra.mxu0 0.0
    %3610 = vmatprep.subr.mxu0 0.0
    %3611 = vmatpush1.msra.mxu0 0.0
    %3612 = vmatprep.subr.mxu0 0.0
    %3613 = vmatpush1.msra.mxu0 0.0
    %3614 = vmatprep.subr.mxu0 0.0
    %3615 = vmatpush1.msra.mxu0 0.0
    %3616 = vmatprep.subr.mxu0 0.0
    %3617 = vmatpush1.msra.mxu0 0.0
    %3618 = vmatprep.subr.mxu0 0.0
    %3619 = vmatpush1.msra.mxu0 0.0
    %3620 = vmatprep.subr.mxu0 0.0
    %3621 = vmatpush1.msra.mxu0 0.0
    %3622 = vmatprep.subr.mxu0 0.0
    %3623 = vmatpush1.msra.mxu0 0.0
    %3624 = vmatprep.subr.mxu0 0.0
    %3625 = vmatpush1.msra.mxu0 0.0
    %3626 = vmatprep.subr.mxu0 0.0
    %3627 = vmatpush1.msra.mxu0 0.0
    %3628 = vmatprep.subr.mxu0 0.0
    %3629 = vmatpush1.msra.mxu0 0.0
    %3630 = vmatprep.subr.mxu0 0.0
    %3631 = vmatpush1.msra.mxu0 0.0
    %3632 = vmatprep.subr.mxu0 0.0
    %3633 = vmatpush1.msra.mxu0 0.0
    %3634 = vmatprep.subr.mxu0 0.0
    %3635 = vmatpush1.msra.mxu0 0.0
    %3636 = vmatprep.subr.mxu0 0.0
    %3637 = vmatpush1.msra.mxu0 0.0
    %3638 = vmatprep.subr.mxu0 0.0
    %3639 = vmatpush1.msra.mxu0 0.0
    %3640 = vmatprep.subr.mxu0 0.0
    %3641 = vmatpush1.msra.mxu0 0.0
    %3642 = vmatprep.subr.mxu0 0.0
    %3643 = vmatpush1.msra.mxu0 0.0
    %3644 = vmatprep.subr.mxu0 0.0
    %3645 = vmatpush1.msra.mxu0 0.0
    %3646 = vmatprep.subr.mxu0 0.0
    %3647 = vmatpush1.msra.mxu0 0.0
    %3648 = vmatprep.subr.mxu0 0.0
    %3649 = vmatpush1.msra.mxu0 0.0
    %3650 = vmatprep.subr.mxu0 0.0
    %3651 = vmatpush1.msra.mxu0 0.0
    %3652 = vmatprep.mubr.f32.mxu0 0.0
    %3653 = vmatmul.mubr.f32.gmra.mrb[0].mxu0 %v3586
    %v3654 = vpop.f32.mrb[0].mxu0
    %v3655 = vadd.f32 0.0, %v3654
    %v3656 = vpop.f32.mrb[0].mxu0
    %3657 = vdwg.mxu0
    %3659 = vrot.lane.b32.xlu0 %v3412, 64
    %v3660 = vpop.permute.xlu0 %3659
    %v3661 = vsel %vm227, %v3660, 0
    %3663 = vmatprep.subr.mxu0 0.0
    %3664 = vmatpush1.msra.mxu0 %v221
    %3665 = vmatprep.subr.mxu0 0.0
    %3666 = vmatpush1.msra.mxu0 %v222
    %3667 = vmatprep.subr.mxu0 0.0
    %3668 = vmatpush1.msra.mxu0 %v223
    %3669 = vmatprep.subr.mxu0 0.0
    %3670 = vmatpush1.msra.mxu0 %v224
    %3671 = vmatprep.subr.mxu0 0.0
    %3672 = vmatpush1.msra.mxu0 0.0
    %3673 = vmatprep.subr.mxu0 0.0
    %3674 = vmatpush1.msra.mxu0 0.0
    %3675 = vmatprep.subr.mxu0 0.0
    %3676 = vmatpush1.msra.mxu0 0.0
    %3677 = vmatprep.subr.mxu0 0.0
    %3678 = vmatpush1.msra.mxu0 0.0
    %3679 = vmatprep.subr.mxu0 0.0
    %3680 = vmatpush1.msra.mxu0 0.0
    %3681 = vmatprep.subr.mxu0 0.0
    %3682 = vmatpush1.msra.mxu0 0.0
    %3683 = vmatprep.subr.mxu0 0.0
    %3684 = vmatpush1.msra.mxu0 0.0
    %3685 = vmatprep.subr.mxu0 0.0
    %3686 = vmatpush1.msra.mxu0 0.0
    %3687 = vmatprep.subr.mxu0 0.0
    %3688 = vmatpush1.msra.mxu0 0.0
    %3689 = vmatprep.subr.mxu0 0.0
    %3690 = vmatpush1.msra.mxu0 0.0
    %3691 = vmatprep.subr.mxu0 0.0
    %3692 = vmatpush1.msra.mxu0 0.0
    %3693 = vmatprep.subr.mxu0 0.0
    %3694 = vmatpush1.msra.mxu0 0.0
    %3695 = vmatprep.subr.mxu0 0.0
    %3696 = vmatpush1.msra.mxu0 0.0
    %3697 = vmatprep.subr.mxu0 0.0
    %3698 = vmatpush1.msra.mxu0 0.0
    %3699 = vmatprep.subr.mxu0 0.0
    %3700 = vmatpush1.msra.mxu0 0.0
    %3701 = vmatprep.subr.mxu0 0.0
    %3702 = vmatpush1.msra.mxu0 0.0
    %3703 = vmatprep.subr.mxu0 0.0
    %3704 = vmatpush1.msra.mxu0 0.0
    %3705 = vmatprep.subr.mxu0 0.0
    %3706 = vmatpush1.msra.mxu0 0.0
    %3707 = vmatprep.subr.mxu0 0.0
    %3708 = vmatpush1.msra.mxu0 0.0
    %3709 = vmatprep.subr.mxu0 0.0
    %3710 = vmatpush1.msra.mxu0 0.0
    %3711 = vmatprep.subr.mxu0 0.0
    %3712 = vmatpush1.msra.mxu0 0.0
    %3713 = vmatprep.subr.mxu0 0.0
    %3714 = vmatpush1.msra.mxu0 0.0
    %3715 = vmatprep.subr.mxu0 0.0
    %3716 = vmatpush1.msra.mxu0 0.0
    %3717 = vmatprep.subr.mxu0 0.0
    %3718 = vmatpush1.msra.mxu0 0.0
    %3719 = vmatprep.subr.mxu0 0.0
    %3720 = vmatpush1.msra.mxu0 0.0
    %3721 = vmatprep.subr.mxu0 0.0
    %3722 = vmatpush1.msra.mxu0 0.0
    %3723 = vmatprep.subr.mxu0 0.0
    %3724 = vmatpush1.msra.mxu0 0.0
    %3725 = vmatprep.subr.mxu0 0.0
    %3726 = vmatpush1.msra.mxu0 0.0
    %3727 = vmatprep.mubr.f32.mxu0 0.0
    %3728 = vmatmul.mubr.f32.gmra.mrb[0].mxu0 %v3661
    %v3729 = vpop.f32.mrb[0].mxu0
    %v3730 = vadd.f32 %v3655, %v3729
    %v3731 = vpop.f32.mrb[0].mxu0
    %3732 = vdwg.mxu0
    %v3733 = vadd.f32 %v3730, %v1011
    %v3734 = vxor.u32 %v3733, 2147483648
    %v3735 = vmul.f32 %v3734, 1.442695
    %v3736 = vpow.pop %v3735
    %v3737 = vadd.f32 %v3736, 1.0
    %v3738 = vrcp.pop %v3737
    %v3739 = vmul.f32 1.0, %v3738
    %v3740 = vtanh.pop %v3733
    %v3741 = vmul.f32 %v3739, %v3576
    %3743 = vrot.lane.b32.xlu0 %v3740, 32
    %v3744 = vpop.permute.xlu0 %3743
    %v3746 = vmul.f32 %v3739, %v3744
    %3748 = vrot.lane.b32.xlu0 %v3746, 32
    %v3749 = vpop.permute.xlu0 %3748
    %v3751 = vadd.f32 %v3741, %v3749
    %v3752 = vtanh.pop %v3751
    %3754 = vrot.lane.b32.xlu0 %v3752, 32
    %v3755 = vpop.permute.xlu0 %3754
    %v3757 = vmul.f32 %v3739, %v3755
    %v3758 = vld [vmem:[%s10] sm:$0xff]
    %v3759 = vld [vmem:[%s10 + $0x8] sm:$0xff]
    %v3760 = vld [vmem:[%s10 + $0x10] sm:$0xff]
    %v3761 = vld [vmem:[%s10 + $0x18] sm:$0xff]
    %v3762 = vld [vmem:[%s11] sm:$0x1]
    %v3764 = vlaneseq
    %v3765 = vshrl.u32 %v3764, 7
    %v3766 = vsub.s32 0, %v3765
    %v3767 = vrot.slane %v3762, %v3766
    %3770 = vrot.lane.b32.xlu0 %v3757, 64
    %v3771 = vpop.permute.xlu0 %3770
    %v3772 = vsel %vm227, %v3771, 0
    %3774 = vmatprep.subr.mxu0 0.0
    %3775 = vmatpush1.msra.mxu0 %v3758
    %3776 = vmatprep.subr.mxu0 0.0
    %3777 = vmatpush1.msra.mxu0 %v3759
    %3778 = vmatprep.subr.mxu0 0.0
    %3779 = vmatpush1.msra.mxu0 %v3760
    %3780 = vmatprep.subr.mxu0 0.0
    %3781 = vmatpush1.msra.mxu0 %v3761
    %3782 = vmatprep.subr.mxu0 0.0
    %3783 = vmatpush1.msra.mxu0 0.0
    %3784 = vmatprep.subr.mxu0 0.0
    %3785 = vmatpush1.msra.mxu0 0.0
    %3786 = vmatprep.subr.mxu0 0.0
    %3787 = vmatpush1.msra.mxu0 0.0
    %3788 = vmatprep.subr.mxu0 0.0
    %3789 = vmatpush1.msra.mxu0 0.0
    %3790 = vmatprep.subr.mxu0 0.0
    %3791 = vmatpush1.msra.mxu0 0.0
    %3792 = vmatprep.subr.mxu0 0.0
    %3793 = vmatpush1.msra.mxu0 0.0
    %3794 = vmatprep.subr.mxu0 0.0
    %3795 = vmatpush1.msra.mxu0 0.0
    %3796 = vmatprep.subr.mxu0 0.0
    %3797 = vmatpush1.msra.mxu0 0.0
    %3798 = vmatprep.subr.mxu0 0.0
    %3799 = vmatpush1.msra.mxu0 0.0
    %3800 = vmatprep.subr.mxu0 0.0
    %3801 = vmatpush1.msra.mxu0 0.0
    %3802 = vmatprep.subr.mxu0 0.0
    %3803 = vmatpush1.msra.mxu0 0.0
    %3804 = vmatprep.subr.mxu0 0.0
    %3805 = vmatpush1.msra.mxu0 0.0
    %3806 = vmatprep.subr.mxu0 0.0
    %3807 = vmatpush1.msra.mxu0 0.0
    %3808 = vmatprep.subr.mxu0 0.0
    %3809 = vmatpush1.msra.mxu0 0.0
    %3810 = vmatprep.subr.mxu0 0.0
    %3811 = vmatpush1.msra.mxu0 0.0
    %3812 = vmatprep.subr.mxu0 0.0
    %3813 = vmatpush1.msra.mxu0 0.0
    %3814 = vmatprep.subr.mxu0 0.0
    %3815 = vmatpush1.msra.mxu0 0.0
    %3816 = vmatprep.subr.mxu0 0.0
    %3817 = vmatpush1.msra.mxu0 0.0
    %3818 = vmatprep.subr.mxu0 0.0
    %3819 = vmatpush1.msra.mxu0 0.0
    %3820 = vmatprep.subr.mxu0 0.0
    %3821 = vmatpush1.msra.mxu0 0.0
    %3822 = vmatprep.subr.mxu0 0.0
    %3823 = vmatpush1.msra.mxu0 0.0
    %3824 = vmatprep.subr.mxu0 0.0
    %3825 = vmatpush1.msra.mxu0 0.0
    %3826 = vmatprep.subr.mxu0 0.0
    %3827 = vmatpush1.msra.mxu0 0.0
    %3828 = vmatprep.subr.mxu0 0.0
    %3829 = vmatpush1.msra.mxu0 0.0
    %3830 = vmatprep.subr.mxu0 0.0
    %3831 = vmatpush1.msra.mxu0 0.0
    %3832 = vmatprep.subr.mxu0 0.0
    %3833 = vmatpush1.msra.mxu0 0.0
    %3834 = vmatprep.subr.mxu0 0.0
    %3835 = vmatpush1.msra.mxu0 0.0
    %3836 = vmatprep.subr.mxu0 0.0
    %3837 = vmatpush1.msra.mxu0 0.0
    %3838 = vmatprep.mubr.f32.mxu0 0.0
    %3839 = vmatmul.mubr.f32.gmra.mrb[0].mxu0 %v3772
    %v3840 = vpop.f32.mrb[0].mxu0
    %v3841 = vadd.f32 %v3767, %v3840
    %v3842 = vpop.f32.mrb[0].mxu0
    %3843 = vdwg.mxu0
    %vm3844 = vcmask 23552
    %3845 = vst.msk [vmem:[%s12] sm:$0xff] %vm3844, %v3841
    // Predicated region
    $region54: #{stock_lstm_forward.1} parent=1 // pred_check
      _
    $region55: #{stock_lstm_forward.1} parent=1 // pred_check_branch
      %3847 = sbr.rel (0) target = $region57
    $region56: #{stock_lstm_forward.1} parent=1 // pred_region
      _
    $region57: #{stock_lstm_forward.1} parent=1 // pred_fallthru
      _
    // Predicated region
    $region58: #{stock_lstm_forward.1} parent=1 // pred_check
      _
    $region59: #{stock_lstm_forward.1} parent=1 // pred_check_branch
      %3849 = sbr.rel (0) target = $region61
    $region60: #{stock_lstm_forward.1} parent=1 // pred_region
      _
    $region61: #{stock_lstm_forward.1} parent=1 // pred_fallthru
      _
    %3850 = vsyncpa [#allocation3], 1

</llo_original>
